<compile_context>
chip_gen: v6e
topology: v6e:2x2x1
jax: 0.10.0
libtpu: 0.0.40
codegen_flags: <defaults>
</compile_context>

<pallas_src>
import math
import functools

import jax
import jax.numpy as jnp
from jax.experimental import pallas as pl
from jax.experimental.pallas import tpu as pltpu


# ---------------------------------------------------------------------------
# Pallas kernel: multi-head attention for TB windows per grid step
# ---------------------------------------------------------------------------
def _mha_kernel(q_ref, m_ref, wq_ref, wkv_ref, wo_ref,
                posq_ref, posk_ref, bv_ref, bo_ref, o_ref, *, num_heads):
    # q_ref: (TB, Lq, C) raw query windows (no pos added yet)
    # m_ref: (TB, Lk, C) raw memory windows (key = this + pos_k, value = this)
    # wq_ref: (C, C) pre-transposed & pre-scaled; wkv_ref: (C, 2C); wo_ref: (C, C)
    # posq_ref: (Lq, C) = (pos_q @ Wq.T + bq) * scale ; posk_ref: (Lk, C)
    # bv_ref, bo_ref: (1, C)
    TB, Lq, C = q_ref.shape
    Lk = m_ref.shape[1]
    hd = C // num_heads

    # ---- projections: one big matmul each (M = TB*L, K = C) ----------------
    q_in = q_ref[...].reshape(TB * Lq, C)
    m_in = m_ref[...].reshape(TB * Lk, C)

    q2 = jnp.dot(q_in, wq_ref[...], preferred_element_type=jnp.float32)   # (TB*Lq, C)
    kv = jnp.dot(m_in, wkv_ref[...], preferred_element_type=jnp.float32)  # (TB*Lk, 2C)

    # Fold in positional-embedding projections (Q/K biases already included)
    # and the value bias.  (wq / posq were pre-scaled by 1/sqrt(head_dim).)
    q = q2.reshape(TB, Lq, C) + posq_ref[...]
    k = kv[:, :C].reshape(TB, Lk, C) + posk_ref[...]
    v = kv[:, C:].reshape(TB, Lk, C) + bv_ref[...]

    # ---- per-head channel masks (hoisted constants, VPU-only) --------------
    lane = jax.lax.broadcasted_iota(jnp.int32, (num_heads, C), 1)
    head = jax.lax.broadcasted_iota(jnp.int32, (num_heads, C), 0)
    hmask = jnp.logical_and(lane >= head * hd,
                            lane < (head + 1) * hd).astype(jnp.float32)

    # Stack heads along the row axis: row block h of q_exp carries q restricted
    # to head-h channels, so one full-width (K = C) matmul computes all heads'
    # scores at once with M = num_heads*Lq (vs. num_heads small M = Lq matmuls).
    q_exp = jnp.concatenate(
        [q * hmask[h][None, None, :] for h in range(num_heads)],
        axis=1)                                                  # (TB, H*Lq, C)

    s = jnp.einsum('bqc,bkc->bqk', q_exp, k,
                   preferred_element_type=jnp.float32)           # (TB, H*Lq, Lk)
    # single softmax over all heads (one EUP reciprocal pass)
    s = s - jnp.max(s, axis=-1, keepdims=True)
    p = jnp.exp(s)
    p = p * pl.reciprocal(jnp.sum(p, axis=-1, keepdims=True), approx=True)

    ctx_exp = jnp.einsum('bqk,bkc->bqc', p, v,
                         preferred_element_type=jnp.float32)     # (TB, H*Lq, C)

    # Recombine heads: head-h rows contribute only to head-h output columns.
    ctx = jnp.zeros((TB, Lq, C), dtype=jnp.float32)
    for h in range(num_heads):
        ctx = ctx + ctx_exp[:, h * Lq:(h + 1) * Lq, :] * hmask[h][None, None, :]

    # ---- single output projection (K = C) ----------------------------------
    out = jnp.dot(ctx.reshape(TB * Lq, C), wo_ref[...],
                  preferred_element_type=jnp.float32) + bo_ref[...]
    o_ref[...] = out.reshape(TB, Lq, C).astype(o_ref.dtype)
    # TODO(synk): attention-weights dropout (module's dropout arg) is not
    # applied (dropout=0.0 / inference semantics).


def _pick_tb(B, Lq, Lk, C, itemsize, num_heads, vmem_budget=8 * 1024 * 1024):
    """Largest divisor of B keeping >= 2 grid steps (so the parallel axis can
    shard across TensorCores) and a modest per-step VMEM footprint."""
    best = 1
    for tb in range(1, B + 1):
        if B % tb != 0:
            continue
        if B >= 2 and B // tb < 2:
            continue
        # double-buffered q/mem/out blocks + f32 working set
        blocks = 2 * tb * (2 * Lq + Lk) * C * itemsize
        work = 4 * tb * ((2 * Lq + 2 * Lk) * C
                         + num_heads * Lq * (Lk + 2 * C)   # q_exp, scores, ctx_exp
                         + Lq * C)
        if blocks + work > vmem_budget:
            continue
        best = tb
    return best


def local_mha_pallas(q, mem, wq_t, wkv_t, wo_t, posq_p, posk_p, bv, bo, num_heads):
    """q: (B, Lq, C), mem: (B, Lk, C) -> (B, Lq, C)."""
    B, Lq, C = q.shape
    Lk = mem.shape[1]
    TB = _pick_tb(B, Lq, Lk, C, q.dtype.itemsize, num_heads)
    grid = (B // TB,)

    def const2d(shape):
        return pl.BlockSpec(shape, lambda b: (0, 0))

    kernel = functools.partial(_mha_kernel, num_heads=num_heads)
    return pl.pallas_call(
        kernel,
        out_shape=jax.ShapeDtypeStruct((B, Lq, C), q.dtype),
        grid=grid,
        in_specs=[
            pl.BlockSpec((TB, Lq, C), lambda b: (b, 0, 0)),   # query windows
            pl.BlockSpec((TB, Lk, C), lambda b: (b, 0, 0)),   # memory windows
            const2d((C, C)),          # Wq.T * scale
            const2d((C, 2 * C)),      # [Wk.T | Wv.T]
            const2d((C, C)),          # Wo.T
            const2d((Lq, C)),         # (pos_q @ Wq.T + bq) * scale
            const2d((Lk, C)),         # pos_k @ Wk.T + bk
            const2d((1, C)),          # bv
            const2d((1, C)),          # bo
        ],
        out_specs=pl.BlockSpec((TB, Lq, C), lambda b: (b, 0, 0)),
        compiler_params=pltpu.CompilerParams(
            dimension_semantics=("parallel",)),
    )(q, mem, wq_t, wkv_t, wo_t, posq_p, posk_p, bv, bo)


# ---------------------------------------------------------------------------
# JAX glue: PadBlock + TemporalLocalPermuteModule equivalents (batch-major)
# ---------------------------------------------------------------------------
def pad_if_needed(x, ws):
    """x: (M, H, W, C) -> zero-pad H, W up to multiples of ws (centered)."""
    _, H, W, _ = x.shape
    pad_h = math.ceil(H / ws) * ws - H
    pad_w = math.ceil(W / ws) * ws - W
    if pad_h > 0 or pad_w > 0:
        x = jnp.pad(x, ((0, 0),
                        (pad_h // 2, pad_h - pad_h // 2),
                        (pad_w // 2, pad_w - pad_w // 2),
                        (0, 0)))
    return x


def depad_if_needed(x, H, W, ws):
    """x: (M, H_pad, W_pad, C) -> crop back to (M, H, W, C)."""
    pad_h = math.ceil(H / ws) * ws - H
    pad_w = math.ceil(W / ws) * ws - W
    if pad_h > 0 or pad_w > 0:
        x = x[:, pad_h // 2: pad_h // 2 + H, pad_w // 2: pad_w // 2 + W, :]
    return x


def ts_permute_bm(x, ws):
    """(N, T, H, W, C) -> batch-major (N*(H/ws)*(W/ws), T*ws*ws, C)."""
    N, T, H, W, C = x.shape
    qh, qw = H // ws, W // ws
    x = x.reshape(N, T, qh, ws, qw, ws, C)
    x = x.transpose(0, 2, 4, 1, 3, 5, 6)          # (N, qh, qw, T, ph, pw, C)
    return x.reshape(N * qh * qw, T * ws * ws, C)


def ts_rev_permute_bm(x, size, ws):
    """inverse of ts_permute_bm; size = (N, T, H_pad, W_pad, C)."""
    N, T, H, W, C = size
    qh, qw = H // ws, W // ws
    x = x.reshape(N, qh, qw, T, ws, ws, C)
    x = x.transpose(0, 3, 1, 4, 2, 5, 6)          # (N, T, qh, ph, qw, pw, C)
    return x.reshape(N, T, H, W, C)


def temporal_spatial_local_mha(memory, query, pos_embed, params, num_heads, ws):
    """
    memory: (N, T1, H, W, C)  query: (N, T2, H, W, C)
    pos_embed: (T1+T2, ws, ws, C)   returns (N, T2, H, W, C)
    """
    N, T1, H, W, C = memory.shape
    T2 = query.shape[1]
    wq, wk, wv, wo, bq, bk, bv, bo = params     # PyTorch (out, in) weight layout
    scale = 1.0 / math.sqrt(C // num_heads)

    mem = pad_if_needed(memory.reshape(N * T1, H, W, C), ws)
    _, Hp, Wp, _ = mem.shape
    mem = mem.reshape(N, T1, Hp, Wp, C)
    qry = pad_if_needed(query.reshape(N * T2, H, W, C), ws).reshape(N, T2, Hp, Wp, C)

    mem_bm = ts_permute_bm(mem, ws)               # (B, Lk, C)
    qry_bm = ts_permute_bm(qry, ws)               # (B, Lq, C)

    pos_k = pos_embed[:T1].reshape(T1 * ws * ws, C)
    pos_q = pos_embed[T1:T1 + T2].reshape(T2 * ws * ws, C)

    # Pre-transpose weights ((in, out) so x @ W), fuse K|V, fold the pos-embed
    # adds and Q/K biases into small precomputed per-position projections, and
    # fold 1/sqrt(head_dim) into the Q path.
    wq_t = wq.T * scale                                        # (C, C)
    wkv_t = jnp.concatenate([wk.T, wv.T], axis=1)              # (C, 2C)
    wo_t = wo.T                                                # (C, C)
    posq_p = (pos_q @ wq.T + bq) * scale                       # (Lq, C)
    posk_p = pos_k @ wk.T + bk                                 # (Lk, C)

    out = local_mha_pallas(qry_bm, mem_bm, wq_t, wkv_t, wo_t, posq_p, posk_p,
                           bv.reshape(1, C), bo.reshape(1, C), num_heads)

    out = ts_rev_permute_bm(out, (N, T2, Hp, Wp, C), ws)
    out = out.reshape(N * T2, Hp, Wp, C)
    out = depad_if_needed(out, H, W, ws)
    return out.reshape(N, T2, H, W, C)


# ---------------------------------------------------------------------------
# Pure-JAX reference (same math as torch.nn.MultiheadAttention) for checking
# ---------------------------------------------------------------------------
def _mha_reference(q, k, v, params, num_heads):
    wq, wk, wv, wo, bq, bk, bv, bo = params
    B, Lq, C = q.shape
    hd = C // num_heads
    qp = q @ wq.T + bq
    kp = k @ wk.T + bk
    vp = v @ wv.T + bv
    qp = qp.reshape(B, Lq, num_heads, hd).transpose(0, 2, 1, 3) / math.sqrt(hd)
    kp = kp.reshape(B, -1, num_heads, hd).transpose(0, 2, 1, 3)
    vp = vp.reshape(B, -1, num_heads, hd).transpose(0, 2, 1, 3)
    s = jnp.einsum('bhqd,bhkd->bhqk', qp, kp)
    p = jax.nn.softmax(s, axis=-1)
    ctx = jnp.einsum('bhqk,bhkd->bhqd', p, vp)
    ctx = ctx.transpose(0, 2, 1, 3).reshape(B, Lq, C)
    return ctx @ wo.T + bo


# ---------------------------------------------------------------------------
# Main
# ---------------------------------------------------------------------------
if __name__ == "__main__":
    # Small, module-consistent shapes
    N, T1, T2 = 2, 2, 2
    H = W = 8
    C = 32
    num_heads = 4
    ws = 4                                         # window_size (H, W divisible)

    key = jax.random.PRNGKey(0)
    k1, k2, k3, k4, k5, k6, k7 = jax.random.split(key, 7)

    memory = jax.random.normal(k1, (N, T1, H, W, C), dtype=jnp.float32)
    query = jax.random.normal(k2, (N, T2, H, W, C), dtype=jnp.float32)
    pos_embed = jax.random.normal(k3, (T1 + T2, ws, ws, C), dtype=jnp.float32)

    # Deterministic parameter init (nn.MultiheadAttention: in_proj (3C,C)+(3C,),
    # out_proj Linear(C,C)).  Synthetic values, not a checkpoint.
    in_proj_w = 0.05 * jax.random.normal(k4, (3 * C, C), dtype=jnp.float32)
    in_proj_b = 0.05 * jax.random.normal(k5, (3 * C,), dtype=jnp.float32)
    out_proj_w = 0.05 * jax.random.normal(k6, (C, C), dtype=jnp.float32)
    out_proj_b = 0.05 * jax.random.normal(k7, (C,), dtype=jnp.float32)

    params = (
        in_proj_w[0 * C:1 * C], in_proj_w[1 * C:2 * C], in_proj_w[2 * C:3 * C],
        out_proj_w,
        in_proj_b[0 * C:1 * C], in_proj_b[1 * C:2 * C], in_proj_b[2 * C:3 * C],
        out_proj_b,
    )

    out = temporal_spatial_local_mha(memory, query, pos_embed,
                                     params, num_heads, ws)
    out = jax.block_until_ready(out)
    assert out.shape == (N, T2, H, W, C), out.shape

    # Sanity-check kernel math against a pure-JAX reference of the same flow.
    # (No spatial padding needed at these shapes.)
    mem_bm = ts_permute_bm(memory, ws)
    qry_bm = ts_permute_bm(query, ws)
    pos_k = pos_embed[:T1].reshape(T1 * ws * ws, C)
    pos_q = pos_embed[T1:T1 + T2].reshape(T2 * ws * ws, C)
    ref_attn = _mha_reference(qry_bm + pos_q[None], mem_bm + pos_k[None],
                              mem_bm, params, num_heads)
    ref_out = ts_rev_permute_bm(ref_attn, (N, T2, H, W, C), ws)
    # tolerance loosened slightly for the approx (EUP) softmax reciprocal
    assert jnp.allclose(out, ref_out, atol=5e-3, rtol=5e-3), \
        float(jnp.max(jnp.abs(out - ref_out)))

    print("KERNEL_OK")
</pallas_src>

<mosaic_0001>
module attributes {stable_mosaic.version = 11 : i64} {
  func.func @_mha_kernel(%arg0: i32, %arg1: memref<4x32x32xf32, #tpu.memory_space<vmem>>, %arg2: memref<4x32x32xf32, #tpu.memory_space<vmem>>, %arg3: memref<32x32xf32, #tpu.memory_space<vmem>>, %arg4: memref<32x64xf32, #tpu.memory_space<vmem>>, %arg5: memref<32x32xf32, #tpu.memory_space<vmem>>, %arg6: memref<32x32xf32, #tpu.memory_space<vmem>>, %arg7: memref<32x32xf32, #tpu.memory_space<vmem>>, %arg8: memref<1x32xf32, #tpu.memory_space<vmem>>, %arg9: memref<1x32xf32, #tpu.memory_space<vmem>>, %arg10: memref<4x32x32xf32, #tpu.memory_space<vmem>>) attributes {dimension_semantics = [#tpu.dimension_semantics<parallel>], iteration_bounds = array<i64: 2>, scalar_prefetch = 0 : i64, scratch_operands = 0 : i64, tpu.core_type = #tpu.core_type<tc>, window_params = [{transform_indices = @transform_0, window_bounds = array<i64: 4, 32, 32>}, {transform_indices = @transform_1, window_bounds = array<i64: 4, 32, 32>}, {pipeline_mode = #tpu.pipeline_mode<synchronous>, transform_indices = @transform_2, window_bounds = array<i64: 32, 32>}, {pipeline_mode = #tpu.pipeline_mode<synchronous>, transform_indices = @transform_3, window_bounds = array<i64: 32, 64>}, {pipeline_mode = #tpu.pipeline_mode<synchronous>, transform_indices = @transform_4, window_bounds = array<i64: 32, 32>}, {pipeline_mode = #tpu.pipeline_mode<synchronous>, transform_indices = @transform_5, window_bounds = array<i64: 32, 32>}, {pipeline_mode = #tpu.pipeline_mode<synchronous>, transform_indices = @transform_6, window_bounds = array<i64: 32, 32>}, {pipeline_mode = #tpu.pipeline_mode<synchronous>, transform_indices = @transform_7, window_bounds = array<i64: 1, 32>}, {pipeline_mode = #tpu.pipeline_mode<synchronous>, transform_indices = @transform_8, window_bounds = array<i64: 1, 32>}, {transform_indices = @transform_9, window_bounds = array<i64: 4, 32, 32>}]} {
    %c0 = arith.constant 0 : index
    %c0_0 = arith.constant 0 : index
    %c0_1 = arith.constant 0 : index
    %0 = vector.load %arg1[%c0, %c0_0, %c0_1] : memref<4x32x32xf32, #tpu.memory_space<vmem>>, vector<4x32x32xf32>
    %1 = vector.shape_cast %0 : vector<4x32x32xf32> to vector<128x32xf32>
    %c0_2 = arith.constant 0 : index
    %c0_3 = arith.constant 0 : index
    %c0_4 = arith.constant 0 : index
    %2 = vector.load %arg2[%c0_2, %c0_3, %c0_4] : memref<4x32x32xf32, #tpu.memory_space<vmem>>, vector<4x32x32xf32>
    %3 = vector.shape_cast %2 : vector<4x32x32xf32> to vector<128x32xf32>
    %c0_5 = arith.constant 0 : index
    %c0_6 = arith.constant 0 : index
    %4 = vector.load %arg3[%c0_5, %c0_6] : memref<32x32xf32, #tpu.memory_space<vmem>>, vector<32x32xf32>
    %cst = arith.constant dense<0.000000e+00> : vector<128x32xf32>
    %5 = tpu.matmul %1, %4, %cst {dimension_numbers = #tpu.dot_dimension_numbers<[1], [0], [0], [1], [0, 0, 1, 1], [], []>} : vector<128x32xf32>, vector<32x32xf32>, vector<128x32xf32> -> vector<128x32xf32>
    %c0_7 = arith.constant 0 : index
    %c0_8 = arith.constant 0 : index
    %6 = vector.load %arg4[%c0_7, %c0_8] : memref<32x64xf32, #tpu.memory_space<vmem>>, vector<32x64xf32>
    %cst_9 = arith.constant dense<0.000000e+00> : vector<128x64xf32>
    %7 = tpu.matmul %3, %6, %cst_9 {dimension_numbers = #tpu.dot_dimension_numbers<[1], [0], [0], [1], [0, 0, 1, 1], [], []>} : vector<128x32xf32>, vector<32x64xf32>, vector<128x64xf32> -> vector<128x64xf32>
    %8 = vector.shape_cast %5 : vector<128x32xf32> to vector<4x32x32xf32>
    %c0_10 = arith.constant 0 : index
    %c0_11 = arith.constant 0 : index
    %9 = vector.load %arg6[%c0_10, %c0_11] : memref<32x32xf32, #tpu.memory_space<vmem>>, vector<32x32xf32>
    %10 = vector.shape_cast %9 : vector<32x32xf32> to vector<1x32x32xf32>
    %11 = vector.broadcast %10 : vector<1x32x32xf32> to vector<4x32x32xf32>
    %12 = arith.addf %8, %11 : vector<4x32x32xf32>
    %13 = vector.extract_strided_slice %7 {offsets = [0, 0], sizes = [128, 32], strides = [1, 1]} : vector<128x64xf32> to vector<128x32xf32>
    %14 = vector.shape_cast %13 : vector<128x32xf32> to vector<4x32x32xf32>
    %c0_12 = arith.constant 0 : index
    %c0_13 = arith.constant 0 : index
    %15 = vector.load %arg7[%c0_12, %c0_13] : memref<32x32xf32, #tpu.memory_space<vmem>>, vector<32x32xf32>
    %16 = vector.shape_cast %15 : vector<32x32xf32> to vector<1x32x32xf32>
    %17 = vector.broadcast %16 : vector<1x32x32xf32> to vector<4x32x32xf32>
    %18 = arith.addf %14, %17 : vector<4x32x32xf32>
    %19 = vector.extract_strided_slice %7 {offsets = [0, 32], sizes = [128, 32], strides = [1, 1]} : vector<128x64xf32> to vector<128x32xf32>
    %20 = vector.shape_cast %19 : vector<128x32xf32> to vector<4x32x32xf32>
    %c0_14 = arith.constant 0 : index
    %c0_15 = arith.constant 0 : index
    %21 = vector.load %arg8[%c0_14, %c0_15] : memref<1x32xf32, #tpu.memory_space<vmem>>, vector<1x32xf32>
    %22 = vector.shape_cast %21 : vector<1x32xf32> to vector<1x1x32xf32>
    %23 = vector.broadcast %22 : vector<1x1x32xf32> to vector<4x32x32xf32>
    %24 = arith.addf %20, %23 : vector<4x32x32xf32>
    %25 = tpu.iota {dimensions = array<i32: 1>} : vector<4x32xi32>
    %26 = tpu.iota {dimensions = array<i32: 0>} : vector<4x32xi32>
    %c8_i32 = arith.constant 8 : i32
    %27 = vector.broadcast %c8_i32 : i32 to vector<4x32xi32>
    %28 = arith.muli %26, %27 : vector<4x32xi32>
    %29 = arith.cmpi sge, %25, %28 : vector<4x32xi32>
    %c1_i32 = arith.constant 1 : i32
    %30 = vector.broadcast %c1_i32 : i32 to vector<4x32xi32>
    %31 = arith.addi %26, %30 : vector<4x32xi32>
    %c8_i32_16 = arith.constant 8 : i32
    %32 = vector.broadcast %c8_i32_16 : i32 to vector<4x32xi32>
    %33 = arith.muli %31, %32 : vector<4x32xi32>
    %34 = arith.cmpi slt, %25, %33 : vector<4x32xi32>
    %35 = arith.andi %29, %34 : vector<4x32xi1>
    %36 = arith.extui %35 : vector<4x32xi1> to vector<4x32xi32>
    %37 = arith.sitofp %36 : vector<4x32xi32> to vector<4x32xf32>
    %38 = vector.extract_strided_slice %37 {offsets = [0, 0], sizes = [1, 32], strides = [1, 1]} : vector<4x32xf32> to vector<1x32xf32>
    %39 = vector.shape_cast %38 : vector<1x32xf32> to vector<32xf32>
    %40 = vector.shape_cast %39 : vector<32xf32> to vector<1x1x32xf32>
    %41 = vector.broadcast %40 : vector<1x1x32xf32> to vector<4x32x32xf32>
    %42 = arith.mulf %12, %41 : vector<4x32x32xf32>
    %43 = vector.extract_strided_slice %37 {offsets = [1, 0], sizes = [1, 32], strides = [1, 1]} : vector<4x32xf32> to vector<1x32xf32>
    %44 = vector.shape_cast %43 : vector<1x32xf32> to vector<32xf32>
    %45 = vector.shape_cast %44 : vector<32xf32> to vector<1x1x32xf32>
    %46 = vector.broadcast %45 : vector<1x1x32xf32> to vector<4x32x32xf32>
    %47 = arith.mulf %12, %46 : vector<4x32x32xf32>
    %48 = vector.extract_strided_slice %37 {offsets = [2, 0], sizes = [1, 32], strides = [1, 1]} : vector<4x32xf32> to vector<1x32xf32>
    %49 = vector.shape_cast %48 : vector<1x32xf32> to vector<32xf32>
    %50 = vector.shape_cast %49 : vector<32xf32> to vector<1x1x32xf32>
    %51 = vector.broadcast %50 : vector<1x1x32xf32> to vector<4x32x32xf32>
    %52 = arith.mulf %12, %51 : vector<4x32x32xf32>
    %53 = vector.extract_strided_slice %37 {offsets = [3, 0], sizes = [1, 32], strides = [1, 1]} : vector<4x32xf32> to vector<1x32xf32>
    %54 = vector.shape_cast %53 : vector<1x32xf32> to vector<32xf32>
    %55 = vector.shape_cast %54 : vector<32xf32> to vector<1x1x32xf32>
    %56 = vector.broadcast %55 : vector<1x1x32xf32> to vector<4x32x32xf32>
    %57 = arith.mulf %12, %56 : vector<4x32x32xf32>
    %58 = tpu.concatenate %42, %47, %52, %57 in 1 : vector<4x32x32xf32>, vector<4x32x32xf32>, vector<4x32x32xf32>, vector<4x32x32xf32> -> vector<4x128x32xf32>
    "tpu.trace_start"() <{level = 10 : i32, message = "bqc,bkc->bqk"}> : () -> ()
    %cst_17 = arith.constant dense<0.000000e+00> : vector<4x128x32xf32>
    %59 = tpu.matmul %58, %18, %cst_17 {dimension_numbers = #tpu.dot_dimension_numbers<[2], [2], [1], [1], [0, 0, 0, 1, 1, 1], [0], [0]>} : vector<4x128x32xf32>, vector<4x32x32xf32>, vector<4x128x32xf32> -> vector<4x128x32xf32>
    "tpu.trace_stop"() : () -> ()
    %cst_18 = arith.constant dense<0xFF800000> : vector<4x128xf32>
    %60 = vector.multi_reduction <maximumf>, %59, %cst_18 [2] : vector<4x128x32xf32> to vector<4x128xf32>
    %61 = vector.shape_cast %60 : vector<4x128xf32> to vector<4x128x1xf32>
    %62 = vector.broadcast %61 : vector<4x128x1xf32> to vector<4x128x32xf32>
    %63 = arith.subf %59, %62 : vector<4x128x32xf32>
    %64 = math.exp %63 : vector<4x128x32xf32>
    %cst_19 = arith.constant dense<0.000000e+00> : vector<4x128xf32>
    %65 = vector.multi_reduction <add>, %64, %cst_19 [2] : vector<4x128x32xf32> to vector<4x128xf32>
    %66 = vector.shape_cast %65 : vector<4x128xf32> to vector<4x128x1xf32>
    %67 = tpu.reciprocal %66 {approx = true} : vector<4x128x1xf32> -> vector<4x128x1xf32>
    %68 = vector.broadcast %67 : vector<4x128x1xf32> to vector<4x128x32xf32>
    %69 = arith.mulf %64, %68 : vector<4x128x32xf32>
    "tpu.trace_start"() <{level = 10 : i32, message = "bqk,bkc->bqc"}> : () -> ()
    %cst_20 = arith.constant dense<0.000000e+00> : vector<4x128x32xf32>
    %70 = tpu.matmul %69, %24, %cst_20 {dimension_numbers = #tpu.dot_dimension_numbers<[2], [1], [1], [2], [0, 0, 0, 1, 1, 2], [0], [0]>} : vector<4x128x32xf32>, vector<4x32x32xf32>, vector<4x128x32xf32> -> vector<4x128x32xf32>
    %cst_21 = arith.constant 0.000000e+00 : f32
    "tpu.trace_stop"() : () -> ()
    %71 = vector.broadcast %cst_21 : f32 to vector<4x32x32xf32>
    %72 = vector.extract_strided_slice %70 {offsets = [0, 0, 0], sizes = [4, 32, 32], strides = [1, 1, 1]} : vector<4x128x32xf32> to vector<4x32x32xf32>
    %73 = vector.extract_strided_slice %37 {offsets = [0, 0], sizes = [1, 32], strides = [1, 1]} : vector<4x32xf32> to vector<1x32xf32>
    %74 = vector.shape_cast %73 : vector<1x32xf32> to vector<32xf32>
    %75 = vector.shape_cast %74 : vector<32xf32> to vector<1x1x32xf32>
    %76 = vector.broadcast %75 : vector<1x1x32xf32> to vector<4x32x32xf32>
    %77 = arith.mulf %72, %76 : vector<4x32x32xf32>
    %78 = arith.addf %71, %77 : vector<4x32x32xf32>
    %79 = vector.extract_strided_slice %70 {offsets = [0, 32, 0], sizes = [4, 32, 32], strides = [1, 1, 1]} : vector<4x128x32xf32> to vector<4x32x32xf32>
    %80 = vector.extract_strided_slice %37 {offsets = [1, 0], sizes = [1, 32], strides = [1, 1]} : vector<4x32xf32> to vector<1x32xf32>
    %81 = vector.shape_cast %80 : vector<1x32xf32> to vector<32xf32>
    %82 = vector.shape_cast %81 : vector<32xf32> to vector<1x1x32xf32>
    %83 = vector.broadcast %82 : vector<1x1x32xf32> to vector<4x32x32xf32>
    %84 = arith.mulf %79, %83 : vector<4x32x32xf32>
    %85 = arith.addf %78, %84 : vector<4x32x32xf32>
    %86 = vector.extract_strided_slice %70 {offsets = [0, 64, 0], sizes = [4, 32, 32], strides = [1, 1, 1]} : vector<4x128x32xf32> to vector<4x32x32xf32>
    %87 = vector.extract_strided_slice %37 {offsets = [2, 0], sizes = [1, 32], strides = [1, 1]} : vector<4x32xf32> to vector<1x32xf32>
    %88 = vector.shape_cast %87 : vector<1x32xf32> to vector<32xf32>
    %89 = vector.shape_cast %88 : vector<32xf32> to vector<1x1x32xf32>
    %90 = vector.broadcast %89 : vector<1x1x32xf32> to vector<4x32x32xf32>
    %91 = arith.mulf %86, %90 : vector<4x32x32xf32>
    %92 = arith.addf %85, %91 : vector<4x32x32xf32>
    %93 = vector.extract_strided_slice %70 {offsets = [0, 96, 0], sizes = [4, 32, 32], strides = [1, 1, 1]} : vector<4x128x32xf32> to vector<4x32x32xf32>
    %94 = vector.extract_strided_slice %37 {offsets = [3, 0], sizes = [1, 32], strides = [1, 1]} : vector<4x32xf32> to vector<1x32xf32>
    %95 = vector.shape_cast %94 : vector<1x32xf32> to vector<32xf32>
    %96 = vector.shape_cast %95 : vector<32xf32> to vector<1x1x32xf32>
    %97 = vector.broadcast %96 : vector<1x1x32xf32> to vector<4x32x32xf32>
    %98 = arith.mulf %93, %97 : vector<4x32x32xf32>
    %99 = arith.addf %92, %98 : vector<4x32x32xf32>
    %100 = vector.shape_cast %99 : vector<4x32x32xf32> to vector<128x32xf32>
    %c0_22 = arith.constant 0 : index
    %c0_23 = arith.constant 0 : index
    %101 = vector.load %arg5[%c0_22, %c0_23] : memref<32x32xf32, #tpu.memory_space<vmem>>, vector<32x32xf32>
    %cst_24 = arith.constant dense<0.000000e+00> : vector<128x32xf32>
    %102 = tpu.matmul %100, %101, %cst_24 {dimension_numbers = #tpu.dot_dimension_numbers<[1], [0], [0], [1], [0, 0, 1, 1], [], []>} : vector<128x32xf32>, vector<32x32xf32>, vector<128x32xf32> -> vector<128x32xf32>
    %c0_25 = arith.constant 0 : index
    %c0_26 = arith.constant 0 : index
    %103 = vector.load %arg9[%c0_25, %c0_26] : memref<1x32xf32, #tpu.memory_space<vmem>>, vector<1x32xf32>
    %104 = vector.broadcast %103 : vector<1x32xf32> to vector<128x32xf32>
    %105 = arith.addf %102, %104 : vector<128x32xf32>
    %106 = vector.shape_cast %105 : vector<128x32xf32> to vector<4x32x32xf32>
    %c0_27 = arith.constant 0 : index
    %c0_28 = arith.constant 0 : index
    %c0_29 = arith.constant 0 : index
    %107 = vector.load %arg10[%c0_27, %c0_28, %c0_29] : memref<4x32x32xf32, #tpu.memory_space<vmem>>, vector<4x32x32xf32>
    tpu.vector_store %arg10[%c0_27, %c0_28, %c0_29], %106 {strides = array<i32>} : memref<4x32x32xf32, #tpu.memory_space<vmem>>, vector<4x32x32xf32>,
    return
  }
  func.func @transform_0(%arg0: i32) -> (i32, i32, i32) {
    %c0_i32 = arith.constant 0 : i32
    %c0_i32_0 = arith.constant 0 : i32
    %c0_i32_1 = arith.constant 0 : i32
    return %arg0, %c0_i32, %c0_i32_0 : i32, i32, i32
  }
  func.func @transform_1(%arg0: i32) -> (i32, i32, i32) {
    %c0_i32 = arith.constant 0 : i32
    %c0_i32_0 = arith.constant 0 : i32
    %c0_i32_1 = arith.constant 0 : i32
    return %arg0, %c0_i32, %c0_i32_0 : i32, i32, i32
  }
  func.func @transform_2(%arg0: i32) -> (i32, i32) {
    %c0_i32 = arith.constant 0 : i32
    %c0_i32_0 = arith.constant 0 : i32
    %c0_i32_1 = arith.constant 0 : i32
    return %c0_i32, %c0_i32_0 : i32, i32
  }
  func.func @transform_3(%arg0: i32) -> (i32, i32) {
    %c0_i32 = arith.constant 0 : i32
    %c0_i32_0 = arith.constant 0 : i32
    %c0_i32_1 = arith.constant 0 : i32
    return %c0_i32, %c0_i32_0 : i32, i32
  }
  func.func @transform_4(%arg0: i32) -> (i32, i32) {
    %c0_i32 = arith.constant 0 : i32
    %c0_i32_0 = arith.constant 0 : i32
    %c0_i32_1 = arith.constant 0 : i32
    return %c0_i32, %c0_i32_0 : i32, i32
  }
  func.func @transform_5(%arg0: i32) -> (i32, i32) {
    %c0_i32 = arith.constant 0 : i32
    %c0_i32_0 = arith.constant 0 : i32
    %c0_i32_1 = arith.constant 0 : i32
    return %c0_i32, %c0_i32_0 : i32, i32
  }
  func.func @transform_6(%arg0: i32) -> (i32, i32) {
    %c0_i32 = arith.constant 0 : i32
    %c0_i32_0 = arith.constant 0 : i32
    %c0_i32_1 = arith.constant 0 : i32
    return %c0_i32, %c0_i32_0 : i32, i32
  }
  func.func @transform_7(%arg0: i32) -> (i32, i32) {
    %c0_i32 = arith.constant 0 : i32
    %c0_i32_0 = arith.constant 0 : i32
    %c0_i32_1 = arith.constant 0 : i32
    return %c0_i32, %c0_i32_0 : i32, i32
  }
  func.func @transform_8(%arg0: i32) -> (i32, i32) {
    %c0_i32 = arith.constant 0 : i32
    %c0_i32_0 = arith.constant 0 : i32
    %c0_i32_1 = arith.constant 0 : i32
    return %c0_i32, %c0_i32_0 : i32, i32
  }
  func.func @transform_9(%arg0: i32) -> (i32, i32, i32) {
    %c0_i32 = arith.constant 0 : i32
    %c0_i32_0 = arith.constant 0 : i32
    %c0_i32_1 = arith.constant 0 : i32
    return %arg0, %c0_i32, %c0_i32_0 : i32, i32, i32
  }
}

</mosaic_0001>

<llo_original>
// kernel: tpu_custom_call.1
$region0: #{tpu_custom_call.1}
  #allocation0 [shape = 'u32[]', space=smem, size = 0x4, offset = 0x4, fixed_abs, tag = 'smem constant byte address 0x4 - core index']
  #allocation1 [shape = 'u32[144,128]{1,0:T(1,128)}', space=vmem, size = 0x12000, scoped, tag = 'internal scratch']
  %s0 = inlined_call_operand.hbm [shape: f32[8,32,32], index: 0, kind: input, shape index: {}]
  %s1 = inlined_call_operand.hbm [shape: f32[8,32,32], index: 1, kind: input, shape index: {}]
  %s2 = inlined_call_operand.hbm [shape: f32[32,32], index: 2, kind: input, shape index: {}]
  %s3 = inlined_call_operand.hbm [shape: f32[32,64], index: 3, kind: input, shape index: {}]
  %s4 = inlined_call_operand.hbm [shape: f32[32,32], index: 4, kind: input, shape index: {}]
  %s5 = inlined_call_operand.hbm [shape: f32[32,32], index: 5, kind: input, shape index: {}]
  %s6 = inlined_call_operand.hbm [shape: f32[32,32], index: 6, kind: input, shape index: {}]
  %s7 = inlined_call_operand.vmem [shape: f32[1,32], index: 7, kind: input, shape index: {}]
  %s8 = inlined_call_operand.vmem [shape: f32[1,32], index: 8, kind: input, shape index: {}]
  %s9 = inlined_call_operand.hbm [shape: f32[8,32,32], index: 9, kind: output, shape index: {}]
  %s10 = sld [smem:[#allocation0]]
  $region97: #{tpu_custom_call.1} parent=0
    _
  %s12 = ssub.s32 1, %s10
  %s13 = scalar_select 0, %s12, %s10
  $region1: #{tpu_custom_call.1} parent=0
    #allocation2 [shape = 'u8[131072]{0}', space=vmem, size = 0x20000, scoped, tag = 'input window, operand 0']
    #allocation3 [shape = 's32[2]{0}', space=sflag, size = 0x8, scoped, tag = 'scoped memory for tpu_custom_call.1']
    #allocation4 [shape = 's32[2]{0}', space=sflag, size = 0x8, scoped, tag = 'scoped memory for tpu_custom_call.1']
    #allocation5 [shape = 'u8[131072]{0}', space=vmem, size = 0x20000, scoped, tag = 'input window, operand 1']
    #allocation6 [shape = 's32[2]{0}', space=sflag, size = 0x8, scoped, tag = 'scoped memory for tpu_custom_call.1']
    #allocation7 [shape = 'u8[16384]{0}', space=vmem, size = 0x4000, scoped, tag = 'input window, operand 2, single buffered']
    #allocation8 [shape = 'u8[16384]{0}', space=vmem, size = 0x4000, scoped, tag = 'input window, operand 3, single buffered']
    #allocation9 [shape = 's32[1]{0}', space=sflag, size = 0x4, scoped, tag = 'scoped memory for tpu_custom_call.1']
    #allocation10 [shape = 'u8[16384]{0}', space=vmem, size = 0x4000, scoped, tag = 'input window, operand 4, single buffered']
    #allocation11 [shape = 'u8[16384]{0}', space=vmem, size = 0x4000, scoped, tag = 'input window, operand 5, single buffered']
    #allocation12 [shape = 's32[1]{0}', space=sflag, size = 0x4, scoped, tag = 'scoped memory for tpu_custom_call.1']
    #allocation13 [shape = 'u8[16384]{0}', space=vmem, size = 0x4000, scoped, tag = 'input window, operand 6, single buffered']
    #allocation14 [shape = 'u8[131072]{0}', space=vmem, size = 0x20000, scoped, tag = 'output window, operand 0']
    %14 = vsyncpa [#allocation3], 0
    %s15 = scalar_lea.sflag [#allocation3], 1
    %16 = vsyncpa %s15, 0
    %17 = vsyncpa [#allocation6], 0
    %s18 = scalar_lea.sflag [#allocation6], 1
    %19 = vsyncpa %s18, 0
    %20 = vsyncpa [#allocation9], 0
    %21 = vsyncpa [#allocation12], 0
    %22 = vsyncpa [#allocation4], 0
    %s23 = scalar_lea.sflag [#allocation4], 1
    %24 = vsyncpa %s23, 0
    loop: start=0, step=1, limit=4
    $region2: #{tpu_custom_call.1} parent=1 // loop_pre_header
      _
    $region3: #{tpu_custom_call.1} parent=1 // loop_header
      %s26 = sphi 0, %s30
      %p27 = scmp.ge.s32.totalorder %s26, 4
      %s36 = sphi 0, %s38
      %s39 = sphi 0, %s36
      %s40 = sphi 0, %s39
      %s56 = sphi 0, %s40
      %s62 = sphi 0, %s64
      %s65 = sphi 0, %s62
      %s66 = sphi 0, %s65
      %s82 = sphi 0, %s66
      %s86 = sphi 0, %s86
      %s88 = sphi 0, %s86
      %s89 = sphi 0, %s88
      %s103 = sphi 0, %s89
      %s107 = sphi 0, %s107
      %s109 = sphi 0, %s107
      %s110 = sphi 0, %s109
      %s124 = sphi 0, %s110
      %s128 = sphi 0, %s128
      %s130 = sphi 0, %s128
      %s131 = sphi 0, %s130
      %s145 = sphi 0, %s131
      %s149 = sphi 0, %s149
      %s151 = sphi 0, %s149
      %s152 = sphi 0, %s151
      %s166 = sphi 0, %s152
      %s170 = sphi 0, %s170
      %s172 = sphi 0, %s170
      %s173 = sphi 0, %s172
      %s187 = sphi 0, %s173
      %s191 = sphi 0, %s191
      %s193 = sphi 0, %s191
      %s194 = sphi 0, %s193
      %s208 = sphi 0, %s194
      %s212 = sphi 0, %s212
      %s214 = sphi 0, %s212
      %s215 = sphi 0, %s214
      %s229 = sphi 0, %s215
      %s235 = sphi 0, %s237
      %s238 = sphi 0, %s235
      %s239 = sphi 0, %s238
      %s255 = sphi 0, %s239
    $region4: #{tpu_custom_call.1} parent=1 // loop_header_branch
      %29 = sbr.rel (%p27) target = $region8
    $region5: #{tpu_custom_call.1} parent=1 // loop_body
      %s31 = ssub.s32 %s26, 1
      %s32 = ssub.s32 %s26, 2
      %s33 = sadd.s32 %s26, 1
      %s34 = ssub.s32 %s26, %s33
      %p35 = scmp.eq.s32.totalorder %s34, 0
      %s37 = sadd.s32 %s36, 1
      %s38 = scalar_select %p35, %s36, %s37
      %p41 = pneg %p35
      %p42 = scmp.eq.s32.totalorder %s26, 1
      %p43 = por %p41, %p42
      %p44 = scmp.ne.s32.totalorder %s36, %s39
      %p45 = scmp.eq.s32.totalorder %s26, 0
      %p46 = por %p44, %p45
      %p47 = scmp.ne.s32.totalorder %s36, %s39
      %p48 = scmp.eq.s32.totalorder %s31, 1
      %p49 = por %p47, %p48
      %p50 = scmp.ne.s32.totalorder %s39, %s40
      %p51 = scmp.eq.s32.totalorder %s31, 0
      %p52 = por %p50, %p51
      %p53 = scmp.ne.s32.totalorder %s39, %s40
      %p54 = scmp.eq.s32.totalorder %s32, 1
      %p55 = por %p53, %p54
      %p57 = scmp.ne.s32.totalorder %s40, %s56
      %p58 = scmp.eq.s32.totalorder %s32, 0
      %p59 = por %p57, %p58
      %s60 = ssub.s32 %s26, %s33
      %p61 = scmp.eq.s32.totalorder %s60, 0
      %s63 = sadd.s32 %s62, 1
      %s64 = scalar_select %p61, %s62, %s63
      %p67 = pneg %p61
      %p68 = scmp.eq.s32.totalorder %s26, 1
      %p69 = por %p67, %p68
      %p70 = scmp.ne.s32.totalorder %s62, %s65
      %p71 = scmp.eq.s32.totalorder %s26, 0
      %p72 = por %p70, %p71
      %p73 = scmp.ne.s32.totalorder %s62, %s65
      %p74 = scmp.eq.s32.totalorder %s31, 1
      %p75 = por %p73, %p74
      %p76 = scmp.ne.s32.totalorder %s65, %s66
      %p77 = scmp.eq.s32.totalorder %s31, 0
      %p78 = por %p76, %p77
      %p79 = scmp.ne.s32.totalorder %s65, %s66
      %p80 = scmp.eq.s32.totalorder %s32, 1
      %p81 = por %p79, %p80
      %p83 = scmp.ne.s32.totalorder %s66, %s82
      %p84 = scmp.eq.s32.totalorder %s32, 0
      %p85 = por %p83, %p84
      %s87 = sadd.s32 %s86, 1
      %p90 = scmp.eq.s32.totalorder %s26, 1
      %p91 = scmp.ne.s32.totalorder %s86, %s88
      %p92 = scmp.eq.s32.totalorder %s26, 0
      %p93 = por %p91, %p92
      %p94 = scmp.ne.s32.totalorder %s86, %s88
      %p95 = scmp.eq.s32.totalorder %s31, 1
      %p96 = por %p94, %p95
      %p97 = scmp.ne.s32.totalorder %s88, %s89
      %p98 = scmp.eq.s32.totalorder %s31, 0
      %p99 = por %p97, %p98
      %p100 = scmp.ne.s32.totalorder %s88, %s89
      %p101 = scmp.eq.s32.totalorder %s32, 1
      %p102 = por %p100, %p101
      %p104 = scmp.ne.s32.totalorder %s89, %s103
      %p105 = scmp.eq.s32.totalorder %s32, 0
      %p106 = por %p104, %p105
      %s108 = sadd.s32 %s107, 1
      %p111 = scmp.eq.s32.totalorder %s26, 1
      %p112 = scmp.ne.s32.totalorder %s107, %s109
      %p113 = scmp.eq.s32.totalorder %s26, 0
      %p114 = por %p112, %p113
      %p115 = scmp.ne.s32.totalorder %s107, %s109
      %p116 = scmp.eq.s32.totalorder %s31, 1
      %p117 = por %p115, %p116
      %p118 = scmp.ne.s32.totalorder %s109, %s110
      %p119 = scmp.eq.s32.totalorder %s31, 0
      %p120 = por %p118, %p119
      %p121 = scmp.ne.s32.totalorder %s109, %s110
      %p122 = scmp.eq.s32.totalorder %s32, 1
      %p123 = por %p121, %p122
      %p125 = scmp.ne.s32.totalorder %s110, %s124
      %p126 = scmp.eq.s32.totalorder %s32, 0
      %p127 = por %p125, %p126
      %s129 = sadd.s32 %s128, 1
      %p132 = scmp.eq.s32.totalorder %s26, 1
      %p133 = scmp.ne.s32.totalorder %s128, %s130
      %p134 = scmp.eq.s32.totalorder %s26, 0
      %p135 = por %p133, %p134
      %p136 = scmp.ne.s32.totalorder %s128, %s130
      %p137 = scmp.eq.s32.totalorder %s31, 1
      %p138 = por %p136, %p137
      %p139 = scmp.ne.s32.totalorder %s130, %s131
      %p140 = scmp.eq.s32.totalorder %s31, 0
      %p141 = por %p139, %p140
      %p142 = scmp.ne.s32.totalorder %s130, %s131
      %p143 = scmp.eq.s32.totalorder %s32, 1
      %p144 = por %p142, %p143
      %p146 = scmp.ne.s32.totalorder %s131, %s145
      %p147 = scmp.eq.s32.totalorder %s32, 0
      %p148 = por %p146, %p147
      %s150 = sadd.s32 %s149, 1
      %p153 = scmp.eq.s32.totalorder %s26, 1
      %p154 = scmp.ne.s32.totalorder %s149, %s151
      %p155 = scmp.eq.s32.totalorder %s26, 0
      %p156 = por %p154, %p155
      %p157 = scmp.ne.s32.totalorder %s149, %s151
      %p158 = scmp.eq.s32.totalorder %s31, 1
      %p159 = por %p157, %p158
      %p160 = scmp.ne.s32.totalorder %s151, %s152
      %p161 = scmp.eq.s32.totalorder %s31, 0
      %p162 = por %p160, %p161
      %p163 = scmp.ne.s32.totalorder %s151, %s152
      %p164 = scmp.eq.s32.totalorder %s32, 1
      %p165 = por %p163, %p164
      %p167 = scmp.ne.s32.totalorder %s152, %s166
      %p168 = scmp.eq.s32.totalorder %s32, 0
      %p169 = por %p167, %p168
      %s171 = sadd.s32 %s170, 1
      %p174 = scmp.eq.s32.totalorder %s26, 1
      %p175 = scmp.ne.s32.totalorder %s170, %s172
      %p176 = scmp.eq.s32.totalorder %s26, 0
      %p177 = por %p175, %p176
      %p178 = scmp.ne.s32.totalorder %s170, %s172
      %p179 = scmp.eq.s32.totalorder %s31, 1
      %p180 = por %p178, %p179
      %p181 = scmp.ne.s32.totalorder %s172, %s173
      %p182 = scmp.eq.s32.totalorder %s31, 0
      %p183 = por %p181, %p182
      %p184 = scmp.ne.s32.totalorder %s172, %s173
      %p185 = scmp.eq.s32.totalorder %s32, 1
      %p186 = por %p184, %p185
      %p188 = scmp.ne.s32.totalorder %s173, %s187
      %p189 = scmp.eq.s32.totalorder %s32, 0
      %p190 = por %p188, %p189
      %s192 = sadd.s32 %s191, 1
      %p195 = scmp.eq.s32.totalorder %s26, 1
      %p196 = scmp.ne.s32.totalorder %s191, %s193
      %p197 = scmp.eq.s32.totalorder %s26, 0
      %p198 = por %p196, %p197
      %p199 = scmp.ne.s32.totalorder %s191, %s193
      %p200 = scmp.eq.s32.totalorder %s31, 1
      %p201 = por %p199, %p200
      %p202 = scmp.ne.s32.totalorder %s193, %s194
      %p203 = scmp.eq.s32.totalorder %s31, 0
      %p204 = por %p202, %p203
      %p205 = scmp.ne.s32.totalorder %s193, %s194
      %p206 = scmp.eq.s32.totalorder %s32, 1
      %p207 = por %p205, %p206
      %p209 = scmp.ne.s32.totalorder %s194, %s208
      %p210 = scmp.eq.s32.totalorder %s32, 0
      %p211 = por %p209, %p210
      %s213 = sadd.s32 %s212, 1
      %p216 = scmp.eq.s32.totalorder %s26, 1
      %p217 = scmp.ne.s32.totalorder %s212, %s214
      %p218 = scmp.eq.s32.totalorder %s26, 0
      %p219 = por %p217, %p218
      %p220 = scmp.ne.s32.totalorder %s212, %s214
      %p221 = scmp.eq.s32.totalorder %s31, 1
      %p222 = por %p220, %p221
      %p223 = scmp.ne.s32.totalorder %s214, %s215
      %p224 = scmp.eq.s32.totalorder %s31, 0
      %p225 = por %p223, %p224
      %p226 = scmp.ne.s32.totalorder %s214, %s215
      %p227 = scmp.eq.s32.totalorder %s32, 1
      %p228 = por %p226, %p227
      %p230 = scmp.ne.s32.totalorder %s215, %s229
      %p231 = scmp.eq.s32.totalorder %s32, 0
      %p232 = por %p230, %p231
      %s233 = ssub.s32 %s26, %s33
      %p234 = scmp.eq.s32.totalorder %s233, 0
      %s236 = sadd.s32 %s235, 1
      %s237 = scalar_select %p234, %s235, %s236
      %p240 = pneg %p234
      %p241 = scmp.eq.s32.totalorder %s26, 1
      %p242 = por %p240, %p241
      %p243 = scmp.ne.s32.totalorder %s235, %s238
      %p244 = scmp.eq.s32.totalorder %s26, 0
      %p245 = por %p243, %p244
      %p246 = scmp.ne.s32.totalorder %s235, %s238
      %p247 = scmp.eq.s32.totalorder %s31, 1
      %p248 = por %p246, %p247
      %p249 = scmp.ne.s32.totalorder %s238, %s239
      %p250 = scmp.eq.s32.totalorder %s31, 0
      %p251 = por %p249, %p250
      %p252 = scmp.ne.s32.totalorder %s238, %s239
      %p253 = scmp.eq.s32.totalorder %s32, 1
      %p254 = por %p252, %p253
      %p256 = scmp.ne.s32.totalorder %s239, %s255
      %p257 = scmp.eq.s32.totalorder %s32, 0
      %p258 = por %p256, %p257
      %p259 = scmp.le.s32.totalorder 1, %s26
      %p260 = scmp.lt.s32.totalorder %s26, 3
      %p261 = pnand %p259, %p260
      %p262 = pneg %p261
      // Predicated region
      $region9: #{tpu_custom_call.1} parent=5 // pred_check
        _
      $region10: #{tpu_custom_call.1} parent=5 // pred_check_branch
        %264 = sbr.rel (%p261) target = $region12
      $region11: #{tpu_custom_call.1} parent=5 // pred_region
        %s265 = ssub.s32 %s26, 1
        // Predicated region
        $region13: #{tpu_custom_call.1} parent=11 // pred_check
          %p266 = pneg %p99
        $region14: #{tpu_custom_call.1} parent=11 // pred_check_branch
          %268 = sbr.rel (%p266) target = $region16
        $region15: #{tpu_custom_call.1} parent=11 // pred_region
          %s270 = ssub.s32 512, 512
          %271 = vsyncadd [#allocation6], %s270
          %s272 = sshll.u32 [#allocation7], 4
          %s273 = int_to_ptr.vmem [resolvable:$true] %s272
          %278 = dma.hbm_to_vmem [thread:$0]  %s2, 512, %s273, [#allocation6], 128, 128, 8
        $region16: #{tpu_custom_call.1} parent=11 // pred_fallthru
          _
        // Predicated region
        $region17: #{tpu_custom_call.1} parent=11 // pred_check
          %p279 = pneg %p120
        $region18: #{tpu_custom_call.1} parent=11 // pred_check_branch
          %281 = sbr.rel (%p279) target = $region20
        $region19: #{tpu_custom_call.1} parent=11 // pred_region
          %s283 = ssub.s32 512, 512
          %284 = vsyncadd [#allocation9], %s283
          %s285 = sshll.u32 [#allocation8], 4
          %s286 = int_to_ptr.vmem [resolvable:$true] %s285
          %291 = dma.hbm_to_vmem [thread:$0]  %s3, 512, %s286, [#allocation9], 128, 128, 8
        $region20: #{tpu_custom_call.1} parent=11 // pred_fallthru
          _
        // Predicated region
        $region21: #{tpu_custom_call.1} parent=11 // pred_check
          %p292 = pneg %p141
        $region22: #{tpu_custom_call.1} parent=11 // pred_check_branch
          %294 = sbr.rel (%p292) target = $region24
        $region23: #{tpu_custom_call.1} parent=11 // pred_region
          %s296 = ssub.s32 512, 512
          %297 = vsyncadd [#allocation9], %s296
          %s298 = sshll.u32 [#allocation10], 4
          %s299 = int_to_ptr.vmem [resolvable:$true] %s298
          %304 = dma.hbm_to_vmem [thread:$0]  %s4, 512, %s299, [#allocation9], 128, 128, 8
        $region24: #{tpu_custom_call.1} parent=11 // pred_fallthru
          _
        // Predicated region
        $region25: #{tpu_custom_call.1} parent=11 // pred_check
          %p305 = pneg %p162
        $region26: #{tpu_custom_call.1} parent=11 // pred_check_branch
          %307 = sbr.rel (%p305) target = $region28
        $region27: #{tpu_custom_call.1} parent=11 // pred_region
          %s309 = ssub.s32 512, 512
          %310 = vsyncadd [#allocation12], %s309
          %s311 = sshll.u32 [#allocation11], 4
          %s312 = int_to_ptr.vmem [resolvable:$true] %s311
          %317 = dma.hbm_to_vmem [thread:$0]  %s5, 512, %s312, [#allocation12], 128, 128, 8
        $region28: #{tpu_custom_call.1} parent=11 // pred_fallthru
          _
        // Predicated region
        $region29: #{tpu_custom_call.1} parent=11 // pred_check
          %p318 = pneg %p183
        $region30: #{tpu_custom_call.1} parent=11 // pred_check_branch
          %320 = sbr.rel (%p318) target = $region32
        $region31: #{tpu_custom_call.1} parent=11 // pred_region
          %s322 = ssub.s32 512, 512
          %323 = vsyncadd [#allocation12], %s322
          %s324 = sshll.u32 [#allocation13], 4
          %s325 = int_to_ptr.vmem [resolvable:$true] %s324
          %330 = dma.hbm_to_vmem [thread:$0]  %s6, 512, %s325, [#allocation12], 128, 128, 8
        $region32: #{tpu_custom_call.1} parent=11 // pred_fallthru
          _
        // Predicated region
        $region33: #{tpu_custom_call.1} parent=11 // pred_check
          %p331 = pneg %p204
        $region34: #{tpu_custom_call.1} parent=11 // pred_check_branch
          %333 = sbr.rel (%p331) target = $region36
        $region35: #{tpu_custom_call.1} parent=11 // pred_region
          _
        $region36: #{tpu_custom_call.1} parent=11 // pred_fallthru
          _
        // Predicated region
        $region37: #{tpu_custom_call.1} parent=11 // pred_check
          %p334 = pneg %p225
        $region38: #{tpu_custom_call.1} parent=11 // pred_check_branch
          %336 = sbr.rel (%p334) target = $region40
        $region39: #{tpu_custom_call.1} parent=11 // pred_region
          _
        $region40: #{tpu_custom_call.1} parent=11 // pred_fallthru
          _
      $region12: #{tpu_custom_call.1} parent=5 // pred_fallthru
        _
      %p337 = scmp.lt.s32.totalorder %s26, 2
      // Predicated region
      $region41: #{tpu_custom_call.1} parent=5 // pred_check
        %p338 = pneg %p337
      $region42: #{tpu_custom_call.1} parent=5 // pred_check_branch
        %340 = sbr.rel (%p338) target = $region44
      $region43: #{tpu_custom_call.1} parent=5 // pred_region
        // Predicated region
        $region45: #{tpu_custom_call.1} parent=43 // pred_check
          %p341 = pneg %p46
        $region46: #{tpu_custom_call.1} parent=43 // pred_check_branch
          %343 = sbr.rel (%p341) target = $region48
        $region47: #{tpu_custom_call.1} parent=43 // pred_region
          %s344 = sand.u32 %s36, 1
          %s345 = scalar_lea.sflag [#allocation3], %s344
          %s346 = sand.u32 %s36, 1
          %s347 = smul.addr %s346, 128
          %s348 = scalar_lea.vmem [#allocation2], %s347
          %s349 = smul.u32 4, %s26
          %s351 = ssub.s32 2048, 2048
          %352 = vsyncadd %s345, %s351
          %s353 = smul.addr %s349, 4
          %s354 = smul.addr %s353, 128
          %s355 = scalar_lea.hbm %s0, %s354
          %s356 = sshll.u32 %s348, 4
          %s357 = int_to_ptr.vmem [resolvable:$true] %s356
          %362 = dma.hbm_to_vmem [thread:$0]  %s355, 2048, %s357, %s345, 128, 128, 8
        $region48: #{tpu_custom_call.1} parent=43 // pred_fallthru
          _
        // Predicated region
        $region49: #{tpu_custom_call.1} parent=43 // pred_check
          %p363 = pneg %p72
        $region50: #{tpu_custom_call.1} parent=43 // pred_check_branch
          %365 = sbr.rel (%p363) target = $region52
        $region51: #{tpu_custom_call.1} parent=43 // pred_region
          %s366 = sand.u32 %s26, 1
          %s367 = scalar_lea.sflag [#allocation6], %s366
          %s368 = sand.u32 %s62, 1
          %s369 = smul.addr %s368, 128
          %s370 = scalar_lea.vmem [#allocation5], %s369
          %s371 = smul.u32 4, %s26
          %s373 = ssub.s32 2048, 2048
          %374 = vsyncadd %s367, %s373
          %s375 = smul.addr %s371, 4
          %s376 = smul.addr %s375, 128
          %s377 = scalar_lea.hbm %s1, %s376
          %s378 = sshll.u32 %s370, 4
          %s379 = int_to_ptr.vmem [resolvable:$true] %s378
          %384 = dma.hbm_to_vmem [thread:$0]  %s377, 2048, %s379, %s367, 128, 128, 8
        $region52: #{tpu_custom_call.1} parent=43 // pred_fallthru
          _
      $region44: #{tpu_custom_call.1} parent=5 // pred_fallthru
        _
      %p385 = scmp.le.s32.totalorder 1, %s26
      %p386 = scmp.lt.s32.totalorder %s26, 3
      %p387 = pnand %p385, %p386
      %p388 = pneg %p387
      // Predicated region
      $region53: #{tpu_custom_call.1} parent=5 // pred_check
        _
      $region54: #{tpu_custom_call.1} parent=5 // pred_check_branch
        %390 = sbr.rel (%p387) target = $region56
      $region55: #{tpu_custom_call.1} parent=5 // pred_region
        %s391 = ssub.s32 %s26, 1
        %s392 = sand.u32 %s39, 1
        %s393 = scalar_lea.sflag [#allocation3], %s392
        %s394 = sand.u32 %s39, 1
        %s395 = smul.addr %s394, 128
        %s396 = scalar_lea.vmem [#allocation2], %s395
        // Predicated region
        $region57: #{tpu_custom_call.1} parent=55 // pred_check
          %p397 = pneg %p52
        $region58: #{tpu_custom_call.1} parent=55 // pred_check_branch
          %399 = sbr.rel (%p397) target = $region60
        $region59: #{tpu_custom_call.1} parent=55 // pred_region
          %400 = dma.done %s393, 2048
        $region60: #{tpu_custom_call.1} parent=55 // pred_fallthru
          _
        %s401 = sand.u32 %s31, 1
        %s402 = scalar_lea.sflag [#allocation6], %s401
        %s403 = sand.u32 %s65, 1
        %s404 = smul.addr %s403, 128
        %s405 = scalar_lea.vmem [#allocation5], %s404
        // Predicated region
        $region61: #{tpu_custom_call.1} parent=55 // pred_check
          %p406 = pneg %p78
        $region62: #{tpu_custom_call.1} parent=55 // pred_check_branch
          %408 = sbr.rel (%p406) target = $region64
        $region63: #{tpu_custom_call.1} parent=55 // pred_region
          %409 = dma.done %s402, 2048
        $region64: #{tpu_custom_call.1} parent=55 // pred_fallthru
          _
        // Predicated region
        $region65: #{tpu_custom_call.1} parent=55 // pred_check
          %p410 = pneg %p99
        $region66: #{tpu_custom_call.1} parent=55 // pred_check_branch
          %412 = sbr.rel (%p410) target = $region68
        $region67: #{tpu_custom_call.1} parent=55 // pred_region
          %413 = dma.done [#allocation6], 512
        $region68: #{tpu_custom_call.1} parent=55 // pred_fallthru
          _
        // Predicated region
        $region69: #{tpu_custom_call.1} parent=55 // pred_check
          %p414 = pneg %p120
        $region70: #{tpu_custom_call.1} parent=55 // pred_check_branch
          %416 = sbr.rel (%p414) target = $region72
        $region71: #{tpu_custom_call.1} parent=55 // pred_region
          %417 = dma.done [#allocation9], 512
        $region72: #{tpu_custom_call.1} parent=55 // pred_fallthru
          _
        // Predicated region
        $region73: #{tpu_custom_call.1} parent=55 // pred_check
          %p418 = pneg %p141
        $region74: #{tpu_custom_call.1} parent=55 // pred_check_branch
          %420 = sbr.rel (%p418) target = $region76
        $region75: #{tpu_custom_call.1} parent=55 // pred_region
          %421 = dma.done [#allocation9], 512
        $region76: #{tpu_custom_call.1} parent=55 // pred_fallthru
          _
        // Predicated region
        $region77: #{tpu_custom_call.1} parent=55 // pred_check
          %p422 = pneg %p162
        $region78: #{tpu_custom_call.1} parent=55 // pred_check_branch
          %424 = sbr.rel (%p422) target = $region80
        $region79: #{tpu_custom_call.1} parent=55 // pred_region
          %425 = dma.done [#allocation12], 512
        $region80: #{tpu_custom_call.1} parent=55 // pred_fallthru
          _
        // Predicated region
        $region81: #{tpu_custom_call.1} parent=55 // pred_check
          %p426 = pneg %p183
        $region82: #{tpu_custom_call.1} parent=55 // pred_check_branch
          %428 = sbr.rel (%p426) target = $region84
        $region83: #{tpu_custom_call.1} parent=55 // pred_region
          %429 = dma.done [#allocation12], 512
        $region84: #{tpu_custom_call.1} parent=55 // pred_fallthru
          _
        %s430 = sand.u32 %s39, 1
        %s431 = scalar_lea.sflag [#allocation3], %s430
        %s432 = sand.u32 %s39, 1
        %s433 = smul.addr %s432, 128
        %s434 = scalar_lea.vmem [#allocation2], %s433
        %p435 = pneg %p52
        %p436 = pneg %p49
        %s437 = sand.u32 %s31, 1
        %s438 = scalar_lea.sflag [#allocation6], %s437
        %s439 = sand.u32 %s65, 1
        %s440 = smul.addr %s439, 128
        %s441 = scalar_lea.vmem [#allocation5], %s440
        %p442 = pneg %p78
        %p443 = pneg %p75
        %p444 = pneg %p99
        %p445 = pneg %p96
        %p446 = pneg %p120
        %p447 = pneg %p117
        %p448 = pneg %p141
        %p449 = pneg %p138
        %p450 = pneg %p162
        %p451 = pneg %p159
        %p452 = pneg %p183
        %p453 = pneg %p180
        %p454 = pneg %p204
        %p455 = pneg %p201
        %p456 = pneg %p225
        %p457 = pneg %p222
        %p458 = pneg %p251
        %p459 = pneg %p248
        %s460 = sand.u32 %s238, 1
        %s461 = scalar_lea.sflag [#allocation4], %s460
        %s462 = sand.u32 %s238, 1
        %s463 = smul.addr %s462, 128
        %s464 = scalar_lea.vmem [#allocation14], %s463
        %s465 = smul.u32 4, %s31
        %s466 = smul.u32 4, %s31
        %s467 = smul.u32 4, %s31
        %v468 = vld [vmem:[%s396] sm:$0xff]
        %v469 = vld [vmem:[%s396 + $0x8] sm:$0xff]
        %v470 = vld [vmem:[%s396 + $0x10] sm:$0xff]
        %v471 = vld [vmem:[%s396 + $0x18] sm:$0xff]
        %v472 = vld [vmem:[%s396 + $0x20] sm:$0xff]
        %v473 = vld [vmem:[%s396 + $0x28] sm:$0xff]
        %v474 = vld [vmem:[%s396 + $0x30] sm:$0xff]
        %v475 = vld [vmem:[%s396 + $0x38] sm:$0xff]
        %v476 = vld [vmem:[%s396 + $0x40] sm:$0xff]
        %v477 = vld [vmem:[%s396 + $0x48] sm:$0xff]
        %v478 = vld [vmem:[%s396 + $0x50] sm:$0xff]
        %v479 = vld [vmem:[%s396 + $0x58] sm:$0xff]
        %v480 = vld [vmem:[%s396 + $0x60] sm:$0xff]
        %v481 = vld [vmem:[%s396 + $0x68] sm:$0xff]
        %v482 = vld [vmem:[%s396 + $0x70] sm:$0xff]
        %v483 = vld [vmem:[%s396 + $0x78] sm:$0xff]
        %v484 = vld [vmem:[%s405] sm:$0xff]
        %v485 = vld [vmem:[%s405 + $0x8] sm:$0xff]
        %v486 = vld [vmem:[%s405 + $0x10] sm:$0xff]
        %v487 = vld [vmem:[%s405 + $0x18] sm:$0xff]
        %v488 = vld [vmem:[%s405 + $0x20] sm:$0xff]
        %v489 = vld [vmem:[%s405 + $0x28] sm:$0xff]
        %v490 = vld [vmem:[%s405 + $0x30] sm:$0xff]
        %v491 = vld [vmem:[%s405 + $0x38] sm:$0xff]
        %v492 = vld [vmem:[%s405 + $0x40] sm:$0xff]
        %v493 = vld [vmem:[%s405 + $0x48] sm:$0xff]
        %v494 = vld [vmem:[%s405 + $0x50] sm:$0xff]
        %v495 = vld [vmem:[%s405 + $0x58] sm:$0xff]
        %v496 = vld [vmem:[%s405 + $0x60] sm:$0xff]
        %v497 = vld [vmem:[%s405 + $0x68] sm:$0xff]
        %v498 = vld [vmem:[%s405 + $0x70] sm:$0xff]
        %v499 = vld [vmem:[%s405 + $0x78] sm:$0xff]
        %v500 = vld [vmem:[#allocation7] sm:$0xff]
        %v501 = vld [vmem:[#allocation7 + $0x8] sm:$0xff]
        %v502 = vld [vmem:[#allocation7 + $0x10] sm:$0xff]
        %v503 = vld [vmem:[#allocation7 + $0x18] sm:$0xff]
        %vm504 = vcmask 261120
        %v506 = vsel %vm504, %v468, 0
        %v509 = vsel %vm504, %v469, 0
        %v512 = vsel %vm504, %v470, 0
        %v515 = vsel %vm504, %v471, 0
        %v518 = vsel %vm504, %v472, 0
        %v521 = vsel %vm504, %v473, 0
        %v524 = vsel %vm504, %v474, 0
        %v527 = vsel %vm504, %v475, 0
        %v530 = vsel %vm504, %v476, 0
        %v533 = vsel %vm504, %v477, 0
        %v536 = vsel %vm504, %v478, 0
        %v539 = vsel %vm504, %v479, 0
        %v542 = vsel %vm504, %v480, 0
        %v545 = vsel %vm504, %v481, 0
        %v548 = vsel %vm504, %v482, 0
        %v551 = vsel %vm504, %v483, 0
        %553 = vmatprep.subr.mxu0 0.0
        %554 = vmatpush1.msra.mxu0 0.0
        %555 = vmatprep.subr.mxu0 0.0
        %556 = vmatpush1.msra.mxu0 0.0
        %557 = vmatprep.subr.mxu0 0.0
        %558 = vmatpush1.msra.mxu0 0.0
        %559 = vmatprep.subr.mxu0 0.0
        %560 = vmatpush1.msra.mxu0 0.0
        %561 = vmatprep.subr.mxu0 0.0
        %562 = vmatpush1.msra.mxu0 0.0
        %563 = vmatprep.subr.mxu0 0.0
        %564 = vmatpush1.msra.mxu0 0.0
        %565 = vmatprep.subr.mxu0 0.0
        %566 = vmatpush1.msra.mxu0 0.0
        %567 = vmatprep.subr.mxu0 0.0
        %568 = vmatpush1.msra.mxu0 0.0
        %569 = vmatprep.subr.mxu0 0.0
        %570 = vmatpush1.msra.mxu0 0.0
        %571 = vmatprep.subr.mxu0 0.0
        %572 = vmatpush1.msra.mxu0 0.0
        %573 = vmatprep.subr.mxu0 0.0
        %574 = vmatpush1.msra.mxu0 0.0
        %575 = vmatprep.subr.mxu0 0.0
        %576 = vmatpush1.msra.mxu0 0.0
        %577 = vmatprep.subr.mxu0 0.0
        %578 = vmatpush1.msra.mxu0 %v503
        %579 = vmatprep.subr.mxu0 0.0
        %580 = vmatpush1.msra.mxu0 %v502
        %581 = vmatprep.subr.mxu0 0.0
        %582 = vmatpush1.msra.mxu0 %v501
        %583 = vmatprep.subr.mxu0 0.0
        %584 = vmatpush1.msra.mxu0 %v500
        %585 = vmatprep.subr.mxu0 0.0
        %586 = vmatpush2.msra.mxu0 0.0
        %587 = vmatprep.subr.mxu0 0.0
        %588 = vmatpush2.msra.mxu0 0.0
        %589 = vmatprep.subr.mxu0 0.0
        %590 = vmatpush2.msra.mxu0 0.0
        %591 = vmatprep.subr.mxu0 0.0
        %592 = vmatpush2.msra.mxu0 0.0
        %593 = vmatprep.subr.mxu0 0.0
        %594 = vmatpush2.msra.mxu0 0.0
        %595 = vmatprep.subr.mxu0 0.0
        %596 = vmatpush2.msra.mxu0 0.0
        %597 = vmatprep.subr.mxu0 0.0
        %598 = vmatpush2.msra.mxu0 0.0
        %599 = vmatprep.subr.mxu0 0.0
        %600 = vmatpush2.msra.mxu0 0.0
        %601 = vmatprep.subr.mxu0 0.0
        %602 = vmatpush2.msra.mxu0 0.0
        %603 = vmatprep.subr.mxu0 0.0
        %604 = vmatpush2.msra.mxu0 0.0
        %605 = vmatprep.subr.mxu0 0.0
        %606 = vmatpush2.msra.mxu0 0.0
        %607 = vmatprep.subr.mxu0 0.0
        %608 = vmatpush2.msra.mxu0 0.0
        %609 = vmatprep.subr.mxu0 0.0
        %610 = vmatpush2.msra.mxu0 0.0
        %611 = vmatprep.subr.mxu0 0.0
        %612 = vmatpush2.msra.mxu0 0.0
        %613 = vmatprep.subr.mxu0 0.0
        %614 = vmatpush2.msra.mxu0 0.0
        %615 = vmatprep.subr.mxu0 0.0
        %616 = vmatpush2.msra.mxu0 0.0
        %617 = vmatprep.mubr.f32.mxu0 0.0
        %618 = vmatmul.mubr.f32.gmra.mxu0 %v506
        %v619 = vpop.f32.mrf.mxu0
        %v620 = vadd.f32 0.0, %v619
        %v621 = vpop.f32.mrf.mxu0
        %622 = vmatprep.mubr.f32.mxu0 0.0
        %623 = vmatmul.mubr.f32.gmra.mxu0 %v509
        %v624 = vpop.f32.mrf.mxu0
        %v625 = vadd.f32 0.0, %v624
        %v626 = vpop.f32.mrf.mxu0
        %627 = vmatprep.mubr.f32.mxu0 0.0
        %628 = vmatmul.mubr.f32.gmra.mxu0 %v512
        %v629 = vpop.f32.mrf.mxu0
        %v630 = vadd.f32 0.0, %v629
        %v631 = vpop.f32.mrf.mxu0
        %632 = vmatprep.mubr.f32.mxu0 0.0
        %633 = vmatmul.mubr.f32.gmra.mxu0 %v515
        %v634 = vpop.f32.mrf.mxu0
        %v635 = vadd.f32 0.0, %v634
        %v636 = vpop.f32.mrf.mxu0
        %637 = vmatprep.mubr.f32.mxu0 0.0
        %638 = vmatmul.mubr.f32.gmra.mxu0 %v518
        %v639 = vpop.f32.mrf.mxu0
        %v640 = vadd.f32 0.0, %v639
        %v641 = vpop.f32.mrf.mxu0
        %642 = vmatprep.mubr.f32.mxu0 0.0
        %643 = vmatmul.mubr.f32.gmra.mxu0 %v521
        %v644 = vpop.f32.mrf.mxu0
        %v645 = vadd.f32 0.0, %v644
        %v646 = vpop.f32.mrf.mxu0
        %647 = vmatprep.mubr.f32.mxu0 0.0
        %648 = vmatmul.mubr.f32.gmra.mxu0 %v524
        %v649 = vpop.f32.mrf.mxu0
        %v650 = vadd.f32 0.0, %v649
        %v651 = vpop.f32.mrf.mxu0
        %652 = vmatprep.mubr.f32.mxu0 0.0
        %653 = vmatmul.mubr.f32.gmra.mxu0 %v527
        %v654 = vpop.f32.mrf.mxu0
        %v655 = vadd.f32 0.0, %v654
        %v656 = vpop.f32.mrf.mxu0
        %657 = vmatprep.mubr.f32.mxu0 0.0
        %658 = vmatmul.mubr.f32.gmra.mxu0 %v530
        %v659 = vpop.f32.mrf.mxu0
        %v660 = vadd.f32 0.0, %v659
        %v661 = vpop.f32.mrf.mxu0
        %662 = vmatprep.mubr.f32.mxu0 0.0
        %663 = vmatmul.mubr.f32.gmra.mxu0 %v533
        %v664 = vpop.f32.mrf.mxu0
        %v665 = vadd.f32 0.0, %v664
        %v666 = vpop.f32.mrf.mxu0
        %667 = vmatprep.mubr.f32.mxu0 0.0
        %668 = vmatmul.mubr.f32.gmra.mxu0 %v536
        %v669 = vpop.f32.mrf.mxu0
        %v670 = vadd.f32 0.0, %v669
        %v671 = vpop.f32.mrf.mxu0
        %672 = vmatprep.mubr.f32.mxu0 0.0
        %673 = vmatmul.mubr.f32.gmra.mxu0 %v539
        %v674 = vpop.f32.mrf.mxu0
        %v675 = vadd.f32 0.0, %v674
        %v676 = vpop.f32.mrf.mxu0
        %677 = vmatprep.mubr.f32.mxu0 0.0
        %678 = vmatmul.mubr.f32.gmra.mxu0 %v542
        %v679 = vpop.f32.mrf.mxu0
        %v680 = vadd.f32 0.0, %v679
        %v681 = vpop.f32.mrf.mxu0
        %682 = vmatprep.mubr.f32.mxu0 0.0
        %683 = vmatmul.mubr.f32.gmra.mxu0 %v545
        %v684 = vpop.f32.mrf.mxu0
        %v685 = vadd.f32 0.0, %v684
        %v686 = vpop.f32.mrf.mxu0
        %687 = vmatprep.mubr.f32.mxu0 0.0
        %688 = vmatmul.mubr.f32.gmra.mxu0 %v548
        %v689 = vpop.f32.mrf.mxu0
        %v690 = vadd.f32 0.0, %v689
        %v691 = vpop.f32.mrf.mxu0
        %692 = vmatprep.mubr.f32.mxu0 0.0
        %693 = vmatmul.mubr.f32.gmra.mxu0 %v551
        %v694 = vpop.f32.mrf.mxu0
        %v695 = vadd.f32 0.0, %v694
        %v696 = vpop.f32.mrf.mxu0
        %697 = vdwg.mxu0
        %v698 = vld [vmem:[#allocation8] sm:$0xff]
        %v699 = vld [vmem:[#allocation8 + $0x8] sm:$0xff]
        %v700 = vld [vmem:[#allocation8 + $0x10] sm:$0xff]
        %v701 = vld [vmem:[#allocation8 + $0x18] sm:$0xff]
        %v703 = vsel %vm504, %v484, 0
        %v706 = vsel %vm504, %v485, 0
        %v709 = vsel %vm504, %v486, 0
        %v712 = vsel %vm504, %v487, 0
        %v715 = vsel %vm504, %v488, 0
        %v718 = vsel %vm504, %v489, 0
        %v721 = vsel %vm504, %v490, 0
        %v724 = vsel %vm504, %v491, 0
        %v727 = vsel %vm504, %v492, 0
        %v730 = vsel %vm504, %v493, 0
        %v733 = vsel %vm504, %v494, 0
        %v736 = vsel %vm504, %v495, 0
        %v739 = vsel %vm504, %v496, 0
        %v742 = vsel %vm504, %v497, 0
        %v745 = vsel %vm504, %v498, 0
        %v748 = vsel %vm504, %v499, 0
        %750 = vmatprep.subr.mxu0 0.0
        %751 = vmatpush1.msra.mxu0 0.0
        %752 = vmatprep.subr.mxu0 0.0
        %753 = vmatpush1.msra.mxu0 0.0
        %754 = vmatprep.subr.mxu0 0.0
        %755 = vmatpush1.msra.mxu0 0.0
        %756 = vmatprep.subr.mxu0 0.0
        %757 = vmatpush1.msra.mxu0 0.0
        %758 = vmatprep.subr.mxu0 0.0
        %759 = vmatpush1.msra.mxu0 0.0
        %760 = vmatprep.subr.mxu0 0.0
        %761 = vmatpush1.msra.mxu0 0.0
        %762 = vmatprep.subr.mxu0 0.0
        %763 = vmatpush1.msra.mxu0 0.0
        %764 = vmatprep.subr.mxu0 0.0
        %765 = vmatpush1.msra.mxu0 0.0
        %766 = vmatprep.subr.mxu0 0.0
        %767 = vmatpush1.msra.mxu0 0.0
        %768 = vmatprep.subr.mxu0 0.0
        %769 = vmatpush1.msra.mxu0 0.0
        %770 = vmatprep.subr.mxu0 0.0
        %771 = vmatpush1.msra.mxu0 0.0
        %772 = vmatprep.subr.mxu0 0.0
        %773 = vmatpush1.msra.mxu0 0.0
        %774 = vmatprep.subr.mxu0 0.0
        %775 = vmatpush1.msra.mxu0 %v701
        %776 = vmatprep.subr.mxu0 0.0
        %777 = vmatpush1.msra.mxu0 %v700
        %778 = vmatprep.subr.mxu0 0.0
        %779 = vmatpush1.msra.mxu0 %v699
        %780 = vmatprep.subr.mxu0 0.0
        %781 = vmatpush1.msra.mxu0 %v698
        %782 = vmatprep.subr.mxu0 0.0
        %783 = vmatpush2.msra.mxu0 0.0
        %784 = vmatprep.subr.mxu0 0.0
        %785 = vmatpush2.msra.mxu0 0.0
        %786 = vmatprep.subr.mxu0 0.0
        %787 = vmatpush2.msra.mxu0 0.0
        %788 = vmatprep.subr.mxu0 0.0
        %789 = vmatpush2.msra.mxu0 0.0
        %790 = vmatprep.subr.mxu0 0.0
        %791 = vmatpush2.msra.mxu0 0.0
        %792 = vmatprep.subr.mxu0 0.0
        %793 = vmatpush2.msra.mxu0 0.0
        %794 = vmatprep.subr.mxu0 0.0
        %795 = vmatpush2.msra.mxu0 0.0
        %796 = vmatprep.subr.mxu0 0.0
        %797 = vmatpush2.msra.mxu0 0.0
        %798 = vmatprep.subr.mxu0 0.0
        %799 = vmatpush2.msra.mxu0 0.0
        %800 = vmatprep.subr.mxu0 0.0
        %801 = vmatpush2.msra.mxu0 0.0
        %802 = vmatprep.subr.mxu0 0.0
        %803 = vmatpush2.msra.mxu0 0.0
        %804 = vmatprep.subr.mxu0 0.0
        %805 = vmatpush2.msra.mxu0 0.0
        %806 = vmatprep.subr.mxu0 0.0
        %807 = vmatpush2.msra.mxu0 0.0
        %808 = vmatprep.subr.mxu0 0.0
        %809 = vmatpush2.msra.mxu0 0.0
        %810 = vmatprep.subr.mxu0 0.0
        %811 = vmatpush2.msra.mxu0 0.0
        %812 = vmatprep.subr.mxu0 0.0
        %813 = vmatpush2.msra.mxu0 0.0
        %814 = vmatprep.mubr.f32.mxu0 0.0
        %815 = vmatmul.mubr.f32.gmra.mxu0 %v703
        %v816 = vpop.f32.mrf.mxu0
        %v817 = vadd.f32 0.0, %v816
        %v818 = vpop.f32.mrf.mxu0
        %819 = vmatprep.mubr.f32.mxu0 0.0
        %820 = vmatmul.mubr.f32.gmra.mxu0 %v706
        %v821 = vpop.f32.mrf.mxu0
        %v822 = vadd.f32 0.0, %v821
        %v823 = vpop.f32.mrf.mxu0
        %824 = vmatprep.mubr.f32.mxu0 0.0
        %825 = vmatmul.mubr.f32.gmra.mxu0 %v709
        %v826 = vpop.f32.mrf.mxu0
        %v827 = vadd.f32 0.0, %v826
        %v828 = vpop.f32.mrf.mxu0
        %829 = vmatprep.mubr.f32.mxu0 0.0
        %830 = vmatmul.mubr.f32.gmra.mxu0 %v712
        %v831 = vpop.f32.mrf.mxu0
        %v832 = vadd.f32 0.0, %v831
        %v833 = vpop.f32.mrf.mxu0
        %834 = vmatprep.mubr.f32.mxu0 0.0
        %835 = vmatmul.mubr.f32.gmra.mxu0 %v715
        %v836 = vpop.f32.mrf.mxu0
        %v837 = vadd.f32 0.0, %v836
        %v838 = vpop.f32.mrf.mxu0
        %839 = vmatprep.mubr.f32.mxu0 0.0
        %840 = vmatmul.mubr.f32.gmra.mxu0 %v718
        %v841 = vpop.f32.mrf.mxu0
        %v842 = vadd.f32 0.0, %v841
        %v843 = vpop.f32.mrf.mxu0
        %844 = vmatprep.mubr.f32.mxu0 0.0
        %845 = vmatmul.mubr.f32.gmra.mxu0 %v721
        %v846 = vpop.f32.mrf.mxu0
        %v847 = vadd.f32 0.0, %v846
        %v848 = vpop.f32.mrf.mxu0
        %849 = vmatprep.mubr.f32.mxu0 0.0
        %850 = vmatmul.mubr.f32.gmra.mxu0 %v724
        %v851 = vpop.f32.mrf.mxu0
        %v852 = vadd.f32 0.0, %v851
        %v853 = vpop.f32.mrf.mxu0
        %854 = vmatprep.mubr.f32.mxu0 0.0
        %855 = vmatmul.mubr.f32.gmra.mxu0 %v727
        %v856 = vpop.f32.mrf.mxu0
        %v857 = vadd.f32 0.0, %v856
        %v858 = vpop.f32.mrf.mxu0
        %859 = vmatprep.mubr.f32.mxu0 0.0
        %860 = vmatmul.mubr.f32.gmra.mxu0 %v730
        %v861 = vpop.f32.mrf.mxu0
        %v862 = vadd.f32 0.0, %v861
        %v863 = vpop.f32.mrf.mxu0
        %864 = vmatprep.mubr.f32.mxu0 0.0
        %865 = vmatmul.mubr.f32.gmra.mxu0 %v733
        %v866 = vpop.f32.mrf.mxu0
        %v867 = vadd.f32 0.0, %v866
        %v868 = vpop.f32.mrf.mxu0
        %869 = vmatprep.mubr.f32.mxu0 0.0
        %870 = vmatmul.mubr.f32.gmra.mxu0 %v736
        %v871 = vpop.f32.mrf.mxu0
        %v872 = vadd.f32 0.0, %v871
        %v873 = vpop.f32.mrf.mxu0
        %874 = vmatprep.mubr.f32.mxu0 0.0
        %875 = vmatmul.mubr.f32.gmra.mxu0 %v739
        %v876 = vpop.f32.mrf.mxu0
        %v877 = vadd.f32 0.0, %v876
        %v878 = vpop.f32.mrf.mxu0
        %879 = vmatprep.mubr.f32.mxu0 0.0
        %880 = vmatmul.mubr.f32.gmra.mxu0 %v742
        %v881 = vpop.f32.mrf.mxu0
        %v882 = vadd.f32 0.0, %v881
        %v883 = vpop.f32.mrf.mxu0
        %884 = vmatprep.mubr.f32.mxu0 0.0
        %885 = vmatmul.mubr.f32.gmra.mxu0 %v745
        %v886 = vpop.f32.mrf.mxu0
        %v887 = vadd.f32 0.0, %v886
        %v888 = vpop.f32.mrf.mxu0
        %889 = vmatprep.mubr.f32.mxu0 0.0
        %890 = vmatmul.mubr.f32.gmra.mxu0 %v748
        %v891 = vpop.f32.mrf.mxu0
        %v892 = vadd.f32 0.0, %v891
        %v893 = vpop.f32.mrf.mxu0
        %894 = vdwg.mxu0
        %v895 = vld [vmem:[#allocation11] sm:$0xff]
        %v896 = vld [vmem:[#allocation11 + $0x8] sm:$0xff]
        %v897 = vld [vmem:[#allocation11 + $0x10] sm:$0xff]
        %v898 = vld [vmem:[#allocation11 + $0x18] sm:$0xff]
        %v899 = vadd.f32 %v620, %v895
        %v900 = vadd.f32 %v625, %v896
        %v901 = vadd.f32 %v630, %v897
        %v902 = vadd.f32 %v635, %v898
        %v903 = vadd.f32 %v640, %v895
        %v904 = vadd.f32 %v645, %v896
        %v905 = vadd.f32 %v650, %v897
        %v906 = vadd.f32 %v655, %v898
        %v907 = vadd.f32 %v660, %v895
        %v908 = vadd.f32 %v665, %v896
        %v909 = vadd.f32 %v670, %v897
        %v910 = vadd.f32 %v675, %v898
        %v911 = vadd.f32 %v680, %v895
        %v912 = vadd.f32 %v685, %v896
        %v913 = vadd.f32 %v690, %v897
        %v914 = vadd.f32 %v695, %v898
        %v915 = vld [vmem:[#allocation13] sm:$0xff]
        %v916 = vld [vmem:[#allocation13 + $0x8] sm:$0xff]
        %v917 = vld [vmem:[#allocation13 + $0x10] sm:$0xff]
        %v918 = vld [vmem:[#allocation13 + $0x18] sm:$0xff]
        %v919 = vadd.f32 %v817, %v915
        %v920 = vadd.f32 %v822, %v916
        %v921 = vadd.f32 %v827, %v917
        %v922 = vadd.f32 %v832, %v918
        %v923 = vadd.f32 %v837, %v915
        %v924 = vadd.f32 %v842, %v916
        %v925 = vadd.f32 %v847, %v917
        %v926 = vadd.f32 %v852, %v918
        %v927 = vadd.f32 %v857, %v915
        %v928 = vadd.f32 %v862, %v916
        %v929 = vadd.f32 %v867, %v917
        %v930 = vadd.f32 %v872, %v918
        %v931 = vadd.f32 %v877, %v915
        %v932 = vadd.f32 %v882, %v916
        %v933 = vadd.f32 %v887, %v917
        %v934 = vadd.f32 %v892, %v918
        %v935 = vld [vmem:[%s7] sm:$0x1]
        %v937 = vlaneseq
        %v938 = vshrl.u32 %v937, 7
        %v939 = vsub.s32 0, %v938
        %v940 = vrot.slane %v935, %v939
        %941 = vrot.lane.b32.xlu0 %v940, 32
        %v942 = vpop.permute.xlu0 %941
        %v944 = vadd.f32 %v817, %v942
        %v945 = vadd.f32 %v822, %v942
        %v946 = vadd.f32 %v827, %v942
        %v947 = vadd.f32 %v832, %v942
        %v948 = vadd.f32 %v837, %v942
        %v949 = vadd.f32 %v842, %v942
        %v950 = vadd.f32 %v847, %v942
        %v951 = vadd.f32 %v852, %v942
        %v952 = vadd.f32 %v857, %v942
        %v953 = vadd.f32 %v862, %v942
        %v954 = vadd.f32 %v867, %v942
        %v955 = vadd.f32 %v872, %v942
        %v956 = vadd.f32 %v877, %v942
        %v957 = vadd.f32 %v882, %v942
        %v958 = vadd.f32 %v887, %v942
        %v959 = vadd.f32 %v892, %v942
        %v960 = vlaneseq
        %v961 = vand.u32 %v960, 127
        %v962 = vlaneseq
        %v963 = vshrl.u32 %v962, 7
        %v964 = vmul.u32 %v963, 8
        %vm965 = vcmp.ge.s32.totalorder %v961, %v964
        %v966 = vadd.s32 %v963, 1
        %v967 = vmul.u32 %v966, 8
        %vm968 = vcmp.lt.s32.totalorder %v961, %v967
        %vm969 = vmand %vm965, %vm968
        %v970 = vsel %vm969, 1, 0
        %v971 = vcvt.s32.f32 %v970
        %v972 = vlaneseq
        %v973 = vshrl.u32 %v972, 7
        %v974 = vsub.s32 0, %v973
        %v975 = vrot.slane %v971, %v974
        %v976 = vmul.f32 %v899, %v975
        %v977 = vmul.f32 %v900, %v975
        %v978 = vmul.f32 %v901, %v975
        %v979 = vmul.f32 %v902, %v975
        %v980 = vmul.f32 %v903, %v975
        %v981 = vmul.f32 %v904, %v975
        %v982 = vmul.f32 %v905, %v975
        %v983 = vmul.f32 %v906, %v975
        %v984 = vmul.f32 %v907, %v975
        %v985 = vmul.f32 %v908, %v975
        %v986 = vmul.f32 %v909, %v975
        %v987 = vmul.f32 %v910, %v975
        %v988 = vmul.f32 %v911, %v975
        %v989 = vmul.f32 %v912, %v975
        %v990 = vmul.f32 %v913, %v975
        %v991 = vmul.f32 %v914, %v975
        %v992 = vlaneseq
        %v993 = vshrl.u32 %v992, 7
        %v994 = vsub.s32 1, %v993
        %v995 = vrot.slane %v971, %v994
        %v996 = vmul.f32 %v899, %v995
        %v997 = vmul.f32 %v900, %v995
        %v998 = vmul.f32 %v901, %v995
        %v999 = vmul.f32 %v902, %v995
        %v1000 = vmul.f32 %v903, %v995
        %v1001 = vmul.f32 %v904, %v995
        %v1002 = vmul.f32 %v905, %v995
        %v1003 = vmul.f32 %v906, %v995
        %v1004 = vmul.f32 %v907, %v995
        %v1005 = vmul.f32 %v908, %v995
        %v1006 = vmul.f32 %v909, %v995
        %v1007 = vmul.f32 %v910, %v995
        %v1008 = vmul.f32 %v911, %v995
        %v1009 = vmul.f32 %v912, %v995
        %v1010 = vmul.f32 %v913, %v995
        %v1011 = vmul.f32 %v914, %v995
        %v1012 = vlaneseq
        %v1013 = vshrl.u32 %v1012, 7
        %v1014 = vsub.s32 2, %v1013
        %v1015 = vrot.slane %v971, %v1014
        %v1016 = vmul.f32 %v899, %v1015
        %v1017 = vmul.f32 %v900, %v1015
        %v1018 = vmul.f32 %v901, %v1015
        %v1019 = vmul.f32 %v902, %v1015
        %v1020 = vmul.f32 %v903, %v1015
        %v1021 = vmul.f32 %v904, %v1015
        %v1022 = vmul.f32 %v905, %v1015
        %v1023 = vmul.f32 %v906, %v1015
        %v1024 = vmul.f32 %v907, %v1015
        %v1025 = vmul.f32 %v908, %v1015
        %v1026 = vmul.f32 %v909, %v1015
        %v1027 = vmul.f32 %v910, %v1015
        %v1028 = vmul.f32 %v911, %v1015
        %v1029 = vmul.f32 %v912, %v1015
        %v1030 = vmul.f32 %v913, %v1015
        %v1031 = vmul.f32 %v914, %v1015
        %v1032 = vlaneseq
        %v1033 = vshrl.u32 %v1032, 7
        %v1034 = vsub.s32 3, %v1033
        %v1035 = vrot.slane %v971, %v1034
        %v1036 = vmul.f32 %v899, %v1035
        %v1037 = vmul.f32 %v900, %v1035
        %v1038 = vmul.f32 %v901, %v1035
        %v1039 = vmul.f32 %v902, %v1035
        %v1040 = vmul.f32 %v903, %v1035
        %v1041 = vmul.f32 %v904, %v1035
        %v1042 = vmul.f32 %v905, %v1035
        %v1043 = vmul.f32 %v906, %v1035
        %v1044 = vmul.f32 %v907, %v1035
        %v1045 = vmul.f32 %v908, %v1035
        %v1046 = vmul.f32 %v909, %v1035
        %v1047 = vmul.f32 %v910, %v1035
        %v1048 = vmul.f32 %v911, %v1035
        %v1049 = vmul.f32 %v912, %v1035
        %v1050 = vmul.f32 %v913, %v1035
        %v1051 = vmul.f32 %v914, %v1035
        %v1053 = vsel %vm504, %v976, 0
        %v1056 = vsel %vm504, %v977, 0
        %v1059 = vsel %vm504, %v978, 0
        %v1062 = vsel %vm504, %v979, 0
        %v1065 = vsel %vm504, %v996, 0
        %v1068 = vsel %vm504, %v997, 0
        %v1071 = vsel %vm504, %v998, 0
        %v1074 = vsel %vm504, %v999, 0
        %v1077 = vsel %vm504, %v1016, 0
        %v1080 = vsel %vm504, %v1017, 0
        %v1083 = vsel %vm504, %v1018, 0
        %v1086 = vsel %vm504, %v1019, 0
        %v1089 = vsel %vm504, %v1036, 0
        %v1092 = vsel %vm504, %v1037, 0
        %v1095 = vsel %vm504, %v1038, 0
        %v1098 = vsel %vm504, %v1039, 0
        %v1101 = vsel %vm504, %v919, 0
        %v1104 = vsel %vm504, %v920, 0
        %v1107 = vsel %vm504, %v921, 0
        %v1110 = vsel %vm504, %v922, 0
        %1112 = vmatprep.subr.mxu0 0.0
        %1113 = vmatpush1.xpose.msra.mxu0 0.0
        %1114 = vmatprep.subr.mxu0 0.0
        %1115 = vmatpush1.xpose.msra.mxu0 0.0
        %1116 = vmatprep.subr.mxu0 0.0
        %1117 = vmatpush1.xpose.msra.mxu0 0.0
        %1118 = vmatprep.subr.mxu0 0.0
        %1119 = vmatpush1.xpose.msra.mxu0 0.0
        %1120 = vmatprep.subr.mxu0 0.0
        %1121 = vmatpush1.xpose.msra.mxu0 0.0
        %1122 = vmatprep.subr.mxu0 0.0
        %1123 = vmatpush1.xpose.msra.mxu0 0.0
        %1124 = vmatprep.subr.mxu0 0.0
        %1125 = vmatpush1.xpose.msra.mxu0 0.0
        %1126 = vmatprep.subr.mxu0 0.0
        %1127 = vmatpush1.xpose.msra.mxu0 0.0
        %1128 = vmatprep.subr.mxu0 0.0
        %1129 = vmatpush1.xpose.msra.mxu0 0.0
        %1130 = vmatprep.subr.mxu0 0.0
        %1131 = vmatpush1.xpose.msra.mxu0 0.0
        %1132 = vmatprep.subr.mxu0 0.0
        %1133 = vmatpush1.xpose.msra.mxu0 0.0
        %1134 = vmatprep.subr.mxu0 0.0
        %1135 = vmatpush1.xpose.msra.mxu0 0.0
        %1136 = vmatprep.subr.mxu0 0.0
        %1137 = vmatpush1.xpose.msra.mxu0 %v1110
        %1138 = vmatprep.subr.mxu0 0.0
        %1139 = vmatpush1.xpose.msra.mxu0 %v1107
        %1140 = vmatprep.subr.mxu0 0.0
        %1141 = vmatpush1.xpose.msra.mxu0 %v1104
        %1142 = vmatprep.subr.mxu0 0.0
        %1143 = vmatpush1.xpose.msra.mxu0 %v1101
        %1144 = vmatprep.subr.mxu0 0.0
        %1145 = vmatpush2.xpose.msra.mxu0 0.0
        %1146 = vmatprep.subr.mxu0 0.0
        %1147 = vmatpush2.xpose.msra.mxu0 0.0
        %1148 = vmatprep.subr.mxu0 0.0
        %1149 = vmatpush2.xpose.msra.mxu0 0.0
        %1150 = vmatprep.subr.mxu0 0.0
        %1151 = vmatpush2.xpose.msra.mxu0 0.0
        %1152 = vmatprep.subr.mxu0 0.0
        %1153 = vmatpush2.xpose.msra.mxu0 0.0
        %1154 = vmatprep.subr.mxu0 0.0
        %1155 = vmatpush2.xpose.msra.mxu0 0.0
        %1156 = vmatprep.subr.mxu0 0.0
        %1157 = vmatpush2.xpose.msra.mxu0 0.0
        %1158 = vmatprep.subr.mxu0 0.0
        %1159 = vmatpush2.xpose.msra.mxu0 0.0
        %1160 = vmatprep.subr.mxu0 0.0
        %1161 = vmatpush2.xpose.msra.mxu0 0.0
        %1162 = vmatprep.subr.mxu0 0.0
        %1163 = vmatpush2.xpose.msra.mxu0 0.0
        %1164 = vmatprep.subr.mxu0 0.0
        %1165 = vmatpush2.xpose.msra.mxu0 0.0
        %1166 = vmatprep.subr.mxu0 0.0
        %1167 = vmatpush2.xpose.msra.mxu0 0.0
        %1168 = vmatprep.subr.mxu0 0.0
        %1169 = vmatpush2.xpose.msra.mxu0 0.0
        %1170 = vmatprep.subr.mxu0 0.0
        %1171 = vmatpush2.xpose.msra.mxu0 0.0
        %1172 = vmatprep.subr.mxu0 0.0
        %1173 = vmatpush2.xpose.msra.mxu0 0.0
        %1174 = vmatprep.subr.mxu0 0.0
        %1175 = vmatpush2.xpose.msra.mxu0 0.0
        %1176 = vmatprep.mubr.f32.mxu0 0.0
        %1177 = vmatmul.mubr.f32.gmra.mxu0 %v1053
        %v1178 = vpop.f32.mrf.mxu0
        %v1179 = vadd.f32 0.0, %v1178
        %v1180 = vpop.f32.mrf.mxu0
        %1181 = vmatprep.mubr.f32.mxu0 0.0
        %1182 = vmatmul.mubr.f32.gmra.mxu0 %v1056
        %v1183 = vpop.f32.mrf.mxu0
        %v1184 = vadd.f32 0.0, %v1183
        %v1185 = vpop.f32.mrf.mxu0
        %1186 = vmatprep.mubr.f32.mxu0 0.0
        %1187 = vmatmul.mubr.f32.gmra.mxu0 %v1059
        %v1188 = vpop.f32.mrf.mxu0
        %v1189 = vadd.f32 0.0, %v1188
        %v1190 = vpop.f32.mrf.mxu0
        %1191 = vmatprep.mubr.f32.mxu0 0.0
        %1192 = vmatmul.mubr.f32.gmra.mxu0 %v1062
        %v1193 = vpop.f32.mrf.mxu0
        %v1194 = vadd.f32 0.0, %v1193
        %v1195 = vpop.f32.mrf.mxu0
        %1196 = vmatprep.mubr.f32.mxu0 0.0
        %1197 = vmatmul.mubr.f32.gmra.mxu0 %v1065
        %v1198 = vpop.f32.mrf.mxu0
        %v1199 = vadd.f32 0.0, %v1198
        %v1200 = vpop.f32.mrf.mxu0
        %1201 = vmatprep.mubr.f32.mxu0 0.0
        %1202 = vmatmul.mubr.f32.gmra.mxu0 %v1068
        %v1203 = vpop.f32.mrf.mxu0
        %v1204 = vadd.f32 0.0, %v1203
        %v1205 = vpop.f32.mrf.mxu0
        %1206 = vmatprep.mubr.f32.mxu0 0.0
        %1207 = vmatmul.mubr.f32.gmra.mxu0 %v1071
        %v1208 = vpop.f32.mrf.mxu0
        %v1209 = vadd.f32 0.0, %v1208
        %v1210 = vpop.f32.mrf.mxu0
        %1211 = vmatprep.mubr.f32.mxu0 0.0
        %1212 = vmatmul.mubr.f32.gmra.mxu0 %v1074
        %v1213 = vpop.f32.mrf.mxu0
        %v1214 = vadd.f32 0.0, %v1213
        %v1215 = vpop.f32.mrf.mxu0
        %1216 = vmatprep.mubr.f32.mxu0 0.0
        %1217 = vmatmul.mubr.f32.gmra.mxu0 %v1077
        %v1218 = vpop.f32.mrf.mxu0
        %v1219 = vadd.f32 0.0, %v1218
        %v1220 = vpop.f32.mrf.mxu0
        %1221 = vmatprep.mubr.f32.mxu0 0.0
        %1222 = vmatmul.mubr.f32.gmra.mxu0 %v1080
        %v1223 = vpop.f32.mrf.mxu0
        %v1224 = vadd.f32 0.0, %v1223
        %v1225 = vpop.f32.mrf.mxu0
        %1226 = vmatprep.mubr.f32.mxu0 0.0
        %1227 = vmatmul.mubr.f32.gmra.mxu0 %v1083
        %v1228 = vpop.f32.mrf.mxu0
        %v1229 = vadd.f32 0.0, %v1228
        %v1230 = vpop.f32.mrf.mxu0
        %1231 = vmatprep.mubr.f32.mxu0 0.0
        %1232 = vmatmul.mubr.f32.gmra.mxu0 %v1086
        %v1233 = vpop.f32.mrf.mxu0
        %v1234 = vadd.f32 0.0, %v1233
        %v1235 = vpop.f32.mrf.mxu0
        %1236 = vmatprep.mubr.f32.mxu0 0.0
        %1237 = vmatmul.mubr.f32.gmra.mxu0 %v1089
        %v1238 = vpop.f32.mrf.mxu0
        %v1239 = vadd.f32 0.0, %v1238
        %v1240 = vpop.f32.mrf.mxu0
        %1241 = vmatprep.mubr.f32.mxu0 0.0
        %1242 = vmatmul.mubr.f32.gmra.mxu0 %v1092
        %v1243 = vpop.f32.mrf.mxu0
        %v1244 = vadd.f32 0.0, %v1243
        %v1245 = vpop.f32.mrf.mxu0
        %1246 = vmatprep.mubr.f32.mxu0 0.0
        %1247 = vmatmul.mubr.f32.gmra.mxu0 %v1095
        %v1248 = vpop.f32.mrf.mxu0
        %v1249 = vadd.f32 0.0, %v1248
        %v1250 = vpop.f32.mrf.mxu0
        %1251 = vmatprep.mubr.f32.mxu0 0.0
        %1252 = vmatmul.mubr.f32.gmra.mxu0 %v1098
        %v1253 = vpop.f32.mrf.mxu0
        %v1254 = vadd.f32 0.0, %v1253
        %v1255 = vpop.f32.mrf.mxu0
        %1256 = vdwg.mxu0
        %v1258 = vsel %vm504, %v980, 0
        %v1261 = vsel %vm504, %v981, 0
        %v1264 = vsel %vm504, %v982, 0
        %v1267 = vsel %vm504, %v983, 0
        %v1270 = vsel %vm504, %v1000, 0
        %v1273 = vsel %vm504, %v1001, 0
        %v1276 = vsel %vm504, %v1002, 0
        %v1279 = vsel %vm504, %v1003, 0
        %v1282 = vsel %vm504, %v1020, 0
        %v1285 = vsel %vm504, %v1021, 0
        %v1288 = vsel %vm504, %v1022, 0
        %v1291 = vsel %vm504, %v1023, 0
        %v1294 = vsel %vm504, %v1040, 0
        %v1297 = vsel %vm504, %v1041, 0
        %v1300 = vsel %vm504, %v1042, 0
        %v1303 = vsel %vm504, %v1043, 0
        %v1306 = vsel %vm504, %v923, 0
        %v1309 = vsel %vm504, %v924, 0
        %v1312 = vsel %vm504, %v925, 0
        %v1315 = vsel %vm504, %v926, 0
        %1317 = vmatprep.subr.mxu0 0.0
        %1318 = vmatpush1.xpose.msra.mxu0 0.0
        %1319 = vmatprep.subr.mxu0 0.0
        %1320 = vmatpush1.xpose.msra.mxu0 0.0
        %1321 = vmatprep.subr.mxu0 0.0
        %1322 = vmatpush1.xpose.msra.mxu0 0.0
        %1323 = vmatprep.subr.mxu0 0.0
        %1324 = vmatpush1.xpose.msra.mxu0 0.0
        %1325 = vmatprep.subr.mxu0 0.0
        %1326 = vmatpush1.xpose.msra.mxu0 0.0
        %1327 = vmatprep.subr.mxu0 0.0
        %1328 = vmatpush1.xpose.msra.mxu0 0.0
        %1329 = vmatprep.subr.mxu0 0.0
        %1330 = vmatpush1.xpose.msra.mxu0 0.0
        %1331 = vmatprep.subr.mxu0 0.0
        %1332 = vmatpush1.xpose.msra.mxu0 0.0
        %1333 = vmatprep.subr.mxu0 0.0
        %1334 = vmatpush1.xpose.msra.mxu0 0.0
        %1335 = vmatprep.subr.mxu0 0.0
        %1336 = vmatpush1.xpose.msra.mxu0 0.0
        %1337 = vmatprep.subr.mxu0 0.0
        %1338 = vmatpush1.xpose.msra.mxu0 0.0
        %1339 = vmatprep.subr.mxu0 0.0
        %1340 = vmatpush1.xpose.msra.mxu0 0.0
        %1341 = vmatprep.subr.mxu0 0.0
        %1342 = vmatpush1.xpose.msra.mxu0 %v1315
        %1343 = vmatprep.subr.mxu0 0.0
        %1344 = vmatpush1.xpose.msra.mxu0 %v1312
        %1345 = vmatprep.subr.mxu0 0.0
        %1346 = vmatpush1.xpose.msra.mxu0 %v1309
        %1347 = vmatprep.subr.mxu0 0.0
        %1348 = vmatpush1.xpose.msra.mxu0 %v1306
        %1349 = vmatprep.subr.mxu0 0.0
        %1350 = vmatpush2.xpose.msra.mxu0 0.0
        %1351 = vmatprep.subr.mxu0 0.0
        %1352 = vmatpush2.xpose.msra.mxu0 0.0
        %1353 = vmatprep.subr.mxu0 0.0
        %1354 = vmatpush2.xpose.msra.mxu0 0.0
        %1355 = vmatprep.subr.mxu0 0.0
        %1356 = vmatpush2.xpose.msra.mxu0 0.0
        %1357 = vmatprep.subr.mxu0 0.0
        %1358 = vmatpush2.xpose.msra.mxu0 0.0
        %1359 = vmatprep.subr.mxu0 0.0
        %1360 = vmatpush2.xpose.msra.mxu0 0.0
        %1361 = vmatprep.subr.mxu0 0.0
        %1362 = vmatpush2.xpose.msra.mxu0 0.0
        %1363 = vmatprep.subr.mxu0 0.0
        %1364 = vmatpush2.xpose.msra.mxu0 0.0
        %1365 = vmatprep.subr.mxu0 0.0
        %1366 = vmatpush2.xpose.msra.mxu0 0.0
        %1367 = vmatprep.subr.mxu0 0.0
        %1368 = vmatpush2.xpose.msra.mxu0 0.0
        %1369 = vmatprep.subr.mxu0 0.0
        %1370 = vmatpush2.xpose.msra.mxu0 0.0
        %1371 = vmatprep.subr.mxu0 0.0
        %1372 = vmatpush2.xpose.msra.mxu0 0.0
        %1373 = vmatprep.subr.mxu0 0.0
        %1374 = vmatpush2.xpose.msra.mxu0 0.0
        %1375 = vmatprep.subr.mxu0 0.0
        %1376 = vmatpush2.xpose.msra.mxu0 0.0
        %1377 = vmatprep.subr.mxu0 0.0
        %1378 = vmatpush2.xpose.msra.mxu0 0.0
        %1379 = vmatprep.subr.mxu0 0.0
        %1380 = vmatpush2.xpose.msra.mxu0 0.0
        %1381 = vmatprep.mubr.f32.mxu0 0.0
        %1382 = vmatmul.mubr.f32.gmra.mxu0 %v1258
        %v1383 = vpop.f32.mrf.mxu0
        %v1384 = vadd.f32 0.0, %v1383
        %v1385 = vpop.f32.mrf.mxu0
        %1386 = vmatprep.mubr.f32.mxu0 0.0
        %1387 = vmatmul.mubr.f32.gmra.mxu0 %v1261
        %v1388 = vpop.f32.mrf.mxu0
        %v1389 = vadd.f32 0.0, %v1388
        %v1390 = vpop.f32.mrf.mxu0
        %1391 = vmatprep.mubr.f32.mxu0 0.0
        %1392 = vmatmul.mubr.f32.gmra.mxu0 %v1264
        %v1393 = vpop.f32.mrf.mxu0
        %v1394 = vadd.f32 0.0, %v1393
        %v1395 = vpop.f32.mrf.mxu0
        %1396 = vmatprep.mubr.f32.mxu0 0.0
        %1397 = vmatmul.mubr.f32.gmra.mxu0 %v1267
        %v1398 = vpop.f32.mrf.mxu0
        %v1399 = vadd.f32 0.0, %v1398
        %v1400 = vpop.f32.mrf.mxu0
        %1401 = vmatprep.mubr.f32.mxu0 0.0
        %1402 = vmatmul.mubr.f32.gmra.mxu0 %v1270
        %v1403 = vpop.f32.mrf.mxu0
        %v1404 = vadd.f32 0.0, %v1403
        %v1405 = vpop.f32.mrf.mxu0
        %1406 = vmatprep.mubr.f32.mxu0 0.0
        %1407 = vmatmul.mubr.f32.gmra.mxu0 %v1273
        %v1408 = vpop.f32.mrf.mxu0
        %v1409 = vadd.f32 0.0, %v1408
        %v1410 = vpop.f32.mrf.mxu0
        %1411 = vmatprep.mubr.f32.mxu0 0.0
        %1412 = vmatmul.mubr.f32.gmra.mxu0 %v1276
        %v1413 = vpop.f32.mrf.mxu0
        %v1414 = vadd.f32 0.0, %v1413
        %v1415 = vpop.f32.mrf.mxu0
        %1416 = vmatprep.mubr.f32.mxu0 0.0
        %1417 = vmatmul.mubr.f32.gmra.mxu0 %v1279
        %v1418 = vpop.f32.mrf.mxu0
        %v1419 = vadd.f32 0.0, %v1418
        %v1420 = vpop.f32.mrf.mxu0
        %1421 = vmatprep.mubr.f32.mxu0 0.0
        %1422 = vmatmul.mubr.f32.gmra.mxu0 %v1282
        %v1423 = vpop.f32.mrf.mxu0
        %v1424 = vadd.f32 0.0, %v1423
        %v1425 = vpop.f32.mrf.mxu0
        %1426 = vmatprep.mubr.f32.mxu0 0.0
        %1427 = vmatmul.mubr.f32.gmra.mxu0 %v1285
        %v1428 = vpop.f32.mrf.mxu0
        %v1429 = vadd.f32 0.0, %v1428
        %v1430 = vpop.f32.mrf.mxu0
        %1431 = vmatprep.mubr.f32.mxu0 0.0
        %1432 = vmatmul.mubr.f32.gmra.mxu0 %v1288
        %v1433 = vpop.f32.mrf.mxu0
        %v1434 = vadd.f32 0.0, %v1433
        %v1435 = vpop.f32.mrf.mxu0
        %1436 = vmatprep.mubr.f32.mxu0 0.0
        %1437 = vmatmul.mubr.f32.gmra.mxu0 %v1291
        %v1438 = vpop.f32.mrf.mxu0
        %v1439 = vadd.f32 0.0, %v1438
        %v1440 = vpop.f32.mrf.mxu0
        %1441 = vmatprep.mubr.f32.mxu0 0.0
        %1442 = vmatmul.mubr.f32.gmra.mxu0 %v1294
        %v1443 = vpop.f32.mrf.mxu0
        %v1444 = vadd.f32 0.0, %v1443
        %v1445 = vpop.f32.mrf.mxu0
        %1446 = vmatprep.mubr.f32.mxu0 0.0
        %1447 = vmatmul.mubr.f32.gmra.mxu0 %v1297
        %v1448 = vpop.f32.mrf.mxu0
        %v1449 = vadd.f32 0.0, %v1448
        %v1450 = vpop.f32.mrf.mxu0
        %1451 = vmatprep.mubr.f32.mxu0 0.0
        %1452 = vmatmul.mubr.f32.gmra.mxu0 %v1300
        %v1453 = vpop.f32.mrf.mxu0
        %v1454 = vadd.f32 0.0, %v1453
        %v1455 = vpop.f32.mrf.mxu0
        %1456 = vmatprep.mubr.f32.mxu0 0.0
        %1457 = vmatmul.mubr.f32.gmra.mxu0 %v1303
        %v1458 = vpop.f32.mrf.mxu0
        %v1459 = vadd.f32 0.0, %v1458
        %v1460 = vpop.f32.mrf.mxu0
        %1461 = vdwg.mxu0
        %v1463 = vsel %vm504, %v984, 0
        %v1466 = vsel %vm504, %v985, 0
        %v1469 = vsel %vm504, %v986, 0
        %v1472 = vsel %vm504, %v987, 0
        %v1475 = vsel %vm504, %v1004, 0
        %v1478 = vsel %vm504, %v1005, 0
        %v1481 = vsel %vm504, %v1006, 0
        %v1484 = vsel %vm504, %v1007, 0
        %v1487 = vsel %vm504, %v1024, 0
        %v1490 = vsel %vm504, %v1025, 0
        %v1493 = vsel %vm504, %v1026, 0
        %v1496 = vsel %vm504, %v1027, 0
        %v1499 = vsel %vm504, %v1044, 0
        %v1502 = vsel %vm504, %v1045, 0
        %v1505 = vsel %vm504, %v1046, 0
        %v1508 = vsel %vm504, %v1047, 0
        %v1511 = vsel %vm504, %v927, 0
        %v1514 = vsel %vm504, %v928, 0
        %v1517 = vsel %vm504, %v929, 0
        %v1520 = vsel %vm504, %v930, 0
        %1522 = vmatprep.subr.mxu0 0.0
        %1523 = vmatpush1.xpose.msra.mxu0 0.0
        %1524 = vmatprep.subr.mxu0 0.0
        %1525 = vmatpush1.xpose.msra.mxu0 0.0
        %1526 = vmatprep.subr.mxu0 0.0
        %1527 = vmatpush1.xpose.msra.mxu0 0.0
        %1528 = vmatprep.subr.mxu0 0.0
        %1529 = vmatpush1.xpose.msra.mxu0 0.0
        %1530 = vmatprep.subr.mxu0 0.0
        %1531 = vmatpush1.xpose.msra.mxu0 0.0
        %1532 = vmatprep.subr.mxu0 0.0
        %1533 = vmatpush1.xpose.msra.mxu0 0.0
        %1534 = vmatprep.subr.mxu0 0.0
        %1535 = vmatpush1.xpose.msra.mxu0 0.0
        %1536 = vmatprep.subr.mxu0 0.0
        %1537 = vmatpush1.xpose.msra.mxu0 0.0
        %1538 = vmatprep.subr.mxu0 0.0
        %1539 = vmatpush1.xpose.msra.mxu0 0.0
        %1540 = vmatprep.subr.mxu0 0.0
        %1541 = vmatpush1.xpose.msra.mxu0 0.0
        %1542 = vmatprep.subr.mxu0 0.0
        %1543 = vmatpush1.xpose.msra.mxu0 0.0
        %1544 = vmatprep.subr.mxu0 0.0
        %1545 = vmatpush1.xpose.msra.mxu0 0.0
        %1546 = vmatprep.subr.mxu0 0.0
        %1547 = vmatpush1.xpose.msra.mxu0 %v1520
        %1548 = vmatprep.subr.mxu0 0.0
        %1549 = vmatpush1.xpose.msra.mxu0 %v1517
        %1550 = vmatprep.subr.mxu0 0.0
        %1551 = vmatpush1.xpose.msra.mxu0 %v1514
        %1552 = vmatprep.subr.mxu0 0.0
        %1553 = vmatpush1.xpose.msra.mxu0 %v1511
        %1554 = vmatprep.subr.mxu0 0.0
        %1555 = vmatpush2.xpose.msra.mxu0 0.0
        %1556 = vmatprep.subr.mxu0 0.0
        %1557 = vmatpush2.xpose.msra.mxu0 0.0
        %1558 = vmatprep.subr.mxu0 0.0
        %1559 = vmatpush2.xpose.msra.mxu0 0.0
        %1560 = vmatprep.subr.mxu0 0.0
        %1561 = vmatpush2.xpose.msra.mxu0 0.0
        %1562 = vmatprep.subr.mxu0 0.0
        %1563 = vmatpush2.xpose.msra.mxu0 0.0
        %1564 = vmatprep.subr.mxu0 0.0
        %1565 = vmatpush2.xpose.msra.mxu0 0.0
        %1566 = vmatprep.subr.mxu0 0.0
        %1567 = vmatpush2.xpose.msra.mxu0 0.0
        %1568 = vmatprep.subr.mxu0 0.0
        %1569 = vmatpush2.xpose.msra.mxu0 0.0
        %1570 = vmatprep.subr.mxu0 0.0
        %1571 = vmatpush2.xpose.msra.mxu0 0.0
        %1572 = vmatprep.subr.mxu0 0.0
        %1573 = vmatpush2.xpose.msra.mxu0 0.0
        %1574 = vmatprep.subr.mxu0 0.0
        %1575 = vmatpush2.xpose.msra.mxu0 0.0
        %1576 = vmatprep.subr.mxu0 0.0
        %1577 = vmatpush2.xpose.msra.mxu0 0.0
        %1578 = vmatprep.subr.mxu0 0.0
        %1579 = vmatpush2.xpose.msra.mxu0 0.0
        %1580 = vmatprep.subr.mxu0 0.0
        %1581 = vmatpush2.xpose.msra.mxu0 0.0
        %1582 = vmatprep.subr.mxu0 0.0
        %1583 = vmatpush2.xpose.msra.mxu0 0.0
        %1584 = vmatprep.subr.mxu0 0.0
        %1585 = vmatpush2.xpose.msra.mxu0 0.0
        %1586 = vmatprep.mubr.f32.mxu0 0.0
        %1587 = vmatmul.mubr.f32.gmra.mxu0 %v1463
        %v1588 = vpop.f32.mrf.mxu0
        %v1589 = vadd.f32 0.0, %v1588
        %v1590 = vpop.f32.mrf.mxu0
        %1591 = vmatprep.mubr.f32.mxu0 0.0
        %1592 = vmatmul.mubr.f32.gmra.mxu0 %v1466
        %v1593 = vpop.f32.mrf.mxu0
        %v1594 = vadd.f32 0.0, %v1593
        %v1595 = vpop.f32.mrf.mxu0
        %1596 = vmatprep.mubr.f32.mxu0 0.0
        %1597 = vmatmul.mubr.f32.gmra.mxu0 %v1469
        %v1598 = vpop.f32.mrf.mxu0
        %v1599 = vadd.f32 0.0, %v1598
        %v1600 = vpop.f32.mrf.mxu0
        %1601 = vmatprep.mubr.f32.mxu0 0.0
        %1602 = vmatmul.mubr.f32.gmra.mxu0 %v1472
        %v1603 = vpop.f32.mrf.mxu0
        %v1604 = vadd.f32 0.0, %v1603
        %v1605 = vpop.f32.mrf.mxu0
        %1606 = vmatprep.mubr.f32.mxu0 0.0
        %1607 = vmatmul.mubr.f32.gmra.mxu0 %v1475
        %v1608 = vpop.f32.mrf.mxu0
        %v1609 = vadd.f32 0.0, %v1608
        %v1610 = vpop.f32.mrf.mxu0
        %1611 = vmatprep.mubr.f32.mxu0 0.0
        %1612 = vmatmul.mubr.f32.gmra.mxu0 %v1478
        %v1613 = vpop.f32.mrf.mxu0
        %v1614 = vadd.f32 0.0, %v1613
        %v1615 = vpop.f32.mrf.mxu0
        %1616 = vmatprep.mubr.f32.mxu0 0.0
        %1617 = vmatmul.mubr.f32.gmra.mxu0 %v1481
        %v1618 = vpop.f32.mrf.mxu0
        %v1619 = vadd.f32 0.0, %v1618
        %v1620 = vpop.f32.mrf.mxu0
        %1621 = vmatprep.mubr.f32.mxu0 0.0
        %1622 = vmatmul.mubr.f32.gmra.mxu0 %v1484
        %v1623 = vpop.f32.mrf.mxu0
        %v1624 = vadd.f32 0.0, %v1623
        %v1625 = vpop.f32.mrf.mxu0
        %1626 = vmatprep.mubr.f32.mxu0 0.0
        %1627 = vmatmul.mubr.f32.gmra.mxu0 %v1487
        %v1628 = vpop.f32.mrf.mxu0
        %v1629 = vadd.f32 0.0, %v1628
        %v1630 = vpop.f32.mrf.mxu0
        %1631 = vmatprep.mubr.f32.mxu0 0.0
        %1632 = vmatmul.mubr.f32.gmra.mxu0 %v1490
        %v1633 = vpop.f32.mrf.mxu0
        %v1634 = vadd.f32 0.0, %v1633
        %v1635 = vpop.f32.mrf.mxu0
        %1636 = vmatprep.mubr.f32.mxu0 0.0
        %1637 = vmatmul.mubr.f32.gmra.mxu0 %v1493
        %v1638 = vpop.f32.mrf.mxu0
        %v1639 = vadd.f32 0.0, %v1638
        %v1640 = vpop.f32.mrf.mxu0
        %1641 = vmatprep.mubr.f32.mxu0 0.0
        %1642 = vmatmul.mubr.f32.gmra.mxu0 %v1496
        %v1643 = vpop.f32.mrf.mxu0
        %v1644 = vadd.f32 0.0, %v1643
        %v1645 = vpop.f32.mrf.mxu0
        %1646 = vmatprep.mubr.f32.mxu0 0.0
        %1647 = vmatmul.mubr.f32.gmra.mxu0 %v1499
        %v1648 = vpop.f32.mrf.mxu0
        %v1649 = vadd.f32 0.0, %v1648
        %v1650 = vpop.f32.mrf.mxu0
        %1651 = vmatprep.mubr.f32.mxu0 0.0
        %1652 = vmatmul.mubr.f32.gmra.mxu0 %v1502
        %v1653 = vpop.f32.mrf.mxu0
        %v1654 = vadd.f32 0.0, %v1653
        %v1655 = vpop.f32.mrf.mxu0
        %1656 = vmatprep.mubr.f32.mxu0 0.0
        %1657 = vmatmul.mubr.f32.gmra.mxu0 %v1505
        %v1658 = vpop.f32.mrf.mxu0
        %v1659 = vadd.f32 0.0, %v1658
        %v1660 = vpop.f32.mrf.mxu0
        %1661 = vmatprep.mubr.f32.mxu0 0.0
        %1662 = vmatmul.mubr.f32.gmra.mxu0 %v1508
        %v1663 = vpop.f32.mrf.mxu0
        %v1664 = vadd.f32 0.0, %v1663
        %v1665 = vpop.f32.mrf.mxu0
        %1666 = vdwg.mxu0
        %v1668 = vsel %vm504, %v988, 0
        %v1671 = vsel %vm504, %v989, 0
        %v1674 = vsel %vm504, %v990, 0
        %v1677 = vsel %vm504, %v991, 0
        %v1680 = vsel %vm504, %v1008, 0
        %v1683 = vsel %vm504, %v1009, 0
        %v1686 = vsel %vm504, %v1010, 0
        %v1689 = vsel %vm504, %v1011, 0
        %v1692 = vsel %vm504, %v1028, 0
        %v1695 = vsel %vm504, %v1029, 0
        %v1698 = vsel %vm504, %v1030, 0
        %v1701 = vsel %vm504, %v1031, 0
        %v1704 = vsel %vm504, %v1048, 0
        %v1707 = vsel %vm504, %v1049, 0
        %v1710 = vsel %vm504, %v1050, 0
        %v1713 = vsel %vm504, %v1051, 0
        %v1716 = vsel %vm504, %v931, 0
        %v1719 = vsel %vm504, %v932, 0
        %v1722 = vsel %vm504, %v933, 0
        %v1725 = vsel %vm504, %v934, 0
        %1727 = vmatprep.subr.mxu0 0.0
        %1728 = vmatpush1.xpose.msra.mxu0 0.0
        %1729 = vmatprep.subr.mxu0 0.0
        %1730 = vmatpush1.xpose.msra.mxu0 0.0
        %1731 = vmatprep.subr.mxu0 0.0
        %1732 = vmatpush1.xpose.msra.mxu0 0.0
        %1733 = vmatprep.subr.mxu0 0.0
        %1734 = vmatpush1.xpose.msra.mxu0 0.0
        %1735 = vmatprep.subr.mxu0 0.0
        %1736 = vmatpush1.xpose.msra.mxu0 0.0
        %1737 = vmatprep.subr.mxu0 0.0
        %1738 = vmatpush1.xpose.msra.mxu0 0.0
        %1739 = vmatprep.subr.mxu0 0.0
        %1740 = vmatpush1.xpose.msra.mxu0 0.0
        %1741 = vmatprep.subr.mxu0 0.0
        %1742 = vmatpush1.xpose.msra.mxu0 0.0
        %1743 = vmatprep.subr.mxu0 0.0
        %1744 = vmatpush1.xpose.msra.mxu0 0.0
        %1745 = vmatprep.subr.mxu0 0.0
        %1746 = vmatpush1.xpose.msra.mxu0 0.0
        %1747 = vmatprep.subr.mxu0 0.0
        %1748 = vmatpush1.xpose.msra.mxu0 0.0
        %1749 = vmatprep.subr.mxu0 0.0
        %1750 = vmatpush1.xpose.msra.mxu0 0.0
        %1751 = vmatprep.subr.mxu0 0.0
        %1752 = vmatpush1.xpose.msra.mxu0 %v1725
        %1753 = vmatprep.subr.mxu0 0.0
        %1754 = vmatpush1.xpose.msra.mxu0 %v1722
        %1755 = vmatprep.subr.mxu0 0.0
        %1756 = vmatpush1.xpose.msra.mxu0 %v1719
        %1757 = vmatprep.subr.mxu0 0.0
        %1758 = vmatpush1.xpose.msra.mxu0 %v1716
        %1759 = vmatprep.subr.mxu0 0.0
        %1760 = vmatpush2.xpose.msra.mxu0 0.0
        %1761 = vmatprep.subr.mxu0 0.0
        %1762 = vmatpush2.xpose.msra.mxu0 0.0
        %1763 = vmatprep.subr.mxu0 0.0
        %1764 = vmatpush2.xpose.msra.mxu0 0.0
        %1765 = vmatprep.subr.mxu0 0.0
        %1766 = vmatpush2.xpose.msra.mxu0 0.0
        %1767 = vmatprep.subr.mxu0 0.0
        %1768 = vmatpush2.xpose.msra.mxu0 0.0
        %1769 = vmatprep.subr.mxu0 0.0
        %1770 = vmatpush2.xpose.msra.mxu0 0.0
        %1771 = vmatprep.subr.mxu0 0.0
        %1772 = vmatpush2.xpose.msra.mxu0 0.0
        %1773 = vmatprep.subr.mxu0 0.0
        %1774 = vmatpush2.xpose.msra.mxu0 0.0
        %1775 = vmatprep.subr.mxu0 0.0
        %1776 = vmatpush2.xpose.msra.mxu0 0.0
        %1777 = vmatprep.subr.mxu0 0.0
        %1778 = vmatpush2.xpose.msra.mxu0 0.0
        %1779 = vmatprep.subr.mxu0 0.0
        %1780 = vmatpush2.xpose.msra.mxu0 0.0
        %1781 = vmatprep.subr.mxu0 0.0
        %1782 = vmatpush2.xpose.msra.mxu0 0.0
        %1783 = vmatprep.subr.mxu0 0.0
        %1784 = vmatpush2.xpose.msra.mxu0 0.0
        %1785 = vmatprep.subr.mxu0 0.0
        %1786 = vmatpush2.xpose.msra.mxu0 0.0
        %1787 = vmatprep.subr.mxu0 0.0
        %1788 = vmatpush2.xpose.msra.mxu0 0.0
        %1789 = vmatprep.subr.mxu0 0.0
        %1790 = vmatpush2.xpose.msra.mxu0 0.0
        %1791 = vmatprep.mubr.f32.mxu0 0.0
        %1792 = vmatmul.mubr.f32.gmra.mxu0 %v1668
        %v1793 = vpop.f32.mrf.mxu0
        %v1794 = vadd.f32 0.0, %v1793
        %v1795 = vpop.f32.mrf.mxu0
        %1796 = vmatprep.mubr.f32.mxu0 0.0
        %1797 = vmatmul.mubr.f32.gmra.mxu0 %v1671
        %v1798 = vpop.f32.mrf.mxu0
        %v1799 = vadd.f32 0.0, %v1798
        %v1800 = vpop.f32.mrf.mxu0
        %1801 = vmatprep.mubr.f32.mxu0 0.0
        %1802 = vmatmul.mubr.f32.gmra.mxu0 %v1674
        %v1803 = vpop.f32.mrf.mxu0
        %v1804 = vadd.f32 0.0, %v1803
        %v1805 = vpop.f32.mrf.mxu0
        %1806 = vmatprep.mubr.f32.mxu0 0.0
        %1807 = vmatmul.mubr.f32.gmra.mxu0 %v1677
        %v1808 = vpop.f32.mrf.mxu0
        %v1809 = vadd.f32 0.0, %v1808
        %v1810 = vpop.f32.mrf.mxu0
        %1811 = vmatprep.mubr.f32.mxu0 0.0
        %1812 = vmatmul.mubr.f32.gmra.mxu0 %v1680
        %v1813 = vpop.f32.mrf.mxu0
        %v1814 = vadd.f32 0.0, %v1813
        %v1815 = vpop.f32.mrf.mxu0
        %1816 = vmatprep.mubr.f32.mxu0 0.0
        %1817 = vmatmul.mubr.f32.gmra.mxu0 %v1683
        %v1818 = vpop.f32.mrf.mxu0
        %v1819 = vadd.f32 0.0, %v1818
        %v1820 = vpop.f32.mrf.mxu0
        %1821 = vmatprep.mubr.f32.mxu0 0.0
        %1822 = vmatmul.mubr.f32.gmra.mxu0 %v1686
        %v1823 = vpop.f32.mrf.mxu0
        %v1824 = vadd.f32 0.0, %v1823
        %v1825 = vpop.f32.mrf.mxu0
        %1826 = vmatprep.mubr.f32.mxu0 0.0
        %1827 = vmatmul.mubr.f32.gmra.mxu0 %v1689
        %v1828 = vpop.f32.mrf.mxu0
        %v1829 = vadd.f32 0.0, %v1828
        %v1830 = vpop.f32.mrf.mxu0
        %1831 = vmatprep.mubr.f32.mxu0 0.0
        %1832 = vmatmul.mubr.f32.gmra.mxu0 %v1692
        %v1833 = vpop.f32.mrf.mxu0
        %v1834 = vadd.f32 0.0, %v1833
        %v1835 = vpop.f32.mrf.mxu0
        %1836 = vmatprep.mubr.f32.mxu0 0.0
        %1837 = vmatmul.mubr.f32.gmra.mxu0 %v1695
        %v1838 = vpop.f32.mrf.mxu0
        %v1839 = vadd.f32 0.0, %v1838
        %v1840 = vpop.f32.mrf.mxu0
        %1841 = vmatprep.mubr.f32.mxu0 0.0
        %1842 = vmatmul.mubr.f32.gmra.mxu0 %v1698
        %v1843 = vpop.f32.mrf.mxu0
        %v1844 = vadd.f32 0.0, %v1843
        %v1845 = vpop.f32.mrf.mxu0
        %1846 = vmatprep.mubr.f32.mxu0 0.0
        %1847 = vmatmul.mubr.f32.gmra.mxu0 %v1701
        %v1848 = vpop.f32.mrf.mxu0
        %v1849 = vadd.f32 0.0, %v1848
        %v1850 = vpop.f32.mrf.mxu0
        %1851 = vmatprep.mubr.f32.mxu0 0.0
        %1852 = vmatmul.mubr.f32.gmra.mxu0 %v1704
        %v1853 = vpop.f32.mrf.mxu0
        %v1854 = vadd.f32 0.0, %v1853
        %v1855 = vpop.f32.mrf.mxu0
        %1856 = vmatprep.mubr.f32.mxu0 0.0
        %1857 = vmatmul.mubr.f32.gmra.mxu0 %v1707
        %v1858 = vpop.f32.mrf.mxu0
        %v1859 = vadd.f32 0.0, %v1858
        %v1860 = vpop.f32.mrf.mxu0
        %1861 = vmatprep.mubr.f32.mxu0 0.0
        %1862 = vmatmul.mubr.f32.gmra.mxu0 %v1710
        %v1863 = vpop.f32.mrf.mxu0
        %v1864 = vadd.f32 0.0, %v1863
        %v1865 = vpop.f32.mrf.mxu0
        %1866 = vmatprep.mubr.f32.mxu0 0.0
        %1867 = vmatmul.mubr.f32.gmra.mxu0 %v1713
        %v1868 = vpop.f32.mrf.mxu0
        %v1869 = vadd.f32 0.0, %v1868
        %v1870 = vpop.f32.mrf.mxu0
        %1871 = vdwg.mxu0
        %v1872 = vsel %vm504, %v1179, -inf
        %1873 = vmax.xlane.f32.xlu0 %v1872
        %v1874 = vpop.xlane.xlu0 %1873
        %v1875 = vsel %vm504, %v1184, -inf
        %1876 = vmax.xlane.f32.xlu0 %v1875
        %v1877 = vpop.xlane.xlu0 %1876
        %v1878 = vsel %vm504, %v1189, -inf
        %1879 = vmax.xlane.f32.xlu0 %v1878
        %v1880 = vpop.xlane.xlu0 %1879
        %v1881 = vsel %vm504, %v1194, -inf
        %1882 = vmax.xlane.f32.xlu0 %v1881
        %v1883 = vpop.xlane.xlu0 %1882
        %v1884 = vsel %vm504, %v1199, -inf
        %1885 = vmax.xlane.f32.xlu0 %v1884
        %v1886 = vpop.xlane.xlu0 %1885
        %v1887 = vsel %vm504, %v1204, -inf
        %1888 = vmax.xlane.f32.xlu0 %v1887
        %v1889 = vpop.xlane.xlu0 %1888
        %v1890 = vsel %vm504, %v1209, -inf
        %1891 = vmax.xlane.f32.xlu0 %v1890
        %v1892 = vpop.xlane.xlu0 %1891
        %v1893 = vsel %vm504, %v1214, -inf
        %1894 = vmax.xlane.f32.xlu0 %v1893
        %v1895 = vpop.xlane.xlu0 %1894
        %v1896 = vsel %vm504, %v1219, -inf
        %1897 = vmax.xlane.f32.xlu0 %v1896
        %v1898 = vpop.xlane.xlu0 %1897
        %v1899 = vsel %vm504, %v1224, -inf
        %1900 = vmax.xlane.f32.xlu0 %v1899
        %v1901 = vpop.xlane.xlu0 %1900
        %v1902 = vsel %vm504, %v1229, -inf
        %1903 = vmax.xlane.f32.xlu0 %v1902
        %v1904 = vpop.xlane.xlu0 %1903
        %v1905 = vsel %vm504, %v1234, -inf
        %1906 = vmax.xlane.f32.xlu0 %v1905
        %v1907 = vpop.xlane.xlu0 %1906
        %v1908 = vsel %vm504, %v1239, -inf
        %1909 = vmax.xlane.f32.xlu0 %v1908
        %v1910 = vpop.xlane.xlu0 %1909
        %v1911 = vsel %vm504, %v1244, -inf
        %1912 = vmax.xlane.f32.xlu0 %v1911
        %v1913 = vpop.xlane.xlu0 %1912
        %v1914 = vsel %vm504, %v1249, -inf
        %1915 = vmax.xlane.f32.xlu0 %v1914
        %v1916 = vpop.xlane.xlu0 %1915
        %v1917 = vsel %vm504, %v1254, -inf
        %1918 = vmax.xlane.f32.xlu0 %v1917
        %v1919 = vpop.xlane.xlu0 %1918
        %v1920 = vsel %vm504, %v1384, -inf
        %1921 = vmax.xlane.f32.xlu0 %v1920
        %v1922 = vpop.xlane.xlu0 %1921
        %v1923 = vsel %vm504, %v1389, -inf
        %1924 = vmax.xlane.f32.xlu0 %v1923
        %v1925 = vpop.xlane.xlu0 %1924
        %v1926 = vsel %vm504, %v1394, -inf
        %1927 = vmax.xlane.f32.xlu0 %v1926
        %v1928 = vpop.xlane.xlu0 %1927
        %v1929 = vsel %vm504, %v1399, -inf
        %1930 = vmax.xlane.f32.xlu0 %v1929
        %v1931 = vpop.xlane.xlu0 %1930
        %v1932 = vsel %vm504, %v1404, -inf
        %1933 = vmax.xlane.f32.xlu0 %v1932
        %v1934 = vpop.xlane.xlu0 %1933
        %v1935 = vsel %vm504, %v1409, -inf
        %1936 = vmax.xlane.f32.xlu0 %v1935
        %v1937 = vpop.xlane.xlu0 %1936
        %v1938 = vsel %vm504, %v1414, -inf
        %1939 = vmax.xlane.f32.xlu0 %v1938
        %v1940 = vpop.xlane.xlu0 %1939
        %v1941 = vsel %vm504, %v1419, -inf
        %1942 = vmax.xlane.f32.xlu0 %v1941
        %v1943 = vpop.xlane.xlu0 %1942
        %v1944 = vsel %vm504, %v1424, -inf
        %1945 = vmax.xlane.f32.xlu0 %v1944
        %v1946 = vpop.xlane.xlu0 %1945
        %v1947 = vsel %vm504, %v1429, -inf
        %1948 = vmax.xlane.f32.xlu0 %v1947
        %v1949 = vpop.xlane.xlu0 %1948
        %v1950 = vsel %vm504, %v1434, -inf
        %1951 = vmax.xlane.f32.xlu0 %v1950
        %v1952 = vpop.xlane.xlu0 %1951
        %v1953 = vsel %vm504, %v1439, -inf
        %1954 = vmax.xlane.f32.xlu0 %v1953
        %v1955 = vpop.xlane.xlu0 %1954
        %v1956 = vsel %vm504, %v1444, -inf
        %1957 = vmax.xlane.f32.xlu0 %v1956
        %v1958 = vpop.xlane.xlu0 %1957
        %v1959 = vsel %vm504, %v1449, -inf
        %1960 = vmax.xlane.f32.xlu0 %v1959
        %v1961 = vpop.xlane.xlu0 %1960
        %v1962 = vsel %vm504, %v1454, -inf
        %1963 = vmax.xlane.f32.xlu0 %v1962
        %v1964 = vpop.xlane.xlu0 %1963
        %v1965 = vsel %vm504, %v1459, -inf
        %1966 = vmax.xlane.f32.xlu0 %v1965
        %v1967 = vpop.xlane.xlu0 %1966
        %v1968 = vsel %vm504, %v1589, -inf
        %1969 = vmax.xlane.f32.xlu0 %v1968
        %v1970 = vpop.xlane.xlu0 %1969
        %v1971 = vsel %vm504, %v1594, -inf
        %1972 = vmax.xlane.f32.xlu0 %v1971
        %v1973 = vpop.xlane.xlu0 %1972
        %v1974 = vsel %vm504, %v1599, -inf
        %1975 = vmax.xlane.f32.xlu0 %v1974
        %v1976 = vpop.xlane.xlu0 %1975
        %v1977 = vsel %vm504, %v1604, -inf
        %1978 = vmax.xlane.f32.xlu0 %v1977
        %v1979 = vpop.xlane.xlu0 %1978
        %v1980 = vsel %vm504, %v1609, -inf
        %1981 = vmax.xlane.f32.xlu0 %v1980
        %v1982 = vpop.xlane.xlu0 %1981
        %v1983 = vsel %vm504, %v1614, -inf
        %1984 = vmax.xlane.f32.xlu0 %v1983
        %v1985 = vpop.xlane.xlu0 %1984
        %v1986 = vsel %vm504, %v1619, -inf
        %1987 = vmax.xlane.f32.xlu0 %v1986
        %v1988 = vpop.xlane.xlu0 %1987
        %v1989 = vsel %vm504, %v1624, -inf
        %1990 = vmax.xlane.f32.xlu0 %v1989
        %v1991 = vpop.xlane.xlu0 %1990
        %v1992 = vsel %vm504, %v1629, -inf
        %1993 = vmax.xlane.f32.xlu0 %v1992
        %v1994 = vpop.xlane.xlu0 %1993
        %v1995 = vsel %vm504, %v1634, -inf
        %1996 = vmax.xlane.f32.xlu0 %v1995
        %v1997 = vpop.xlane.xlu0 %1996
        %v1998 = vsel %vm504, %v1639, -inf
        %1999 = vmax.xlane.f32.xlu0 %v1998
        %v2000 = vpop.xlane.xlu0 %1999
        %v2001 = vsel %vm504, %v1644, -inf
        %2002 = vmax.xlane.f32.xlu0 %v2001
        %v2003 = vpop.xlane.xlu0 %2002
        %v2004 = vsel %vm504, %v1649, -inf
        %2005 = vmax.xlane.f32.xlu0 %v2004
        %v2006 = vpop.xlane.xlu0 %2005
        %v2007 = vsel %vm504, %v1654, -inf
        %2008 = vmax.xlane.f32.xlu0 %v2007
        %v2009 = vpop.xlane.xlu0 %2008
        %v2010 = vsel %vm504, %v1659, -inf
        %2011 = vmax.xlane.f32.xlu0 %v2010
        %v2012 = vpop.xlane.xlu0 %2011
        %v2013 = vsel %vm504, %v1664, -inf
        %2014 = vmax.xlane.f32.xlu0 %v2013
        %v2015 = vpop.xlane.xlu0 %2014
        %v2016 = vsel %vm504, %v1794, -inf
        %2017 = vmax.xlane.f32.xlu0 %v2016
        %v2018 = vpop.xlane.xlu0 %2017
        %v2019 = vsel %vm504, %v1799, -inf
        %2020 = vmax.xlane.f32.xlu0 %v2019
        %v2021 = vpop.xlane.xlu0 %2020
        %v2022 = vsel %vm504, %v1804, -inf
        %2023 = vmax.xlane.f32.xlu0 %v2022
        %v2024 = vpop.xlane.xlu0 %2023
        %v2025 = vsel %vm504, %v1809, -inf
        %2026 = vmax.xlane.f32.xlu0 %v2025
        %v2027 = vpop.xlane.xlu0 %2026
        %v2028 = vsel %vm504, %v1814, -inf
        %2029 = vmax.xlane.f32.xlu0 %v2028
        %v2030 = vpop.xlane.xlu0 %2029
        %v2031 = vsel %vm504, %v1819, -inf
        %2032 = vmax.xlane.f32.xlu0 %v2031
        %v2033 = vpop.xlane.xlu0 %2032
        %v2034 = vsel %vm504, %v1824, -inf
        %2035 = vmax.xlane.f32.xlu0 %v2034
        %v2036 = vpop.xlane.xlu0 %2035
        %v2037 = vsel %vm504, %v1829, -inf
        %2038 = vmax.xlane.f32.xlu0 %v2037
        %v2039 = vpop.xlane.xlu0 %2038
        %v2040 = vsel %vm504, %v1834, -inf
        %2041 = vmax.xlane.f32.xlu0 %v2040
        %v2042 = vpop.xlane.xlu0 %2041
        %v2043 = vsel %vm504, %v1839, -inf
        %2044 = vmax.xlane.f32.xlu0 %v2043
        %v2045 = vpop.xlane.xlu0 %2044
        %v2046 = vsel %vm504, %v1844, -inf
        %2047 = vmax.xlane.f32.xlu0 %v2046
        %v2048 = vpop.xlane.xlu0 %2047
        %v2049 = vsel %vm504, %v1849, -inf
        %2050 = vmax.xlane.f32.xlu0 %v2049
        %v2051 = vpop.xlane.xlu0 %2050
        %v2052 = vsel %vm504, %v1854, -inf
        %2053 = vmax.xlane.f32.xlu0 %v2052
        %v2054 = vpop.xlane.xlu0 %2053
        %v2055 = vsel %vm504, %v1859, -inf
        %2056 = vmax.xlane.f32.xlu0 %v2055
        %v2057 = vpop.xlane.xlu0 %2056
        %v2058 = vsel %vm504, %v1864, -inf
        %2059 = vmax.xlane.f32.xlu0 %v2058
        %v2060 = vpop.xlane.xlu0 %2059
        %v2061 = vsel %vm504, %v1869, -inf
        %2062 = vmax.xlane.f32.xlu0 %v2061
        %v2063 = vpop.xlane.xlu0 %2062
        %v2064 = vsub.f32 %v1179, %v1874
        %v2065 = vsub.f32 %v1184, %v1877
        %v2066 = vsub.f32 %v1189, %v1880
        %v2067 = vsub.f32 %v1194, %v1883
        %v2068 = vsub.f32 %v1199, %v1886
        %v2069 = vsub.f32 %v1204, %v1889
        %v2070 = vsub.f32 %v1209, %v1892
        %v2071 = vsub.f32 %v1214, %v1895
        %v2072 = vsub.f32 %v1219, %v1898
        %v2073 = vsub.f32 %v1224, %v1901
        %v2074 = vsub.f32 %v1229, %v1904
        %v2075 = vsub.f32 %v1234, %v1907
        %v2076 = vsub.f32 %v1239, %v1910
        %v2077 = vsub.f32 %v1244, %v1913
        %v2078 = vsub.f32 %v1249, %v1916
        %v2079 = vsub.f32 %v1254, %v1919
        %v2080 = vsub.f32 %v1384, %v1922
        %v2081 = vsub.f32 %v1389, %v1925
        %v2082 = vsub.f32 %v1394, %v1928
        %v2083 = vsub.f32 %v1399, %v1931
        %v2084 = vsub.f32 %v1404, %v1934
        %v2085 = vsub.f32 %v1409, %v1937
        %v2086 = vsub.f32 %v1414, %v1940
        %v2087 = vsub.f32 %v1419, %v1943
        %v2088 = vsub.f32 %v1424, %v1946
        %v2089 = vsub.f32 %v1429, %v1949
        %v2090 = vsub.f32 %v1434, %v1952
        %v2091 = vsub.f32 %v1439, %v1955
        %v2092 = vsub.f32 %v1444, %v1958
        %v2093 = vsub.f32 %v1449, %v1961
        %v2094 = vsub.f32 %v1454, %v1964
        %v2095 = vsub.f32 %v1459, %v1967
        %v2096 = vsub.f32 %v1589, %v1970
        %v2097 = vsub.f32 %v1594, %v1973
        %v2098 = vsub.f32 %v1599, %v1976
        %v2099 = vsub.f32 %v1604, %v1979
        %v2100 = vsub.f32 %v1609, %v1982
        %v2101 = vsub.f32 %v1614, %v1985
        %v2102 = vsub.f32 %v1619, %v1988
        %v2103 = vsub.f32 %v1624, %v1991
        %v2104 = vsub.f32 %v1629, %v1994
        %v2105 = vsub.f32 %v1634, %v1997
        %v2106 = vsub.f32 %v1639, %v2000
        %v2107 = vsub.f32 %v1644, %v2003
        %v2108 = vsub.f32 %v1649, %v2006
        %v2109 = vsub.f32 %v1654, %v2009
        %v2110 = vsub.f32 %v1659, %v2012
        %v2111 = vsub.f32 %v1664, %v2015
        %v2112 = vsub.f32 %v1794, %v2018
        %v2113 = vsub.f32 %v1799, %v2021
        %v2114 = vsub.f32 %v1804, %v2024
        %v2115 = vsub.f32 %v1809, %v2027
        %v2116 = vsub.f32 %v1814, %v2030
        %v2117 = vsub.f32 %v1819, %v2033
        %v2118 = vsub.f32 %v1824, %v2036
        %v2119 = vsub.f32 %v1829, %v2039
        %v2120 = vsub.f32 %v1834, %v2042
        %v2121 = vsub.f32 %v1839, %v2045
        %v2122 = vsub.f32 %v1844, %v2048
        %v2123 = vsub.f32 %v1849, %v2051
        %v2124 = vsub.f32 %v1854, %v2054
        %v2125 = vsub.f32 %v1859, %v2057
        %v2126 = vsub.f32 %v1864, %v2060
        %v2127 = vsub.f32 %v1869, %v2063
        %v2128 = vmul.f32 %v2064, 1.442695
        %v2129 = vpow.pop %v2128
        %v2130 = vmul.f32 %v2065, 1.442695
        %v2131 = vpow.pop %v2130
        %v2132 = vmul.f32 %v2066, 1.442695
        %v2133 = vpow.pop %v2132
        %v2134 = vmul.f32 %v2067, 1.442695
        %v2135 = vpow.pop %v2134
        %v2136 = vmul.f32 %v2068, 1.442695
        %v2137 = vpow.pop %v2136
        %v2138 = vmul.f32 %v2069, 1.442695
        %v2139 = vpow.pop %v2138
        %v2140 = vmul.f32 %v2070, 1.442695
        %v2141 = vpow.pop %v2140
        %v2142 = vmul.f32 %v2071, 1.442695
        %v2143 = vpow.pop %v2142
        %v2144 = vmul.f32 %v2072, 1.442695
        %v2145 = vpow.pop %v2144
        %v2146 = vmul.f32 %v2073, 1.442695
        %v2147 = vpow.pop %v2146
        %v2148 = vmul.f32 %v2074, 1.442695
        %v2149 = vpow.pop %v2148
        %v2150 = vmul.f32 %v2075, 1.442695
        %v2151 = vpow.pop %v2150
        %v2152 = vmul.f32 %v2076, 1.442695
        %v2153 = vpow.pop %v2152
        %v2154 = vmul.f32 %v2077, 1.442695
        %v2155 = vpow.pop %v2154
        %v2156 = vmul.f32 %v2078, 1.442695
        %v2157 = vpow.pop %v2156
        %v2158 = vmul.f32 %v2079, 1.442695
        %v2159 = vpow.pop %v2158
        %v2160 = vmul.f32 %v2080, 1.442695
        %v2161 = vpow.pop %v2160
        %v2162 = vmul.f32 %v2081, 1.442695
        %v2163 = vpow.pop %v2162
        %v2164 = vmul.f32 %v2082, 1.442695
        %v2165 = vpow.pop %v2164
        %v2166 = vmul.f32 %v2083, 1.442695
        %v2167 = vpow.pop %v2166
        %v2168 = vmul.f32 %v2084, 1.442695
        %v2169 = vpow.pop %v2168
        %v2170 = vmul.f32 %v2085, 1.442695
        %v2171 = vpow.pop %v2170
        %v2172 = vmul.f32 %v2086, 1.442695
        %v2173 = vpow.pop %v2172
        %v2174 = vmul.f32 %v2087, 1.442695
        %v2175 = vpow.pop %v2174
        %v2176 = vmul.f32 %v2088, 1.442695
        %v2177 = vpow.pop %v2176
        %v2178 = vmul.f32 %v2089, 1.442695
        %v2179 = vpow.pop %v2178
        %v2180 = vmul.f32 %v2090, 1.442695
        %v2181 = vpow.pop %v2180
        %v2182 = vmul.f32 %v2091, 1.442695
        %v2183 = vpow.pop %v2182
        %v2184 = vmul.f32 %v2092, 1.442695
        %v2185 = vpow.pop %v2184
        %v2186 = vmul.f32 %v2093, 1.442695
        %v2187 = vpow.pop %v2186
        %v2188 = vmul.f32 %v2094, 1.442695
        %v2189 = vpow.pop %v2188
        %v2190 = vmul.f32 %v2095, 1.442695
        %v2191 = vpow.pop %v2190
        %v2192 = vmul.f32 %v2096, 1.442695
        %v2193 = vpow.pop %v2192
        %v2194 = vmul.f32 %v2097, 1.442695
        %v2195 = vpow.pop %v2194
        %v2196 = vmul.f32 %v2098, 1.442695
        %v2197 = vpow.pop %v2196
        %v2198 = vmul.f32 %v2099, 1.442695
        %v2199 = vpow.pop %v2198
        %v2200 = vmul.f32 %v2100, 1.442695
        %v2201 = vpow.pop %v2200
        %v2202 = vmul.f32 %v2101, 1.442695
        %v2203 = vpow.pop %v2202
        %v2204 = vmul.f32 %v2102, 1.442695
        %v2205 = vpow.pop %v2204
        %v2206 = vmul.f32 %v2103, 1.442695
        %v2207 = vpow.pop %v2206
        %v2208 = vmul.f32 %v2104, 1.442695
        %v2209 = vpow.pop %v2208
        %v2210 = vmul.f32 %v2105, 1.442695
        %v2211 = vpow.pop %v2210
        %v2212 = vmul.f32 %v2106, 1.442695
        %v2213 = vpow.pop %v2212
        %v2214 = vmul.f32 %v2107, 1.442695
        %v2215 = vpow.pop %v2214
        %v2216 = vmul.f32 %v2108, 1.442695
        %v2217 = vpow.pop %v2216
        %v2218 = vmul.f32 %v2109, 1.442695
        %v2219 = vpow.pop %v2218
        %v2220 = vmul.f32 %v2110, 1.442695
        %v2221 = vpow.pop %v2220
        %v2222 = vmul.f32 %v2111, 1.442695
        %v2223 = vpow.pop %v2222
        %v2224 = vmul.f32 %v2112, 1.442695
        %v2225 = vpow.pop %v2224
        %v2226 = vmul.f32 %v2113, 1.442695
        %v2227 = vpow.pop %v2226
        %v2228 = vmul.f32 %v2114, 1.442695
        %v2229 = vpow.pop %v2228
        %v2230 = vmul.f32 %v2115, 1.442695
        %v2231 = vpow.pop %v2230
        %v2232 = vmul.f32 %v2116, 1.442695
        %v2233 = vpow.pop %v2232
        %v2234 = vmul.f32 %v2117, 1.442695
        %v2235 = vpow.pop %v2234
        %v2236 = vmul.f32 %v2118, 1.442695
        %v2237 = vpow.pop %v2236
        %v2238 = vmul.f32 %v2119, 1.442695
        %v2239 = vpow.pop %v2238
        %v2240 = vmul.f32 %v2120, 1.442695
        %v2241 = vpow.pop %v2240
        %v2242 = vmul.f32 %v2121, 1.442695
        %v2243 = vpow.pop %v2242
        %v2244 = vmul.f32 %v2122, 1.442695
        %v2245 = vpow.pop %v2244
        %v2246 = vmul.f32 %v2123, 1.442695
        %v2247 = vpow.pop %v2246
        %v2248 = vmul.f32 %v2124, 1.442695
        %v2249 = vpow.pop %v2248
        %v2250 = vmul.f32 %v2125, 1.442695
        %v2251 = vpow.pop %v2250
        %v2252 = vmul.f32 %v2126, 1.442695
        %v2253 = vpow.pop %v2252
        %v2254 = vmul.f32 %v2127, 1.442695
        %v2255 = vpow.pop %v2254
        %v2256 = vsel %vm504, %v2129, 0.0
        %2257 = vadd.xlane.f32.xlu0 %v2256
        %v2258 = vpop.xlane.xlu0 %2257
        %v2259 = vsel %vm504, %v2131, 0.0
        %2260 = vadd.xlane.f32.xlu0 %v2259
        %v2261 = vpop.xlane.xlu0 %2260
        %v2262 = vsel %vm504, %v2133, 0.0
        %2263 = vadd.xlane.f32.xlu0 %v2262
        %v2264 = vpop.xlane.xlu0 %2263
        %v2265 = vsel %vm504, %v2135, 0.0
        %2266 = vadd.xlane.f32.xlu0 %v2265
        %v2267 = vpop.xlane.xlu0 %2266
        %v2268 = vsel %vm504, %v2137, 0.0
        %2269 = vadd.xlane.f32.xlu0 %v2268
        %v2270 = vpop.xlane.xlu0 %2269
        %v2271 = vsel %vm504, %v2139, 0.0
        %2272 = vadd.xlane.f32.xlu0 %v2271
        %v2273 = vpop.xlane.xlu0 %2272
        %v2274 = vsel %vm504, %v2141, 0.0
        %2275 = vadd.xlane.f32.xlu0 %v2274
        %v2276 = vpop.xlane.xlu0 %2275
        %v2277 = vsel %vm504, %v2143, 0.0
        %2278 = vadd.xlane.f32.xlu0 %v2277
        %v2279 = vpop.xlane.xlu0 %2278
        %v2280 = vsel %vm504, %v2145, 0.0
        %2281 = vadd.xlane.f32.xlu0 %v2280
        %v2282 = vpop.xlane.xlu0 %2281
        %v2283 = vsel %vm504, %v2147, 0.0
        %2284 = vadd.xlane.f32.xlu0 %v2283
        %v2285 = vpop.xlane.xlu0 %2284
        %v2286 = vsel %vm504, %v2149, 0.0
        %2287 = vadd.xlane.f32.xlu0 %v2286
        %v2288 = vpop.xlane.xlu0 %2287
        %v2289 = vsel %vm504, %v2151, 0.0
        %2290 = vadd.xlane.f32.xlu0 %v2289
        %v2291 = vpop.xlane.xlu0 %2290
        %v2292 = vsel %vm504, %v2153, 0.0
        %2293 = vadd.xlane.f32.xlu0 %v2292
        %v2294 = vpop.xlane.xlu0 %2293
        %v2295 = vsel %vm504, %v2155, 0.0
        %2296 = vadd.xlane.f32.xlu0 %v2295
        %v2297 = vpop.xlane.xlu0 %2296
        %v2298 = vsel %vm504, %v2157, 0.0
        %2299 = vadd.xlane.f32.xlu0 %v2298
        %v2300 = vpop.xlane.xlu0 %2299
        %v2301 = vsel %vm504, %v2159, 0.0
        %2302 = vadd.xlane.f32.xlu0 %v2301
        %v2303 = vpop.xlane.xlu0 %2302
        %v2304 = vsel %vm504, %v2161, 0.0
        %2305 = vadd.xlane.f32.xlu0 %v2304
        %v2306 = vpop.xlane.xlu0 %2305
        %v2307 = vsel %vm504, %v2163, 0.0
        %2308 = vadd.xlane.f32.xlu0 %v2307
        %v2309 = vpop.xlane.xlu0 %2308
        %v2310 = vsel %vm504, %v2165, 0.0
        %2311 = vadd.xlane.f32.xlu0 %v2310
        %v2312 = vpop.xlane.xlu0 %2311
        %v2313 = vsel %vm504, %v2167, 0.0
        %2314 = vadd.xlane.f32.xlu0 %v2313
        %v2315 = vpop.xlane.xlu0 %2314
        %v2316 = vsel %vm504, %v2169, 0.0
        %2317 = vadd.xlane.f32.xlu0 %v2316
        %v2318 = vpop.xlane.xlu0 %2317
        %v2319 = vsel %vm504, %v2171, 0.0
        %2320 = vadd.xlane.f32.xlu0 %v2319
        %v2321 = vpop.xlane.xlu0 %2320
        %v2322 = vsel %vm504, %v2173, 0.0
        %2323 = vadd.xlane.f32.xlu0 %v2322
        %v2324 = vpop.xlane.xlu0 %2323
        %v2325 = vsel %vm504, %v2175, 0.0
        %2326 = vadd.xlane.f32.xlu0 %v2325
        %v2327 = vpop.xlane.xlu0 %2326
        %v2328 = vsel %vm504, %v2177, 0.0
        %2329 = vadd.xlane.f32.xlu0 %v2328
        %v2330 = vpop.xlane.xlu0 %2329
        %v2331 = vsel %vm504, %v2179, 0.0
        %2332 = vadd.xlane.f32.xlu0 %v2331
        %v2333 = vpop.xlane.xlu0 %2332
        %v2334 = vsel %vm504, %v2181, 0.0
        %2335 = vadd.xlane.f32.xlu0 %v2334
        %v2336 = vpop.xlane.xlu0 %2335
        %v2337 = vsel %vm504, %v2183, 0.0
        %2338 = vadd.xlane.f32.xlu0 %v2337
        %v2339 = vpop.xlane.xlu0 %2338
        %v2340 = vsel %vm504, %v2185, 0.0
        %2341 = vadd.xlane.f32.xlu0 %v2340
        %v2342 = vpop.xlane.xlu0 %2341
        %v2343 = vsel %vm504, %v2187, 0.0
        %2344 = vadd.xlane.f32.xlu0 %v2343
        %v2345 = vpop.xlane.xlu0 %2344
        %v2346 = vsel %vm504, %v2189, 0.0
        %2347 = vadd.xlane.f32.xlu0 %v2346
        %v2348 = vpop.xlane.xlu0 %2347
        %v2349 = vsel %vm504, %v2191, 0.0
        %2350 = vadd.xlane.f32.xlu0 %v2349
        %v2351 = vpop.xlane.xlu0 %2350
        %v2352 = vsel %vm504, %v2193, 0.0
        %2353 = vadd.xlane.f32.xlu0 %v2352
        %v2354 = vpop.xlane.xlu0 %2353
        %v2355 = vsel %vm504, %v2195, 0.0
        %2356 = vadd.xlane.f32.xlu0 %v2355
        %v2357 = vpop.xlane.xlu0 %2356
        %v2358 = vsel %vm504, %v2197, 0.0
        %2359 = vadd.xlane.f32.xlu0 %v2358
        %v2360 = vpop.xlane.xlu0 %2359
        %v2361 = vsel %vm504, %v2199, 0.0
        %2362 = vadd.xlane.f32.xlu0 %v2361
        %v2363 = vpop.xlane.xlu0 %2362
        %v2364 = vsel %vm504, %v2201, 0.0
        %2365 = vadd.xlane.f32.xlu0 %v2364
        %v2366 = vpop.xlane.xlu0 %2365
        %v2367 = vsel %vm504, %v2203, 0.0
        %2368 = vadd.xlane.f32.xlu0 %v2367
        %v2369 = vpop.xlane.xlu0 %2368
        %v2370 = vsel %vm504, %v2205, 0.0
        %2371 = vadd.xlane.f32.xlu0 %v2370
        %v2372 = vpop.xlane.xlu0 %2371
        %v2373 = vsel %vm504, %v2207, 0.0
        %2374 = vadd.xlane.f32.xlu0 %v2373
        %v2375 = vpop.xlane.xlu0 %2374
        %v2376 = vsel %vm504, %v2209, 0.0
        %2377 = vadd.xlane.f32.xlu0 %v2376
        %v2378 = vpop.xlane.xlu0 %2377
        %v2379 = vsel %vm504, %v2211, 0.0
        %2380 = vadd.xlane.f32.xlu0 %v2379
        %v2381 = vpop.xlane.xlu0 %2380
        %v2382 = vsel %vm504, %v2213, 0.0
        %2383 = vadd.xlane.f32.xlu0 %v2382
        %v2384 = vpop.xlane.xlu0 %2383
        %v2385 = vsel %vm504, %v2215, 0.0
        %2386 = vadd.xlane.f32.xlu0 %v2385
        %v2387 = vpop.xlane.xlu0 %2386
        %v2388 = vsel %vm504, %v2217, 0.0
        %2389 = vadd.xlane.f32.xlu0 %v2388
        %v2390 = vpop.xlane.xlu0 %2389
        %v2391 = vsel %vm504, %v2219, 0.0
        %2392 = vadd.xlane.f32.xlu0 %v2391
        %v2393 = vpop.xlane.xlu0 %2392
        %v2394 = vsel %vm504, %v2221, 0.0
        %2395 = vadd.xlane.f32.xlu0 %v2394
        %v2396 = vpop.xlane.xlu0 %2395
        %v2397 = vsel %vm504, %v2223, 0.0
        %2398 = vadd.xlane.f32.xlu0 %v2397
        %v2399 = vpop.xlane.xlu0 %2398
        %v2400 = vsel %vm504, %v2225, 0.0
        %2401 = vadd.xlane.f32.xlu0 %v2400
        %v2402 = vpop.xlane.xlu0 %2401
        %v2403 = vsel %vm504, %v2227, 0.0
        %2404 = vadd.xlane.f32.xlu0 %v2403
        %v2405 = vpop.xlane.xlu0 %2404
        %v2406 = vsel %vm504, %v2229, 0.0
        %2407 = vadd.xlane.f32.xlu0 %v2406
        %v2408 = vpop.xlane.xlu0 %2407
        %v2409 = vsel %vm504, %v2231, 0.0
        %2410 = vadd.xlane.f32.xlu0 %v2409
        %v2411 = vpop.xlane.xlu0 %2410
        %v2412 = vsel %vm504, %v2233, 0.0
        %2413 = vadd.xlane.f32.xlu0 %v2412
        %v2414 = vpop.xlane.xlu0 %2413
        %v2415 = vsel %vm504, %v2235, 0.0
        %2416 = vadd.xlane.f32.xlu0 %v2415
        %v2417 = vpop.xlane.xlu0 %2416
        %v2418 = vsel %vm504, %v2237, 0.0
        %2419 = vadd.xlane.f32.xlu0 %v2418
        %v2420 = vpop.xlane.xlu0 %2419
        %v2421 = vsel %vm504, %v2239, 0.0
        %2422 = vadd.xlane.f32.xlu0 %v2421
        %v2423 = vpop.xlane.xlu0 %2422
        %v2424 = vsel %vm504, %v2241, 0.0
        %2425 = vadd.xlane.f32.xlu0 %v2424
        %v2426 = vpop.xlane.xlu0 %2425
        %v2427 = vsel %vm504, %v2243, 0.0
        %2428 = vadd.xlane.f32.xlu0 %v2427
        %v2429 = vpop.xlane.xlu0 %2428
        %v2430 = vsel %vm504, %v2245, 0.0
        %2431 = vadd.xlane.f32.xlu0 %v2430
        %v2432 = vpop.xlane.xlu0 %2431
        %v2433 = vsel %vm504, %v2247, 0.0
        %2434 = vadd.xlane.f32.xlu0 %v2433
        %v2435 = vpop.xlane.xlu0 %2434
        %v2436 = vsel %vm504, %v2249, 0.0
        %2437 = vadd.xlane.f32.xlu0 %v2436
        %v2438 = vpop.xlane.xlu0 %2437
        %v2439 = vsel %vm504, %v2251, 0.0
        %2440 = vadd.xlane.f32.xlu0 %v2439
        %v2441 = vpop.xlane.xlu0 %2440
        %v2442 = vsel %vm504, %v2253, 0.0
        %2443 = vadd.xlane.f32.xlu0 %v2442
        %v2444 = vpop.xlane.xlu0 %2443
        %v2445 = vsel %vm504, %v2255, 0.0
        %2446 = vadd.xlane.f32.xlu0 %v2445
        %v2447 = vpop.xlane.xlu0 %2446
        %v2448 = vrcp.pop %v2258
        %v2449 = vrcp.pop %v2261
        %v2450 = vrcp.pop %v2264
        %v2451 = vrcp.pop %v2267
        %v2452 = vrcp.pop %v2270
        %v2453 = vrcp.pop %v2273
        %v2454 = vrcp.pop %v2276
        %v2455 = vrcp.pop %v2279
        %v2456 = vrcp.pop %v2282
        %v2457 = vrcp.pop %v2285
        %v2458 = vrcp.pop %v2288
        %v2459 = vrcp.pop %v2291
        %v2460 = vrcp.pop %v2294
        %v2461 = vrcp.pop %v2297
        %v2462 = vrcp.pop %v2300
        %v2463 = vrcp.pop %v2303
        %v2464 = vrcp.pop %v2306
        %v2465 = vrcp.pop %v2309
        %v2466 = vrcp.pop %v2312
        %v2467 = vrcp.pop %v2315
        %v2468 = vrcp.pop %v2318
        %v2469 = vrcp.pop %v2321
        %v2470 = vrcp.pop %v2324
        %v2471 = vrcp.pop %v2327
        %v2472 = vrcp.pop %v2330
        %v2473 = vrcp.pop %v2333
        %v2474 = vrcp.pop %v2336
        %v2475 = vrcp.pop %v2339
        %v2476 = vrcp.pop %v2342
        %v2477 = vrcp.pop %v2345
        %v2478 = vrcp.pop %v2348
        %v2479 = vrcp.pop %v2351
        %v2480 = vrcp.pop %v2354
        %v2481 = vrcp.pop %v2357
        %v2482 = vrcp.pop %v2360
        %v2483 = vrcp.pop %v2363
        %v2484 = vrcp.pop %v2366
        %v2485 = vrcp.pop %v2369
        %v2486 = vrcp.pop %v2372
        %v2487 = vrcp.pop %v2375
        %v2488 = vrcp.pop %v2378
        %v2489 = vrcp.pop %v2381
        %v2490 = vrcp.pop %v2384
        %v2491 = vrcp.pop %v2387
        %v2492 = vrcp.pop %v2390
        %v2493 = vrcp.pop %v2393
        %v2494 = vrcp.pop %v2396
        %v2495 = vrcp.pop %v2399
        %v2496 = vrcp.pop %v2402
        %v2497 = vrcp.pop %v2405
        %v2498 = vrcp.pop %v2408
        %v2499 = vrcp.pop %v2411
        %v2500 = vrcp.pop %v2414
        %v2501 = vrcp.pop %v2417
        %v2502 = vrcp.pop %v2420
        %v2503 = vrcp.pop %v2423
        %v2504 = vrcp.pop %v2426
        %v2505 = vrcp.pop %v2429
        %v2506 = vrcp.pop %v2432
        %v2507 = vrcp.pop %v2435
        %v2508 = vrcp.pop %v2438
        %v2509 = vrcp.pop %v2441
        %v2510 = vrcp.pop %v2444
        %v2511 = vrcp.pop %v2447
        %v2512 = vmul.f32 %v2129, %v2448
        %v2513 = vmul.f32 %v2131, %v2449
        %v2514 = vmul.f32 %v2133, %v2450
        %v2515 = vmul.f32 %v2135, %v2451
        %v2516 = vmul.f32 %v2137, %v2452
        %v2517 = vmul.f32 %v2139, %v2453
        %v2518 = vmul.f32 %v2141, %v2454
        %v2519 = vmul.f32 %v2143, %v2455
        %v2520 = vmul.f32 %v2145, %v2456
        %v2521 = vmul.f32 %v2147, %v2457
        %v2522 = vmul.f32 %v2149, %v2458
        %v2523 = vmul.f32 %v2151, %v2459
        %v2524 = vmul.f32 %v2153, %v2460
        %v2525 = vmul.f32 %v2155, %v2461
        %v2526 = vmul.f32 %v2157, %v2462
        %v2527 = vmul.f32 %v2159, %v2463
        %v2528 = vmul.f32 %v2161, %v2464
        %v2529 = vmul.f32 %v2163, %v2465
        %v2530 = vmul.f32 %v2165, %v2466
        %v2531 = vmul.f32 %v2167, %v2467
        %v2532 = vmul.f32 %v2169, %v2468
        %v2533 = vmul.f32 %v2171, %v2469
        %v2534 = vmul.f32 %v2173, %v2470
        %v2535 = vmul.f32 %v2175, %v2471
        %v2536 = vmul.f32 %v2177, %v2472
        %v2537 = vmul.f32 %v2179, %v2473
        %v2538 = vmul.f32 %v2181, %v2474
        %v2539 = vmul.f32 %v2183, %v2475
        %v2540 = vmul.f32 %v2185, %v2476
        %v2541 = vmul.f32 %v2187, %v2477
        %v2542 = vmul.f32 %v2189, %v2478
        %v2543 = vmul.f32 %v2191, %v2479
        %v2544 = vmul.f32 %v2193, %v2480
        %v2545 = vmul.f32 %v2195, %v2481
        %v2546 = vmul.f32 %v2197, %v2482
        %v2547 = vmul.f32 %v2199, %v2483
        %v2548 = vmul.f32 %v2201, %v2484
        %v2549 = vmul.f32 %v2203, %v2485
        %v2550 = vmul.f32 %v2205, %v2486
        %v2551 = vmul.f32 %v2207, %v2487
        %v2552 = vmul.f32 %v2209, %v2488
        %v2553 = vmul.f32 %v2211, %v2489
        %v2554 = vmul.f32 %v2213, %v2490
        %v2555 = vmul.f32 %v2215, %v2491
        %v2556 = vmul.f32 %v2217, %v2492
        %v2557 = vmul.f32 %v2219, %v2493
        %v2558 = vmul.f32 %v2221, %v2494
        %v2559 = vmul.f32 %v2223, %v2495
        %v2560 = vmul.f32 %v2225, %v2496
        %v2561 = vmul.f32 %v2227, %v2497
        %v2562 = vmul.f32 %v2229, %v2498
        %v2563 = vmul.f32 %v2231, %v2499
        %v2564 = vmul.f32 %v2233, %v2500
        %v2565 = vmul.f32 %v2235, %v2501
        %v2566 = vmul.f32 %v2237, %v2502
        %v2567 = vmul.f32 %v2239, %v2503
        %v2568 = vmul.f32 %v2241, %v2504
        %v2569 = vmul.f32 %v2243, %v2505
        %v2570 = vmul.f32 %v2245, %v2506
        %v2571 = vmul.f32 %v2247, %v2507
        %v2572 = vmul.f32 %v2249, %v2508
        %v2573 = vmul.f32 %v2251, %v2509
        %v2574 = vmul.f32 %v2253, %v2510
        %v2575 = vmul.f32 %v2255, %v2511
        %2580 = vrot.lane.b32.xlu0 %v944, 96
        %v2581 = vpop.permute.xlu0 %2580
        %2582 = vrot.lane.b32.xlu0 %v945, 96
        %v2583 = vpop.permute.xlu0 %2582
        %2584 = vrot.lane.b32.xlu0 %v946, 96
        %v2585 = vpop.permute.xlu0 %2584
        %2586 = vrot.lane.b32.xlu0 %v947, 96
        %v2587 = vpop.permute.xlu0 %2586
        %v2593 = vsel %vm504, %v2512, 0
        %v2596 = vsel %vm504, %v2513, 0
        %v2599 = vsel %vm504, %v2514, 0
        %v2602 = vsel %vm504, %v2515, 0
        %v2605 = vsel %vm504, %v2516, 0
        %v2608 = vsel %vm504, %v2517, 0
        %v2611 = vsel %vm504, %v2518, 0
        %v2614 = vsel %vm504, %v2519, 0
        %v2617 = vsel %vm504, %v2520, 0
        %v2620 = vsel %vm504, %v2521, 0
        %v2623 = vsel %vm504, %v2522, 0
        %v2626 = vsel %vm504, %v2523, 0
        %v2629 = vsel %vm504, %v2524, 0
        %v2632 = vsel %vm504, %v2525, 0
        %v2635 = vsel %vm504, %v2526, 0
        %v2638 = vsel %vm504, %v2527, 0
        %2640 = vmatprep.subr.mxu0 0.0
        %2641 = vmatpush1.msra.mxu0 0.0
        %2642 = vmatprep.subr.mxu0 0.0
        %2643 = vmatpush1.msra.mxu0 0.0
        %2644 = vmatprep.subr.mxu0 0.0
        %2645 = vmatpush1.msra.mxu0 0.0
        %2646 = vmatprep.subr.mxu0 0.0
        %2647 = vmatpush1.msra.mxu0 0.0
        %2648 = vmatprep.subr.mxu0 0.0
        %2649 = vmatpush1.msra.mxu0 0.0
        %2650 = vmatprep.subr.mxu0 0.0
        %2651 = vmatpush1.msra.mxu0 0.0
        %2652 = vmatprep.subr.mxu0 0.0
        %2653 = vmatpush1.msra.mxu0 0.0
        %2654 = vmatprep.subr.mxu0 0.0
        %2655 = vmatpush1.msra.mxu0 0.0
        %2656 = vmatprep.subr.mxu0 0.0
        %2657 = vmatpush1.msra.mxu0 0.0
        %2658 = vmatprep.subr.mxu0 0.0
        %2659 = vmatpush1.msra.mxu0 0.0
        %2660 = vmatprep.subr.mxu0 0.0
        %2661 = vmatpush1.msra.mxu0 0.0
        %2662 = vmatprep.subr.mxu0 0.0
        %2663 = vmatpush1.msra.mxu0 0.0
        %2664 = vmatprep.subr.mxu0 0.0
        %2665 = vmatpush1.msra.mxu0 %v2587
        %2666 = vmatprep.subr.mxu0 0.0
        %2667 = vmatpush1.msra.mxu0 %v2585
        %2668 = vmatprep.subr.mxu0 0.0
        %2669 = vmatpush1.msra.mxu0 %v2583
        %2670 = vmatprep.subr.mxu0 0.0
        %2671 = vmatpush1.msra.mxu0 %v2581
        %2672 = vmatprep.subr.mxu0 0.0
        %2673 = vmatpush2.msra.mxu0 0.0
        %2674 = vmatprep.subr.mxu0 0.0
        %2675 = vmatpush2.msra.mxu0 0.0
        %2676 = vmatprep.subr.mxu0 0.0
        %2677 = vmatpush2.msra.mxu0 0.0
        %2678 = vmatprep.subr.mxu0 0.0
        %2679 = vmatpush2.msra.mxu0 0.0
        %2680 = vmatprep.subr.mxu0 0.0
        %2681 = vmatpush2.msra.mxu0 0.0
        %2682 = vmatprep.subr.mxu0 0.0
        %2683 = vmatpush2.msra.mxu0 0.0
        %2684 = vmatprep.subr.mxu0 0.0
        %2685 = vmatpush2.msra.mxu0 0.0
        %2686 = vmatprep.subr.mxu0 0.0
        %2687 = vmatpush2.msra.mxu0 0.0
        %2688 = vmatprep.subr.mxu0 0.0
        %2689 = vmatpush2.msra.mxu0 0.0
        %2690 = vmatprep.subr.mxu0 0.0
        %2691 = vmatpush2.msra.mxu0 0.0
        %2692 = vmatprep.subr.mxu0 0.0
        %2693 = vmatpush2.msra.mxu0 0.0
        %2694 = vmatprep.subr.mxu0 0.0
        %2695 = vmatpush2.msra.mxu0 0.0
        %2696 = vmatprep.subr.mxu0 0.0
        %2697 = vmatpush2.msra.mxu0 0.0
        %2698 = vmatprep.subr.mxu0 0.0
        %2699 = vmatpush2.msra.mxu0 0.0
        %2700 = vmatprep.subr.mxu0 0.0
        %2701 = vmatpush2.msra.mxu0 0.0
        %2702 = vmatprep.subr.mxu0 0.0
        %2703 = vmatpush2.msra.mxu0 0.0
        %2704 = vmatprep.mubr.f32.mxu0 0.0
        %2705 = vmatmul.mubr.f32.gmra.mxu0 %v2593
        %v2706 = vpop.f32.mrf.mxu0
        %v2707 = vadd.f32 0.0, %v2706
        %v2708 = vpop.f32.mrf.mxu0
        %2709 = vmatprep.mubr.f32.mxu0 0.0
        %2710 = vmatmul.mubr.f32.gmra.mxu0 %v2596
        %v2711 = vpop.f32.mrf.mxu0
        %v2712 = vadd.f32 0.0, %v2711
        %v2713 = vpop.f32.mrf.mxu0
        %2714 = vmatprep.mubr.f32.mxu0 0.0
        %2715 = vmatmul.mubr.f32.gmra.mxu0 %v2599
        %v2716 = vpop.f32.mrf.mxu0
        %v2717 = vadd.f32 0.0, %v2716
        %v2718 = vpop.f32.mrf.mxu0
        %2719 = vmatprep.mubr.f32.mxu0 0.0
        %2720 = vmatmul.mubr.f32.gmra.mxu0 %v2602
        %v2721 = vpop.f32.mrf.mxu0
        %v2722 = vadd.f32 0.0, %v2721
        %v2723 = vpop.f32.mrf.mxu0
        %2724 = vmatprep.mubr.f32.mxu0 0.0
        %2725 = vmatmul.mubr.f32.gmra.mxu0 %v2605
        %v2726 = vpop.f32.mrf.mxu0
        %v2727 = vadd.f32 0.0, %v2726
        %v2728 = vpop.f32.mrf.mxu0
        %2729 = vmatprep.mubr.f32.mxu0 0.0
        %2730 = vmatmul.mubr.f32.gmra.mxu0 %v2608
        %v2731 = vpop.f32.mrf.mxu0
        %v2732 = vadd.f32 0.0, %v2731
        %v2733 = vpop.f32.mrf.mxu0
        %2734 = vmatprep.mubr.f32.mxu0 0.0
        %2735 = vmatmul.mubr.f32.gmra.mxu0 %v2611
        %v2736 = vpop.f32.mrf.mxu0
        %v2737 = vadd.f32 0.0, %v2736
        %v2738 = vpop.f32.mrf.mxu0
        %2739 = vmatprep.mubr.f32.mxu0 0.0
        %2740 = vmatmul.mubr.f32.gmra.mxu0 %v2614
        %v2741 = vpop.f32.mrf.mxu0
        %v2742 = vadd.f32 0.0, %v2741
        %v2743 = vpop.f32.mrf.mxu0
        %2744 = vmatprep.mubr.f32.mxu0 0.0
        %2745 = vmatmul.mubr.f32.gmra.mxu0 %v2617
        %v2746 = vpop.f32.mrf.mxu0
        %v2747 = vadd.f32 0.0, %v2746
        %v2748 = vpop.f32.mrf.mxu0
        %2749 = vmatprep.mubr.f32.mxu0 0.0
        %2750 = vmatmul.mubr.f32.gmra.mxu0 %v2620
        %v2751 = vpop.f32.mrf.mxu0
        %v2752 = vadd.f32 0.0, %v2751
        %v2753 = vpop.f32.mrf.mxu0
        %2754 = vmatprep.mubr.f32.mxu0 0.0
        %2755 = vmatmul.mubr.f32.gmra.mxu0 %v2623
        %v2756 = vpop.f32.mrf.mxu0
        %v2757 = vadd.f32 0.0, %v2756
        %v2758 = vpop.f32.mrf.mxu0
        %2759 = vmatprep.mubr.f32.mxu0 0.0
        %2760 = vmatmul.mubr.f32.gmra.mxu0 %v2626
        %v2761 = vpop.f32.mrf.mxu0
        %v2762 = vadd.f32 0.0, %v2761
        %v2763 = vpop.f32.mrf.mxu0
        %2764 = vmatprep.mubr.f32.mxu0 0.0
        %2765 = vmatmul.mubr.f32.gmra.mxu0 %v2629
        %v2766 = vpop.f32.mrf.mxu0
        %v2767 = vadd.f32 0.0, %v2766
        %v2768 = vpop.f32.mrf.mxu0
        %2769 = vmatprep.mubr.f32.mxu0 0.0
        %2770 = vmatmul.mubr.f32.gmra.mxu0 %v2632
        %v2771 = vpop.f32.mrf.mxu0
        %v2772 = vadd.f32 0.0, %v2771
        %v2773 = vpop.f32.mrf.mxu0
        %2774 = vmatprep.mubr.f32.mxu0 0.0
        %2775 = vmatmul.mubr.f32.gmra.mxu0 %v2635
        %v2776 = vpop.f32.mrf.mxu0
        %v2777 = vadd.f32 0.0, %v2776
        %v2778 = vpop.f32.mrf.mxu0
        %2779 = vmatprep.mubr.f32.mxu0 0.0
        %2780 = vmatmul.mubr.f32.gmra.mxu0 %v2638
        %v2781 = vpop.f32.mrf.mxu0
        %v2782 = vadd.f32 0.0, %v2781
        %v2783 = vpop.f32.mrf.mxu0
        %2784 = vdwg.mxu0
        %2789 = vrot.lane.b32.xlu0 %v948, 96
        %v2790 = vpop.permute.xlu0 %2789
        %2791 = vrot.lane.b32.xlu0 %v949, 96
        %v2792 = vpop.permute.xlu0 %2791
        %2793 = vrot.lane.b32.xlu0 %v950, 96
        %v2794 = vpop.permute.xlu0 %2793
        %2795 = vrot.lane.b32.xlu0 %v951, 96
        %v2796 = vpop.permute.xlu0 %2795
        %v2802 = vsel %vm504, %v2528, 0
        %v2805 = vsel %vm504, %v2529, 0
        %v2808 = vsel %vm504, %v2530, 0
        %v2811 = vsel %vm504, %v2531, 0
        %v2814 = vsel %vm504, %v2532, 0
        %v2817 = vsel %vm504, %v2533, 0
        %v2820 = vsel %vm504, %v2534, 0
        %v2823 = vsel %vm504, %v2535, 0
        %v2826 = vsel %vm504, %v2536, 0
        %v2829 = vsel %vm504, %v2537, 0
        %v2832 = vsel %vm504, %v2538, 0
        %v2835 = vsel %vm504, %v2539, 0
        %v2838 = vsel %vm504, %v2540, 0
        %v2841 = vsel %vm504, %v2541, 0
        %v2844 = vsel %vm504, %v2542, 0
        %v2847 = vsel %vm504, %v2543, 0
        %2849 = vmatprep.subr.mxu0 0.0
        %2850 = vmatpush1.msra.mxu0 0.0
        %2851 = vmatprep.subr.mxu0 0.0
        %2852 = vmatpush1.msra.mxu0 0.0
        %2853 = vmatprep.subr.mxu0 0.0
        %2854 = vmatpush1.msra.mxu0 0.0
        %2855 = vmatprep.subr.mxu0 0.0
        %2856 = vmatpush1.msra.mxu0 0.0
        %2857 = vmatprep.subr.mxu0 0.0
        %2858 = vmatpush1.msra.mxu0 0.0
        %2859 = vmatprep.subr.mxu0 0.0
        %2860 = vmatpush1.msra.mxu0 0.0
        %2861 = vmatprep.subr.mxu0 0.0
        %2862 = vmatpush1.msra.mxu0 0.0
        %2863 = vmatprep.subr.mxu0 0.0
        %2864 = vmatpush1.msra.mxu0 0.0
        %2865 = vmatprep.subr.mxu0 0.0
        %2866 = vmatpush1.msra.mxu0 0.0
        %2867 = vmatprep.subr.mxu0 0.0
        %2868 = vmatpush1.msra.mxu0 0.0
        %2869 = vmatprep.subr.mxu0 0.0
        %2870 = vmatpush1.msra.mxu0 0.0
        %2871 = vmatprep.subr.mxu0 0.0
        %2872 = vmatpush1.msra.mxu0 0.0
        %2873 = vmatprep.subr.mxu0 0.0
        %2874 = vmatpush1.msra.mxu0 %v2796
        %2875 = vmatprep.subr.mxu0 0.0
        %2876 = vmatpush1.msra.mxu0 %v2794
        %2877 = vmatprep.subr.mxu0 0.0
        %2878 = vmatpush1.msra.mxu0 %v2792
        %2879 = vmatprep.subr.mxu0 0.0
        %2880 = vmatpush1.msra.mxu0 %v2790
        %2881 = vmatprep.subr.mxu0 0.0
        %2882 = vmatpush2.msra.mxu0 0.0
        %2883 = vmatprep.subr.mxu0 0.0
        %2884 = vmatpush2.msra.mxu0 0.0
        %2885 = vmatprep.subr.mxu0 0.0
        %2886 = vmatpush2.msra.mxu0 0.0
        %2887 = vmatprep.subr.mxu0 0.0
        %2888 = vmatpush2.msra.mxu0 0.0
        %2889 = vmatprep.subr.mxu0 0.0
        %2890 = vmatpush2.msra.mxu0 0.0
        %2891 = vmatprep.subr.mxu0 0.0
        %2892 = vmatpush2.msra.mxu0 0.0
        %2893 = vmatprep.subr.mxu0 0.0
        %2894 = vmatpush2.msra.mxu0 0.0
        %2895 = vmatprep.subr.mxu0 0.0
        %2896 = vmatpush2.msra.mxu0 0.0
        %2897 = vmatprep.subr.mxu0 0.0
        %2898 = vmatpush2.msra.mxu0 0.0
        %2899 = vmatprep.subr.mxu0 0.0
        %2900 = vmatpush2.msra.mxu0 0.0
        %2901 = vmatprep.subr.mxu0 0.0
        %2902 = vmatpush2.msra.mxu0 0.0
        %2903 = vmatprep.subr.mxu0 0.0
        %2904 = vmatpush2.msra.mxu0 0.0
        %2905 = vmatprep.subr.mxu0 0.0
        %2906 = vmatpush2.msra.mxu0 0.0
        %2907 = vmatprep.subr.mxu0 0.0
        %2908 = vmatpush2.msra.mxu0 0.0
        %2909 = vmatprep.subr.mxu0 0.0
        %2910 = vmatpush2.msra.mxu0 0.0
        %2911 = vmatprep.subr.mxu0 0.0
        %2912 = vmatpush2.msra.mxu0 0.0
        %2913 = vmatprep.mubr.f32.mxu0 0.0
        %2914 = vmatmul.mubr.f32.gmra.mxu0 %v2802
        %v2915 = vpop.f32.mrf.mxu0
        %v2916 = vadd.f32 0.0, %v2915
        %v2917 = vpop.f32.mrf.mxu0
        %2918 = vmatprep.mubr.f32.mxu0 0.0
        %2919 = vmatmul.mubr.f32.gmra.mxu0 %v2805
        %v2920 = vpop.f32.mrf.mxu0
        %v2921 = vadd.f32 0.0, %v2920
        %v2922 = vpop.f32.mrf.mxu0
        %2923 = vmatprep.mubr.f32.mxu0 0.0
        %2924 = vmatmul.mubr.f32.gmra.mxu0 %v2808
        %v2925 = vpop.f32.mrf.mxu0
        %v2926 = vadd.f32 0.0, %v2925
        %v2927 = vpop.f32.mrf.mxu0
        %2928 = vmatprep.mubr.f32.mxu0 0.0
        %2929 = vmatmul.mubr.f32.gmra.mxu0 %v2811
        %v2930 = vpop.f32.mrf.mxu0
        %v2931 = vadd.f32 0.0, %v2930
        %v2932 = vpop.f32.mrf.mxu0
        %2933 = vmatprep.mubr.f32.mxu0 0.0
        %2934 = vmatmul.mubr.f32.gmra.mxu0 %v2814
        %v2935 = vpop.f32.mrf.mxu0
        %v2936 = vadd.f32 0.0, %v2935
        %v2937 = vpop.f32.mrf.mxu0
        %2938 = vmatprep.mubr.f32.mxu0 0.0
        %2939 = vmatmul.mubr.f32.gmra.mxu0 %v2817
        %v2940 = vpop.f32.mrf.mxu0
        %v2941 = vadd.f32 0.0, %v2940
        %v2942 = vpop.f32.mrf.mxu0
        %2943 = vmatprep.mubr.f32.mxu0 0.0
        %2944 = vmatmul.mubr.f32.gmra.mxu0 %v2820
        %v2945 = vpop.f32.mrf.mxu0
        %v2946 = vadd.f32 0.0, %v2945
        %v2947 = vpop.f32.mrf.mxu0
        %2948 = vmatprep.mubr.f32.mxu0 0.0
        %2949 = vmatmul.mubr.f32.gmra.mxu0 %v2823
        %v2950 = vpop.f32.mrf.mxu0
        %v2951 = vadd.f32 0.0, %v2950
        %v2952 = vpop.f32.mrf.mxu0
        %2953 = vmatprep.mubr.f32.mxu0 0.0
        %2954 = vmatmul.mubr.f32.gmra.mxu0 %v2826
        %v2955 = vpop.f32.mrf.mxu0
        %v2956 = vadd.f32 0.0, %v2955
        %v2957 = vpop.f32.mrf.mxu0
        %2958 = vmatprep.mubr.f32.mxu0 0.0
        %2959 = vmatmul.mubr.f32.gmra.mxu0 %v2829
        %v2960 = vpop.f32.mrf.mxu0
        %v2961 = vadd.f32 0.0, %v2960
        %v2962 = vpop.f32.mrf.mxu0
        %2963 = vmatprep.mubr.f32.mxu0 0.0
        %2964 = vmatmul.mubr.f32.gmra.mxu0 %v2832
        %v2965 = vpop.f32.mrf.mxu0
        %v2966 = vadd.f32 0.0, %v2965
        %v2967 = vpop.f32.mrf.mxu0
        %2968 = vmatprep.mubr.f32.mxu0 0.0
        %2969 = vmatmul.mubr.f32.gmra.mxu0 %v2835
        %v2970 = vpop.f32.mrf.mxu0
        %v2971 = vadd.f32 0.0, %v2970
        %v2972 = vpop.f32.mrf.mxu0
        %2973 = vmatprep.mubr.f32.mxu0 0.0
        %2974 = vmatmul.mubr.f32.gmra.mxu0 %v2838
        %v2975 = vpop.f32.mrf.mxu0
        %v2976 = vadd.f32 0.0, %v2975
        %v2977 = vpop.f32.mrf.mxu0
        %2978 = vmatprep.mubr.f32.mxu0 0.0
        %2979 = vmatmul.mubr.f32.gmra.mxu0 %v2841
        %v2980 = vpop.f32.mrf.mxu0
        %v2981 = vadd.f32 0.0, %v2980
        %v2982 = vpop.f32.mrf.mxu0
        %2983 = vmatprep.mubr.f32.mxu0 0.0
        %2984 = vmatmul.mubr.f32.gmra.mxu0 %v2844
        %v2985 = vpop.f32.mrf.mxu0
        %v2986 = vadd.f32 0.0, %v2985
        %v2987 = vpop.f32.mrf.mxu0
        %2988 = vmatprep.mubr.f32.mxu0 0.0
        %2989 = vmatmul.mubr.f32.gmra.mxu0 %v2847
        %v2990 = vpop.f32.mrf.mxu0
        %v2991 = vadd.f32 0.0, %v2990
        %v2992 = vpop.f32.mrf.mxu0
        %2993 = vdwg.mxu0
        %2998 = vrot.lane.b32.xlu0 %v952, 96
        %v2999 = vpop.permute.xlu0 %2998
        %3000 = vrot.lane.b32.xlu0 %v953, 96
        %v3001 = vpop.permute.xlu0 %3000
        %3002 = vrot.lane.b32.xlu0 %v954, 96
        %v3003 = vpop.permute.xlu0 %3002
        %3004 = vrot.lane.b32.xlu0 %v955, 96
        %v3005 = vpop.permute.xlu0 %3004
        %v3011 = vsel %vm504, %v2544, 0
        %v3014 = vsel %vm504, %v2545, 0
        %v3017 = vsel %vm504, %v2546, 0
        %v3020 = vsel %vm504, %v2547, 0
        %v3023 = vsel %vm504, %v2548, 0
        %v3026 = vsel %vm504, %v2549, 0
        %v3029 = vsel %vm504, %v2550, 0
        %v3032 = vsel %vm504, %v2551, 0
        %v3035 = vsel %vm504, %v2552, 0
        %v3038 = vsel %vm504, %v2553, 0
        %v3041 = vsel %vm504, %v2554, 0
        %v3044 = vsel %vm504, %v2555, 0
        %v3047 = vsel %vm504, %v2556, 0
        %v3050 = vsel %vm504, %v2557, 0
        %v3053 = vsel %vm504, %v2558, 0
        %v3056 = vsel %vm504, %v2559, 0
        %3058 = vmatprep.subr.mxu0 0.0
        %3059 = vmatpush1.msra.mxu0 0.0
        %3060 = vmatprep.subr.mxu0 0.0
        %3061 = vmatpush1.msra.mxu0 0.0
        %3062 = vmatprep.subr.mxu0 0.0
        %3063 = vmatpush1.msra.mxu0 0.0
        %3064 = vmatprep.subr.mxu0 0.0
        %3065 = vmatpush1.msra.mxu0 0.0
        %3066 = vmatprep.subr.mxu0 0.0
        %3067 = vmatpush1.msra.mxu0 0.0
        %3068 = vmatprep.subr.mxu0 0.0
        %3069 = vmatpush1.msra.mxu0 0.0
        %3070 = vmatprep.subr.mxu0 0.0
        %3071 = vmatpush1.msra.mxu0 0.0
        %3072 = vmatprep.subr.mxu0 0.0
        %3073 = vmatpush1.msra.mxu0 0.0
        %3074 = vmatprep.subr.mxu0 0.0
        %3075 = vmatpush1.msra.mxu0 0.0
        %3076 = vmatprep.subr.mxu0 0.0
        %3077 = vmatpush1.msra.mxu0 0.0
        %3078 = vmatprep.subr.mxu0 0.0
        %3079 = vmatpush1.msra.mxu0 0.0
        %3080 = vmatprep.subr.mxu0 0.0
        %3081 = vmatpush1.msra.mxu0 0.0
        %3082 = vmatprep.subr.mxu0 0.0
        %3083 = vmatpush1.msra.mxu0 %v3005
        %3084 = vmatprep.subr.mxu0 0.0
        %3085 = vmatpush1.msra.mxu0 %v3003
        %3086 = vmatprep.subr.mxu0 0.0
        %3087 = vmatpush1.msra.mxu0 %v3001
        %3088 = vmatprep.subr.mxu0 0.0
        %3089 = vmatpush1.msra.mxu0 %v2999
        %3090 = vmatprep.subr.mxu0 0.0
        %3091 = vmatpush2.msra.mxu0 0.0
        %3092 = vmatprep.subr.mxu0 0.0
        %3093 = vmatpush2.msra.mxu0 0.0
        %3094 = vmatprep.subr.mxu0 0.0
        %3095 = vmatpush2.msra.mxu0 0.0
        %3096 = vmatprep.subr.mxu0 0.0
        %3097 = vmatpush2.msra.mxu0 0.0
        %3098 = vmatprep.subr.mxu0 0.0
        %3099 = vmatpush2.msra.mxu0 0.0
        %3100 = vmatprep.subr.mxu0 0.0
        %3101 = vmatpush2.msra.mxu0 0.0
        %3102 = vmatprep.subr.mxu0 0.0
        %3103 = vmatpush2.msra.mxu0 0.0
        %3104 = vmatprep.subr.mxu0 0.0
        %3105 = vmatpush2.msra.mxu0 0.0
        %3106 = vmatprep.subr.mxu0 0.0
        %3107 = vmatpush2.msra.mxu0 0.0
        %3108 = vmatprep.subr.mxu0 0.0
        %3109 = vmatpush2.msra.mxu0 0.0
        %3110 = vmatprep.subr.mxu0 0.0
        %3111 = vmatpush2.msra.mxu0 0.0
        %3112 = vmatprep.subr.mxu0 0.0
        %3113 = vmatpush2.msra.mxu0 0.0
        %3114 = vmatprep.subr.mxu0 0.0
        %3115 = vmatpush2.msra.mxu0 0.0
        %3116 = vmatprep.subr.mxu0 0.0
        %3117 = vmatpush2.msra.mxu0 0.0
        %3118 = vmatprep.subr.mxu0 0.0
        %3119 = vmatpush2.msra.mxu0 0.0
        %3120 = vmatprep.subr.mxu0 0.0
        %3121 = vmatpush2.msra.mxu0 0.0
        %3122 = vmatprep.mubr.f32.mxu0 0.0
        %3123 = vmatmul.mubr.f32.gmra.mxu0 %v3011
        %v3124 = vpop.f32.mrf.mxu0
        %v3125 = vadd.f32 0.0, %v3124
        %v3126 = vpop.f32.mrf.mxu0
        %3127 = vmatprep.mubr.f32.mxu0 0.0
        %3128 = vmatmul.mubr.f32.gmra.mxu0 %v3014
        %v3129 = vpop.f32.mrf.mxu0
        %v3130 = vadd.f32 0.0, %v3129
        %v3131 = vpop.f32.mrf.mxu0
        %3132 = vmatprep.mubr.f32.mxu0 0.0
        %3133 = vmatmul.mubr.f32.gmra.mxu0 %v3017
        %v3134 = vpop.f32.mrf.mxu0
        %v3135 = vadd.f32 0.0, %v3134
        %v3136 = vpop.f32.mrf.mxu0
        %3137 = vmatprep.mubr.f32.mxu0 0.0
        %3138 = vmatmul.mubr.f32.gmra.mxu0 %v3020
        %v3139 = vpop.f32.mrf.mxu0
        %v3140 = vadd.f32 0.0, %v3139
        %v3141 = vpop.f32.mrf.mxu0
        %3142 = vmatprep.mubr.f32.mxu0 0.0
        %3143 = vmatmul.mubr.f32.gmra.mxu0 %v3023
        %v3144 = vpop.f32.mrf.mxu0
        %v3145 = vadd.f32 0.0, %v3144
        %v3146 = vpop.f32.mrf.mxu0
        %3147 = vmatprep.mubr.f32.mxu0 0.0
        %3148 = vmatmul.mubr.f32.gmra.mxu0 %v3026
        %v3149 = vpop.f32.mrf.mxu0
        %v3150 = vadd.f32 0.0, %v3149
        %v3151 = vpop.f32.mrf.mxu0
        %3152 = vmatprep.mubr.f32.mxu0 0.0
        %3153 = vmatmul.mubr.f32.gmra.mxu0 %v3029
        %v3154 = vpop.f32.mrf.mxu0
        %v3155 = vadd.f32 0.0, %v3154
        %v3156 = vpop.f32.mrf.mxu0
        %3157 = vmatprep.mubr.f32.mxu0 0.0
        %3158 = vmatmul.mubr.f32.gmra.mxu0 %v3032
        %v3159 = vpop.f32.mrf.mxu0
        %v3160 = vadd.f32 0.0, %v3159
        %v3161 = vpop.f32.mrf.mxu0
        %3162 = vmatprep.mubr.f32.mxu0 0.0
        %3163 = vmatmul.mubr.f32.gmra.mxu0 %v3035
        %v3164 = vpop.f32.mrf.mxu0
        %v3165 = vadd.f32 0.0, %v3164
        %v3166 = vpop.f32.mrf.mxu0
        %3167 = vmatprep.mubr.f32.mxu0 0.0
        %3168 = vmatmul.mubr.f32.gmra.mxu0 %v3038
        %v3169 = vpop.f32.mrf.mxu0
        %v3170 = vadd.f32 0.0, %v3169
        %v3171 = vpop.f32.mrf.mxu0
        %3172 = vmatprep.mubr.f32.mxu0 0.0
        %3173 = vmatmul.mubr.f32.gmra.mxu0 %v3041
        %v3174 = vpop.f32.mrf.mxu0
        %v3175 = vadd.f32 0.0, %v3174
        %v3176 = vpop.f32.mrf.mxu0
        %3177 = vmatprep.mubr.f32.mxu0 0.0
        %3178 = vmatmul.mubr.f32.gmra.mxu0 %v3044
        %v3179 = vpop.f32.mrf.mxu0
        %v3180 = vadd.f32 0.0, %v3179
        %v3181 = vpop.f32.mrf.mxu0
        %3182 = vmatprep.mubr.f32.mxu0 0.0
        %3183 = vmatmul.mubr.f32.gmra.mxu0 %v3047
        %v3184 = vpop.f32.mrf.mxu0
        %v3185 = vadd.f32 0.0, %v3184
        %v3186 = vpop.f32.mrf.mxu0
        %3187 = vmatprep.mubr.f32.mxu0 0.0
        %3188 = vmatmul.mubr.f32.gmra.mxu0 %v3050
        %v3189 = vpop.f32.mrf.mxu0
        %v3190 = vadd.f32 0.0, %v3189
        %v3191 = vpop.f32.mrf.mxu0
        %3192 = vmatprep.mubr.f32.mxu0 0.0
        %3193 = vmatmul.mubr.f32.gmra.mxu0 %v3053
        %v3194 = vpop.f32.mrf.mxu0
        %v3195 = vadd.f32 0.0, %v3194
        %v3196 = vpop.f32.mrf.mxu0
        %3197 = vmatprep.mubr.f32.mxu0 0.0
        %3198 = vmatmul.mubr.f32.gmra.mxu0 %v3056
        %v3199 = vpop.f32.mrf.mxu0
        %v3200 = vadd.f32 0.0, %v3199
        %v3201 = vpop.f32.mrf.mxu0
        %3202 = vdwg.mxu0
        %3207 = vrot.lane.b32.xlu0 %v956, 96
        %v3208 = vpop.permute.xlu0 %3207
        %3209 = vrot.lane.b32.xlu0 %v957, 96
        %v3210 = vpop.permute.xlu0 %3209
        %3211 = vrot.lane.b32.xlu0 %v958, 96
        %v3212 = vpop.permute.xlu0 %3211
        %3213 = vrot.lane.b32.xlu0 %v959, 96
        %v3214 = vpop.permute.xlu0 %3213
        %v3220 = vsel %vm504, %v2560, 0
        %v3223 = vsel %vm504, %v2561, 0
        %v3226 = vsel %vm504, %v2562, 0
        %v3229 = vsel %vm504, %v2563, 0
        %v3232 = vsel %vm504, %v2564, 0
        %v3235 = vsel %vm504, %v2565, 0
        %v3238 = vsel %vm504, %v2566, 0
        %v3241 = vsel %vm504, %v2567, 0
        %v3244 = vsel %vm504, %v2568, 0
        %v3247 = vsel %vm504, %v2569, 0
        %v3250 = vsel %vm504, %v2570, 0
        %v3253 = vsel %vm504, %v2571, 0
        %v3256 = vsel %vm504, %v2572, 0
        %v3259 = vsel %vm504, %v2573, 0
        %v3262 = vsel %vm504, %v2574, 0
        %v3265 = vsel %vm504, %v2575, 0
        %3267 = vmatprep.subr.mxu0 0.0
        %3268 = vmatpush1.msra.mxu0 0.0
        %3269 = vmatprep.subr.mxu0 0.0
        %3270 = vmatpush1.msra.mxu0 0.0
        %3271 = vmatprep.subr.mxu0 0.0
        %3272 = vmatpush1.msra.mxu0 0.0
        %3273 = vmatprep.subr.mxu0 0.0
        %3274 = vmatpush1.msra.mxu0 0.0
        %3275 = vmatprep.subr.mxu0 0.0
        %3276 = vmatpush1.msra.mxu0 0.0
        %3277 = vmatprep.subr.mxu0 0.0
        %3278 = vmatpush1.msra.mxu0 0.0
        %3279 = vmatprep.subr.mxu0 0.0
        %3280 = vmatpush1.msra.mxu0 0.0
        %3281 = vmatprep.subr.mxu0 0.0
        %3282 = vmatpush1.msra.mxu0 0.0
        %3283 = vmatprep.subr.mxu0 0.0
        %3284 = vmatpush1.msra.mxu0 0.0
        %3285 = vmatprep.subr.mxu0 0.0
        %3286 = vmatpush1.msra.mxu0 0.0
        %3287 = vmatprep.subr.mxu0 0.0
        %3288 = vmatpush1.msra.mxu0 0.0
        %3289 = vmatprep.subr.mxu0 0.0
        %3290 = vmatpush1.msra.mxu0 0.0
        %3291 = vmatprep.subr.mxu0 0.0
        %3292 = vmatpush1.msra.mxu0 %v3214
        %3293 = vmatprep.subr.mxu0 0.0
        %3294 = vmatpush1.msra.mxu0 %v3212
        %3295 = vmatprep.subr.mxu0 0.0
        %3296 = vmatpush1.msra.mxu0 %v3210
        %3297 = vmatprep.subr.mxu0 0.0
        %3298 = vmatpush1.msra.mxu0 %v3208
        %3299 = vmatprep.subr.mxu0 0.0
        %3300 = vmatpush2.msra.mxu0 0.0
        %3301 = vmatprep.subr.mxu0 0.0
        %3302 = vmatpush2.msra.mxu0 0.0
        %3303 = vmatprep.subr.mxu0 0.0
        %3304 = vmatpush2.msra.mxu0 0.0
        %3305 = vmatprep.subr.mxu0 0.0
        %3306 = vmatpush2.msra.mxu0 0.0
        %3307 = vmatprep.subr.mxu0 0.0
        %3308 = vmatpush2.msra.mxu0 0.0
        %3309 = vmatprep.subr.mxu0 0.0
        %3310 = vmatpush2.msra.mxu0 0.0
        %3311 = vmatprep.subr.mxu0 0.0
        %3312 = vmatpush2.msra.mxu0 0.0
        %3313 = vmatprep.subr.mxu0 0.0
        %3314 = vmatpush2.msra.mxu0 0.0
        %3315 = vmatprep.subr.mxu0 0.0
        %3316 = vmatpush2.msra.mxu0 0.0
        %3317 = vmatprep.subr.mxu0 0.0
        %3318 = vmatpush2.msra.mxu0 0.0
        %3319 = vmatprep.subr.mxu0 0.0
        %3320 = vmatpush2.msra.mxu0 0.0
        %3321 = vmatprep.subr.mxu0 0.0
        %3322 = vmatpush2.msra.mxu0 0.0
        %3323 = vmatprep.subr.mxu0 0.0
        %3324 = vmatpush2.msra.mxu0 0.0
        %3325 = vmatprep.subr.mxu0 0.0
        %3326 = vmatpush2.msra.mxu0 0.0
        %3327 = vmatprep.subr.mxu0 0.0
        %3328 = vmatpush2.msra.mxu0 0.0
        %3329 = vmatprep.subr.mxu0 0.0
        %3330 = vmatpush2.msra.mxu0 0.0
        %3331 = vmatprep.mubr.f32.mxu0 0.0
        %3332 = vmatmul.mubr.f32.gmra.mxu0 %v3220
        %v3333 = vpop.f32.mrf.mxu0
        %v3334 = vadd.f32 0.0, %v3333
        %v3335 = vpop.f32.mrf.mxu0
        %3336 = vmatprep.mubr.f32.mxu0 0.0
        %3337 = vmatmul.mubr.f32.gmra.mxu0 %v3223
        %v3338 = vpop.f32.mrf.mxu0
        %v3339 = vadd.f32 0.0, %v3338
        %v3340 = vpop.f32.mrf.mxu0
        %3341 = vmatprep.mubr.f32.mxu0 0.0
        %3342 = vmatmul.mubr.f32.gmra.mxu0 %v3226
        %v3343 = vpop.f32.mrf.mxu0
        %v3344 = vadd.f32 0.0, %v3343
        %v3345 = vpop.f32.mrf.mxu0
        %3346 = vmatprep.mubr.f32.mxu0 0.0
        %3347 = vmatmul.mubr.f32.gmra.mxu0 %v3229
        %v3348 = vpop.f32.mrf.mxu0
        %v3349 = vadd.f32 0.0, %v3348
        %v3350 = vpop.f32.mrf.mxu0
        %3351 = vmatprep.mubr.f32.mxu0 0.0
        %3352 = vmatmul.mubr.f32.gmra.mxu0 %v3232
        %v3353 = vpop.f32.mrf.mxu0
        %v3354 = vadd.f32 0.0, %v3353
        %v3355 = vpop.f32.mrf.mxu0
        %3356 = vmatprep.mubr.f32.mxu0 0.0
        %3357 = vmatmul.mubr.f32.gmra.mxu0 %v3235
        %v3358 = vpop.f32.mrf.mxu0
        %v3359 = vadd.f32 0.0, %v3358
        %v3360 = vpop.f32.mrf.mxu0
        %3361 = vmatprep.mubr.f32.mxu0 0.0
        %3362 = vmatmul.mubr.f32.gmra.mxu0 %v3238
        %v3363 = vpop.f32.mrf.mxu0
        %v3364 = vadd.f32 0.0, %v3363
        %v3365 = vpop.f32.mrf.mxu0
        %3366 = vmatprep.mubr.f32.mxu0 0.0
        %3367 = vmatmul.mubr.f32.gmra.mxu0 %v3241
        %v3368 = vpop.f32.mrf.mxu0
        %v3369 = vadd.f32 0.0, %v3368
        %v3370 = vpop.f32.mrf.mxu0
        %3371 = vmatprep.mubr.f32.mxu0 0.0
        %3372 = vmatmul.mubr.f32.gmra.mxu0 %v3244
        %v3373 = vpop.f32.mrf.mxu0
        %v3374 = vadd.f32 0.0, %v3373
        %v3375 = vpop.f32.mrf.mxu0
        %3376 = vmatprep.mubr.f32.mxu0 0.0
        %3377 = vmatmul.mubr.f32.gmra.mxu0 %v3247
        %v3378 = vpop.f32.mrf.mxu0
        %v3379 = vadd.f32 0.0, %v3378
        %v3380 = vpop.f32.mrf.mxu0
        %3381 = vmatprep.mubr.f32.mxu0 0.0
        %3382 = vmatmul.mubr.f32.gmra.mxu0 %v3250
        %v3383 = vpop.f32.mrf.mxu0
        %v3384 = vadd.f32 0.0, %v3383
        %v3385 = vpop.f32.mrf.mxu0
        %3386 = vmatprep.mubr.f32.mxu0 0.0
        %3387 = vmatmul.mubr.f32.gmra.mxu0 %v3253
        %v3388 = vpop.f32.mrf.mxu0
        %v3389 = vadd.f32 0.0, %v3388
        %v3390 = vpop.f32.mrf.mxu0
        %3391 = vmatprep.mubr.f32.mxu0 0.0
        %3392 = vmatmul.mubr.f32.gmra.mxu0 %v3256
        %v3393 = vpop.f32.mrf.mxu0
        %v3394 = vadd.f32 0.0, %v3393
        %v3395 = vpop.f32.mrf.mxu0
        %3396 = vmatprep.mubr.f32.mxu0 0.0
        %3397 = vmatmul.mubr.f32.gmra.mxu0 %v3259
        %v3398 = vpop.f32.mrf.mxu0
        %v3399 = vadd.f32 0.0, %v3398
        %v3400 = vpop.f32.mrf.mxu0
        %3401 = vmatprep.mubr.f32.mxu0 0.0
        %3402 = vmatmul.mubr.f32.gmra.mxu0 %v3262
        %v3403 = vpop.f32.mrf.mxu0
        %v3404 = vadd.f32 0.0, %v3403
        %v3405 = vpop.f32.mrf.mxu0
        %3406 = vmatprep.mubr.f32.mxu0 0.0
        %3407 = vmatmul.mubr.f32.gmra.mxu0 %v3265
        %v3408 = vpop.f32.mrf.mxu0
        %v3409 = vadd.f32 0.0, %v3408
        %v3410 = vpop.f32.mrf.mxu0
        %3411 = vdwg.mxu0
        %v3412 = vmul.f32 %v2707, %v975
        %v3413 = vmul.f32 %v2712, %v975
        %v3414 = vmul.f32 %v2717, %v975
        %v3415 = vmul.f32 %v2722, %v975
        %v3416 = vmul.f32 %v2916, %v975
        %v3417 = vmul.f32 %v2921, %v975
        %v3418 = vmul.f32 %v2926, %v975
        %v3419 = vmul.f32 %v2931, %v975
        %v3420 = vmul.f32 %v3125, %v975
        %v3421 = vmul.f32 %v3130, %v975
        %v3422 = vmul.f32 %v3135, %v975
        %v3423 = vmul.f32 %v3140, %v975
        %v3424 = vmul.f32 %v3334, %v975
        %v3425 = vmul.f32 %v3339, %v975
        %v3426 = vmul.f32 %v3344, %v975
        %v3427 = vmul.f32 %v3349, %v975
        %v3428 = vadd.f32 %v3412, 0.0
        %v3429 = vadd.f32 %v3413, 0.0
        %v3430 = vadd.f32 %v3414, 0.0
        %v3431 = vadd.f32 %v3415, 0.0
        %v3432 = vadd.f32 %v3416, 0.0
        %v3433 = vadd.f32 %v3417, 0.0
        %v3434 = vadd.f32 %v3418, 0.0
        %v3435 = vadd.f32 %v3419, 0.0
        %v3436 = vadd.f32 %v3420, 0.0
        %v3437 = vadd.f32 %v3421, 0.0
        %v3438 = vadd.f32 %v3422, 0.0
        %v3439 = vadd.f32 %v3423, 0.0
        %v3440 = vadd.f32 %v3424, 0.0
        %v3441 = vadd.f32 %v3425, 0.0
        %v3442 = vadd.f32 %v3426, 0.0
        %v3443 = vadd.f32 %v3427, 0.0
        %v3444 = vmul.f32 %v2727, %v995
        %v3445 = vmul.f32 %v2732, %v995
        %v3446 = vmul.f32 %v2737, %v995
        %v3447 = vmul.f32 %v2742, %v995
        %v3448 = vmul.f32 %v2936, %v995
        %v3449 = vmul.f32 %v2941, %v995
        %v3450 = vmul.f32 %v2946, %v995
        %v3451 = vmul.f32 %v2951, %v995
        %v3452 = vmul.f32 %v3145, %v995
        %v3453 = vmul.f32 %v3150, %v995
        %v3454 = vmul.f32 %v3155, %v995
        %v3455 = vmul.f32 %v3160, %v995
        %v3456 = vmul.f32 %v3354, %v995
        %v3457 = vmul.f32 %v3359, %v995
        %v3458 = vmul.f32 %v3364, %v995
        %v3459 = vmul.f32 %v3369, %v995
        %v3460 = vadd.f32 %v3428, %v3444
        %v3461 = vadd.f32 %v3429, %v3445
        %v3462 = vadd.f32 %v3430, %v3446
        %v3463 = vadd.f32 %v3431, %v3447
        %v3464 = vadd.f32 %v3432, %v3448
        %v3465 = vadd.f32 %v3433, %v3449
        %v3466 = vadd.f32 %v3434, %v3450
        %v3467 = vadd.f32 %v3435, %v3451
        %v3468 = vadd.f32 %v3436, %v3452
        %v3469 = vadd.f32 %v3437, %v3453
        %v3470 = vadd.f32 %v3438, %v3454
        %v3471 = vadd.f32 %v3439, %v3455
        %v3472 = vadd.f32 %v3440, %v3456
        %v3473 = vadd.f32 %v3441, %v3457
        %v3474 = vadd.f32 %v3442, %v3458
        %v3475 = vadd.f32 %v3443, %v3459
        %v3476 = vmul.f32 %v2747, %v1015
        %v3477 = vmul.f32 %v2752, %v1015
        %v3478 = vmul.f32 %v2757, %v1015
        %v3479 = vmul.f32 %v2762, %v1015
        %v3480 = vmul.f32 %v2956, %v1015
        %v3481 = vmul.f32 %v2961, %v1015
        %v3482 = vmul.f32 %v2966, %v1015
        %v3483 = vmul.f32 %v2971, %v1015
        %v3484 = vmul.f32 %v3165, %v1015
        %v3485 = vmul.f32 %v3170, %v1015
        %v3486 = vmul.f32 %v3175, %v1015
        %v3487 = vmul.f32 %v3180, %v1015
        %v3488 = vmul.f32 %v3374, %v1015
        %v3489 = vmul.f32 %v3379, %v1015
        %v3490 = vmul.f32 %v3384, %v1015
        %v3491 = vmul.f32 %v3389, %v1015
        %v3492 = vadd.f32 %v3460, %v3476
        %v3493 = vadd.f32 %v3461, %v3477
        %v3494 = vadd.f32 %v3462, %v3478
        %v3495 = vadd.f32 %v3463, %v3479
        %v3496 = vadd.f32 %v3464, %v3480
        %v3497 = vadd.f32 %v3465, %v3481
        %v3498 = vadd.f32 %v3466, %v3482
        %v3499 = vadd.f32 %v3467, %v3483
        %v3500 = vadd.f32 %v3468, %v3484
        %v3501 = vadd.f32 %v3469, %v3485
        %v3502 = vadd.f32 %v3470, %v3486
        %v3503 = vadd.f32 %v3471, %v3487
        %v3504 = vadd.f32 %v3472, %v3488
        %v3505 = vadd.f32 %v3473, %v3489
        %v3506 = vadd.f32 %v3474, %v3490
        %v3507 = vadd.f32 %v3475, %v3491
        %v3508 = vmul.f32 %v2767, %v1035
        %v3509 = vmul.f32 %v2772, %v1035
        %v3510 = vmul.f32 %v2777, %v1035
        %v3511 = vmul.f32 %v2782, %v1035
        %v3512 = vmul.f32 %v2976, %v1035
        %v3513 = vmul.f32 %v2981, %v1035
        %v3514 = vmul.f32 %v2986, %v1035
        %v3515 = vmul.f32 %v2991, %v1035
        %v3516 = vmul.f32 %v3185, %v1035
        %v3517 = vmul.f32 %v3190, %v1035
        %v3518 = vmul.f32 %v3195, %v1035
        %v3519 = vmul.f32 %v3200, %v1035
        %v3520 = vmul.f32 %v3394, %v1035
        %v3521 = vmul.f32 %v3399, %v1035
        %v3522 = vmul.f32 %v3404, %v1035
        %v3523 = vmul.f32 %v3409, %v1035
        %v3524 = vadd.f32 %v3492, %v3508
        %v3525 = vadd.f32 %v3493, %v3509
        %v3526 = vadd.f32 %v3494, %v3510
        %v3527 = vadd.f32 %v3495, %v3511
        %v3528 = vadd.f32 %v3496, %v3512
        %v3529 = vadd.f32 %v3497, %v3513
        %v3530 = vadd.f32 %v3498, %v3514
        %v3531 = vadd.f32 %v3499, %v3515
        %v3532 = vadd.f32 %v3500, %v3516
        %v3533 = vadd.f32 %v3501, %v3517
        %v3534 = vadd.f32 %v3502, %v3518
        %v3535 = vadd.f32 %v3503, %v3519
        %v3536 = vadd.f32 %v3504, %v3520
        %v3537 = vadd.f32 %v3505, %v3521
        %v3538 = vadd.f32 %v3506, %v3522
        %v3539 = vadd.f32 %v3507, %v3523
        %v3540 = vld [vmem:[#allocation10] sm:$0xff]
        %v3541 = vld [vmem:[#allocation10 + $0x8] sm:$0xff]
        %v3542 = vld [vmem:[#allocation10 + $0x10] sm:$0xff]
        %v3543 = vld [vmem:[#allocation10 + $0x18] sm:$0xff]
        %v3544 = vld [vmem:[%s8] sm:$0x1]
        %v3546 = vlaneseq
        %v3547 = vshrl.u32 %v3546, 7
        %v3548 = vsub.s32 0, %v3547
        %v3549 = vrot.slane %v3544, %v3548
        %v3552 = vsel %vm504, %v3524, 0
        %v3555 = vsel %vm504, %v3525, 0
        %v3558 = vsel %vm504, %v3526, 0
        %v3561 = vsel %vm504, %v3527, 0
        %v3564 = vsel %vm504, %v3528, 0
        %v3567 = vsel %vm504, %v3529, 0
        %v3570 = vsel %vm504, %v3530, 0
        %v3573 = vsel %vm504, %v3531, 0
        %v3576 = vsel %vm504, %v3532, 0
        %v3579 = vsel %vm504, %v3533, 0
        %v3582 = vsel %vm504, %v3534, 0
        %v3585 = vsel %vm504, %v3535, 0
        %v3588 = vsel %vm504, %v3536, 0
        %v3591 = vsel %vm504, %v3537, 0
        %v3594 = vsel %vm504, %v3538, 0
        %v3597 = vsel %vm504, %v3539, 0
        %3599 = vmatprep.subr.mxu0 0.0
        %3600 = vmatpush1.msra.mxu0 0.0
        %3601 = vmatprep.subr.mxu0 0.0
        %3602 = vmatpush1.msra.mxu0 0.0
        %3603 = vmatprep.subr.mxu0 0.0
        %3604 = vmatpush1.msra.mxu0 0.0
        %3605 = vmatprep.subr.mxu0 0.0
        %3606 = vmatpush1.msra.mxu0 0.0
        %3607 = vmatprep.subr.mxu0 0.0
        %3608 = vmatpush1.msra.mxu0 0.0
        %3609 = vmatprep.subr.mxu0 0.0
        %3610 = vmatpush1.msra.mxu0 0.0
        %3611 = vmatprep.subr.mxu0 0.0
        %3612 = vmatpush1.msra.mxu0 0.0
        %3613 = vmatprep.subr.mxu0 0.0
        %3614 = vmatpush1.msra.mxu0 0.0
        %3615 = vmatprep.subr.mxu0 0.0
        %3616 = vmatpush1.msra.mxu0 0.0
        %3617 = vmatprep.subr.mxu0 0.0
        %3618 = vmatpush1.msra.mxu0 0.0
        %3619 = vmatprep.subr.mxu0 0.0
        %3620 = vmatpush1.msra.mxu0 0.0
        %3621 = vmatprep.subr.mxu0 0.0
        %3622 = vmatpush1.msra.mxu0 0.0
        %3623 = vmatprep.subr.mxu0 0.0
        %3624 = vmatpush1.msra.mxu0 %v3543
        %3625 = vmatprep.subr.mxu0 0.0
        %3626 = vmatpush1.msra.mxu0 %v3542
        %3627 = vmatprep.subr.mxu0 0.0
        %3628 = vmatpush1.msra.mxu0 %v3541
        %3629 = vmatprep.subr.mxu0 0.0
        %3630 = vmatpush1.msra.mxu0 %v3540
        %3631 = vmatprep.subr.mxu0 0.0
        %3632 = vmatpush2.msra.mxu0 0.0
        %3633 = vmatprep.subr.mxu0 0.0
        %3634 = vmatpush2.msra.mxu0 0.0
        %3635 = vmatprep.subr.mxu0 0.0
        %3636 = vmatpush2.msra.mxu0 0.0
        %3637 = vmatprep.subr.mxu0 0.0
        %3638 = vmatpush2.msra.mxu0 0.0
        %3639 = vmatprep.subr.mxu0 0.0
        %3640 = vmatpush2.msra.mxu0 0.0
        %3641 = vmatprep.subr.mxu0 0.0
        %3642 = vmatpush2.msra.mxu0 0.0
        %3643 = vmatprep.subr.mxu0 0.0
        %3644 = vmatpush2.msra.mxu0 0.0
        %3645 = vmatprep.subr.mxu0 0.0
        %3646 = vmatpush2.msra.mxu0 0.0
        %3647 = vmatprep.subr.mxu0 0.0
        %3648 = vmatpush2.msra.mxu0 0.0
        %3649 = vmatprep.subr.mxu0 0.0
        %3650 = vmatpush2.msra.mxu0 0.0
        %3651 = vmatprep.subr.mxu0 0.0
        %3652 = vmatpush2.msra.mxu0 0.0
        %3653 = vmatprep.subr.mxu0 0.0
        %3654 = vmatpush2.msra.mxu0 0.0
        %3655 = vmatprep.subr.mxu0 0.0
        %3656 = vmatpush2.msra.mxu0 0.0
        %3657 = vmatprep.subr.mxu0 0.0
        %3658 = vmatpush2.msra.mxu0 0.0
        %3659 = vmatprep.subr.mxu0 0.0
        %3660 = vmatpush2.msra.mxu0 0.0
        %3661 = vmatprep.subr.mxu0 0.0
        %3662 = vmatpush2.msra.mxu0 0.0
        %3663 = vmatprep.mubr.f32.mxu0 0.0
        %3664 = vmatmul.mubr.f32.gmra.mxu0 %v3552
        %v3665 = vpop.f32.mrf.mxu0
        %v3666 = vadd.f32 %v3549, %v3665
        %v3667 = vpop.f32.mrf.mxu0
        %3668 = vmatprep.mubr.f32.mxu0 0.0
        %3669 = vmatmul.mubr.f32.gmra.mxu0 %v3555
        %v3670 = vpop.f32.mrf.mxu0
        %v3671 = vadd.f32 %v3549, %v3670
        %v3672 = vpop.f32.mrf.mxu0
        %3673 = vmatprep.mubr.f32.mxu0 0.0
        %3674 = vmatmul.mubr.f32.gmra.mxu0 %v3558
        %v3675 = vpop.f32.mrf.mxu0
        %v3676 = vadd.f32 %v3549, %v3675
        %v3677 = vpop.f32.mrf.mxu0
        %3678 = vmatprep.mubr.f32.mxu0 0.0
        %3679 = vmatmul.mubr.f32.gmra.mxu0 %v3561
        %v3680 = vpop.f32.mrf.mxu0
        %v3681 = vadd.f32 %v3549, %v3680
        %v3682 = vpop.f32.mrf.mxu0
        %3683 = vmatprep.mubr.f32.mxu0 0.0
        %3684 = vmatmul.mubr.f32.gmra.mxu0 %v3564
        %v3685 = vpop.f32.mrf.mxu0
        %v3686 = vadd.f32 %v3549, %v3685
        %v3687 = vpop.f32.mrf.mxu0
        %3688 = vmatprep.mubr.f32.mxu0 0.0
        %3689 = vmatmul.mubr.f32.gmra.mxu0 %v3567
        %v3690 = vpop.f32.mrf.mxu0
        %v3691 = vadd.f32 %v3549, %v3690
        %v3692 = vpop.f32.mrf.mxu0
        %3693 = vmatprep.mubr.f32.mxu0 0.0
        %3694 = vmatmul.mubr.f32.gmra.mxu0 %v3570
        %v3695 = vpop.f32.mrf.mxu0
        %v3696 = vadd.f32 %v3549, %v3695
        %v3697 = vpop.f32.mrf.mxu0
        %3698 = vmatprep.mubr.f32.mxu0 0.0
        %3699 = vmatmul.mubr.f32.gmra.mxu0 %v3573
        %v3700 = vpop.f32.mrf.mxu0
        %v3701 = vadd.f32 %v3549, %v3700
        %v3702 = vpop.f32.mrf.mxu0
        %3703 = vmatprep.mubr.f32.mxu0 0.0
        %3704 = vmatmul.mubr.f32.gmra.mxu0 %v3576
        %v3705 = vpop.f32.mrf.mxu0
        %v3706 = vadd.f32 %v3549, %v3705
        %v3707 = vpop.f32.mrf.mxu0
        %3708 = vmatprep.mubr.f32.mxu0 0.0
        %3709 = vmatmul.mubr.f32.gmra.mxu0 %v3579
        %v3710 = vpop.f32.mrf.mxu0
        %v3711 = vadd.f32 %v3549, %v3710
        %v3712 = vpop.f32.mrf.mxu0
        %3713 = vmatprep.mubr.f32.mxu0 0.0
        %3714 = vmatmul.mubr.f32.gmra.mxu0 %v3582
        %v3715 = vpop.f32.mrf.mxu0
        %v3716 = vadd.f32 %v3549, %v3715
        %v3717 = vpop.f32.mrf.mxu0
        %3718 = vmatprep.mubr.f32.mxu0 0.0
        %3719 = vmatmul.mubr.f32.gmra.mxu0 %v3585
        %v3720 = vpop.f32.mrf.mxu0
        %v3721 = vadd.f32 %v3549, %v3720
        %v3722 = vpop.f32.mrf.mxu0
        %3723 = vmatprep.mubr.f32.mxu0 0.0
        %3724 = vmatmul.mubr.f32.gmra.mxu0 %v3588
        %v3725 = vpop.f32.mrf.mxu0
        %v3726 = vadd.f32 %v3549, %v3725
        %v3727 = vpop.f32.mrf.mxu0
        %3728 = vmatprep.mubr.f32.mxu0 0.0
        %3729 = vmatmul.mubr.f32.gmra.mxu0 %v3591
        %v3730 = vpop.f32.mrf.mxu0
        %v3731 = vadd.f32 %v3549, %v3730
        %v3732 = vpop.f32.mrf.mxu0
        %3733 = vmatprep.mubr.f32.mxu0 0.0
        %3734 = vmatmul.mubr.f32.gmra.mxu0 %v3594
        %v3735 = vpop.f32.mrf.mxu0
        %v3736 = vadd.f32 %v3549, %v3735
        %v3737 = vpop.f32.mrf.mxu0
        %3738 = vmatprep.mubr.f32.mxu0 0.0
        %3739 = vmatmul.mubr.f32.gmra.mxu0 %v3597
        %v3740 = vpop.f32.mrf.mxu0
        %v3741 = vadd.f32 %v3549, %v3740
        %v3742 = vpop.f32.mrf.mxu0
        %3743 = vdwg.mxu0
        %3744 = vst.msk [vmem:[%s464] sm:$0xff] %vm504, %v3666
        %3745 = vst.msk [vmem:[%s464 + $0x8] sm:$0xff] %vm504, %v3671
        %3746 = vst.msk [vmem:[%s464 + $0x10] sm:$0xff] %vm504, %v3676
        %3747 = vst.msk [vmem:[%s464 + $0x18] sm:$0xff] %vm504, %v3681
        %3748 = vst.msk [vmem:[%s464 + $0x20] sm:$0xff] %vm504, %v3686
        %3749 = vst.msk [vmem:[%s464 + $0x28] sm:$0xff] %vm504, %v3691
        %3750 = vst.msk [vmem:[%s464 + $0x30] sm:$0xff] %vm504, %v3696
        %3751 = vst.msk [vmem:[%s464 + $0x38] sm:$0xff] %vm504, %v3701
        %3752 = vst.msk [vmem:[%s464 + $0x40] sm:$0xff] %vm504, %v3706
        %3753 = vst.msk [vmem:[%s464 + $0x48] sm:$0xff] %vm504, %v3711
        %3754 = vst.msk [vmem:[%s464 + $0x50] sm:$0xff] %vm504, %v3716
        %3755 = vst.msk [vmem:[%s464 + $0x58] sm:$0xff] %vm504, %v3721
        %3756 = vst.msk [vmem:[%s464 + $0x60] sm:$0xff] %vm504, %v3726
        %3757 = vst.msk [vmem:[%s464 + $0x68] sm:$0xff] %vm504, %v3731
        %3758 = vst.msk [vmem:[%s464 + $0x70] sm:$0xff] %vm504, %v3736
        %3759 = vst.msk [vmem:[%s464 + $0x78] sm:$0xff] %vm504, %v3741
        %s3760 = sand.u32 %s238, 1
        %s3761 = scalar_lea.sflag [#allocation4], %s3760
        %s3762 = sand.u32 %s238, 1
        %s3763 = smul.addr %s3762, 128
        %s3764 = scalar_lea.vmem [#allocation14], %s3763
        // Predicated region
        $region85: #{tpu_custom_call.1} parent=55 // pred_check
          %p3765 = pneg %p248
        $region86: #{tpu_custom_call.1} parent=55 // pred_check_branch
          %3767 = sbr.rel (%p3765) target = $region88
        $region87: #{tpu_custom_call.1} parent=55 // pred_region
          %s3768 = smul.u32 4, %s31
          %s3770 = ssub.s32 2048, 2048
          %3771 = vsyncadd %s3761, %s3770
          %s3772 = smul.addr %s3768, 4
          %s3773 = smul.addr %s3772, 128
          %s3774 = scalar_lea.hbm %s9, %s3773
          %s3775 = sshll.u32 %s3764, 4
          %s3776 = int_to_ptr.vmem [resolvable:$true] %s3775
          %3781 = dma.vmem_to_hbm [thread:$0]  %s3776, 2048, %s3774, %s3761, 128, 128, 8
        $region88: #{tpu_custom_call.1} parent=55 // pred_fallthru
          _
      $region56: #{tpu_custom_call.1} parent=5 // pred_fallthru
        _
      %p3782 = scmp.le.s32.totalorder 2, %s26
      // Predicated region
      $region89: #{tpu_custom_call.1} parent=5 // pred_check
        %p3783 = pneg %p3782
      $region90: #{tpu_custom_call.1} parent=5 // pred_check_branch
        %3785 = sbr.rel (%p3783) target = $region92
      $region91: #{tpu_custom_call.1} parent=5 // pred_region
        %s3786 = ssub.s32 %s26, 2
        // Predicated region
        $region93: #{tpu_custom_call.1} parent=91 // pred_check
          %p3787 = pneg %p254
        $region94: #{tpu_custom_call.1} parent=91 // pred_check_branch
          %3789 = sbr.rel (%p3787) target = $region96
        $region95: #{tpu_custom_call.1} parent=91 // pred_region
          %s3790 = sand.u32 %s239, 1
          %s3791 = scalar_lea.sflag [#allocation4], %s3790
          %s3792 = sand.u32 %s239, 1
          %s3793 = smul.addr %s3792, 128
          %s3794 = scalar_lea.vmem [#allocation14], %s3793
          %3795 = dma.done %s3791, 2048
        $region96: #{tpu_custom_call.1} parent=91 // pred_fallthru
          _
      $region92: #{tpu_custom_call.1} parent=5 // pred_fallthru
        _
    $region6: #{tpu_custom_call.1} parent=1 // loop_footer
      %s30 = sadd.s32 1, %s26
    $region7: #{tpu_custom_call.1} parent=1 // loop_footer_branch
      %25 = sbr.rel target = $region3
    $region8: #{tpu_custom_call.1} parent=1 // loop_exit
      _
    %3796 = vsyncpa [#allocation3], 1
    %s3797 = scalar_lea.sflag [#allocation3], 1
    %3798 = vsyncpa %s3797, 1
    %3799 = vsyncpa [#allocation6], 1
    %s3800 = scalar_lea.sflag [#allocation6], 1
    %3801 = vsyncpa %s3800, 1
    %3802 = vsyncpa [#allocation9], 1
    %3803 = vsyncpa [#allocation12], 1
    %3804 = vsyncpa [#allocation4], 1
    %s3805 = scalar_lea.sflag [#allocation4], 1
    %3806 = vsyncpa %s3805, 1

</llo_original>
